<compile_context>
chip_gen: v7x
topology: tpu7x:2x2x1
jax: 0.10.0
libtpu: 0.0.40
codegen_flags: <defaults>
</compile_context>

<pallas_src>
import math
from functools import lru_cache, partial

import jax
import jax.numpy as jnp
import numpy as np
from jax.experimental import pallas as pl
from jax.experimental.pallas import tpu as pltpu

_PI = math.pi


def _atan2(y, x, mag):
    """Elementwise atan2(y, x) from basic VPU ops (mul/add/div/select).

    Mosaic support for lax.atan2 / lax.atan inside kernels is not guaranteed,
    so phase is computed with the Cephes single-precision atan polynomial plus
    quadrant fix-up.  |error| ~ 1e-6 rad.  atan2(0, 0) := 0 (torch convention).
    """
    r = jnp.abs(y) / jnp.abs(x)                       # may be inf/nan; handled below
    big = r > 2.414213562373095                       # tan(3*pi/8)
    med = r > 0.4142135623730951                      # tan(pi/8)
    rr = jnp.where(big, -1.0 / r, jnp.where(med, (r - 1.0) / (r + 1.0), r))
    base = jnp.where(big, 0.5 * _PI, jnp.where(med, 0.25 * _PI, 0.0))
    z = rr * rr
    poly = (((8.05374449538e-2 * z - 1.38776856032e-1) * z
             + 1.99777106478e-1) * z - 3.33329491539e-1) * z * rr + rr
    a = base + poly                                   # atan(|y/x|) in [0, pi/2]
    sgn_y = jnp.where(y >= 0.0, 1.0, -1.0)
    ang = jnp.where(x >= 0.0, sgn_y * a, sgn_y * (_PI - a))
    return jnp.where(mag == 0.0, 0.0, ang)


def _dft_kernel(x_ref, ch_ref, sh_ref, cwt_ref, swt_ref,
                real_ref, imag_ref, mag_ref, phase_ref, *, tn, h, inv_n):
    """One block of TN images.

    x_ref    : (TN*H, W)    TN images stacked along rows
    ch/sh    : (Hc, H)      cos/sin row-DFT bases (Hc = cropped output rows)
    cwt/swt  : (W, Wrc)     cos/sin column-DFT bases, pre-transposed
    outputs  : (TN, Hc, Wrc)
    """
    ch = ch_ref[...]
    sh = sh_ref[...]

    # Column (W-axis) DFT fused across the whole block: a single wide matmul
    # with M = TN*H instead of TN separate (H, W) @ (W, Wrc) stubs.
    x = x_ref[...]
    xc = jnp.dot(x, cwt_ref[...], preferred_element_type=jnp.float32)  # (TN*H, Wrc)
    xs = jnp.dot(x, swt_ref[...], preferred_element_type=jnp.float32)

    # Row (H-axis) DFT per image; static slices / static ref indices only, so
    # lowering stays trivially safe (no lane-dim reshapes).
    for i in range(tn):
        lo = i * h
        xci = xc[lo:lo + h, :]
        xsi = xs[lo:lo + h, :]
        re = (jnp.dot(ch, xci, preferred_element_type=jnp.float32)
              - jnp.dot(sh, xsi, preferred_element_type=jnp.float32)) * inv_n
        im = -(jnp.dot(ch, xsi, preferred_element_type=jnp.float32)
               + jnp.dot(sh, xci, preferred_element_type=jnp.float32)) * inv_n
        mag = jnp.sqrt(re * re + im * im)
        real_ref[i] = re
        imag_ref[i] = im
        mag_ref[i] = mag
        phase_ref[i] = _atan2(im, re, mag)


@lru_cache(maxsize=None)
def _dft_basis(h, w, hc, wrc):
    """float64-accurate DFT bases, cached per (H, W, crop), cast to f32 once."""
    u = np.arange(hc, dtype=np.float64)[:, None]
    hh = np.arange(h, dtype=np.float64)[None, :]
    ang_h = 2.0 * np.pi * u * hh / h                  # (Hc, H)
    ww = np.arange(w, dtype=np.float64)[:, None]
    v = np.arange(wrc, dtype=np.float64)[None, :]
    ang_w = 2.0 * np.pi * ww * v / w                  # (W, Wrc) (already transposed)
    return (jnp.asarray(np.cos(ang_h), dtype=jnp.float32),
            jnp.asarray(np.sin(ang_h), dtype=jnp.float32),
            jnp.asarray(np.cos(ang_w), dtype=jnp.float32),
            jnp.asarray(np.sin(ang_w), dtype=jnp.float32))


def _pick_tn(n_imgs, h, w, hc, wrc):
    """Images per grid step: largest divisor of N that (a) keeps per-step
    buffers comfortably under the scoped-VMEM defaults of v5e/v6e/v7x,
    (b) keeps the x BlockSpec 8-row aligned, (c) keeps the grid >= 2 steps
    (v7x has two TensorCores), and (d) bounds the in-kernel unroll length."""
    budget = 8 * 1024 * 1024                          # bytes, conservative
    const_bytes = 2 * (2 * hc * h + 2 * w * wrc) * 4  # resident bases, x2 buffers

    def fits(tn):
        blk = 2 * (tn * h * w + 4 * tn * hc * wrc) * 4   # double-buffered I/O
        work = 2 * tn * h * wrc * 4                      # xc/xs intermediates
        return const_bytes + blk + work <= budget

    divisors = [d for d in range(1, n_imgs + 1) if n_imgs % d == 0]
    legal = [d for d in divisors if (d * h) % 8 == 0 or d == n_imgs]
    good = [d for d in legal if fits(d) and d <= 16]
    if not good:
        return legal[0]
    multi_step = [d for d in good if n_imgs // d >= 2]
    return max(multi_step) if multi_step else max(good)


@partial(jax.jit, static_argnames=("crop",))
def dft_transform(x, crop=None):
    """JAX/Pallas equivalent of DFTTransform.forward.  x: (B, C, H, W)."""
    B, C, H, W = x.shape
    Wr = W // 2 + 1
    Hc = min(crop[0], H) if crop else H
    Wrc = min(crop[1], Wr) if crop else Wr
    N = B * C

    xf = x.astype(jnp.float32).reshape(N * H, W)      # free row-major reshape
    ch, sh, cwt, swt = _dft_basis(H, W, Hc, Wrc)

    tn = _pick_tn(N, H, W, Hc, Wrc)
    grid = (N // tn,)

    kernel = partial(_dft_kernel, tn=tn, h=H, inv_n=1.0 / float(H * W))
    out_sds = jax.ShapeDtypeStruct((N, Hc, Wrc), jnp.float32)
    out_spec = pl.BlockSpec((tn, Hc, Wrc), lambda n: (n, 0, 0))

    real, imag, mag, phase = pl.pallas_call(
        kernel,
        out_shape=(out_sds, out_sds, out_sds, out_sds),
        grid_spec=pltpu.PrefetchScalarGridSpec(
            num_scalar_prefetch=0,
            grid=grid,
            in_specs=[
                pl.BlockSpec((tn * H, W), lambda n: (n, 0)),   # TN stacked images
                pl.BlockSpec((Hc, H), lambda n: (0, 0)),       # CH   (resident)
                pl.BlockSpec((Hc, H), lambda n: (0, 0)),       # SH
                pl.BlockSpec((W, Wrc), lambda n: (0, 0)),      # CW^T
                pl.BlockSpec((W, Wrc), lambda n: (0, 0)),      # SW^T
            ],
            out_specs=[out_spec, out_spec, out_spec, out_spec],
        ),
        compiler_params=pltpu.CompilerParams(
            dimension_semantics=("parallel",)),
    )(xf, ch, sh, cwt, swt)

    shape4 = (B, C, Hc, Wrc)
    return (real.reshape(shape4), imag.reshape(shape4),
            mag.reshape(shape4), phase.reshape(shape4))


if __name__ == "__main__":
    key = jax.random.PRNGKey(0)
    x = jax.random.normal(key, (2, 4, 16, 16), dtype=jnp.float32)

    real, imag, mag, phase = dft_transform(x)
    jax.block_until_ready((real, imag, mag, phase))

    # Reference: XLA rfft2 (same semantics as torch.fft.rfft2 with norm='forward').
    ref = jnp.fft.rfft2(x.astype(jnp.float32), norm="forward")
    ref_real = np.asarray(ref.real)
    ref_imag = np.asarray(ref.imag)
    ref_mag = np.asarray(jnp.abs(ref))

    np.testing.assert_allclose(np.asarray(real), ref_real, rtol=1e-2, atol=2e-3)
    np.testing.assert_allclose(np.asarray(imag), ref_imag, rtol=1e-2, atol=2e-3)
    np.testing.assert_allclose(np.asarray(mag), ref_mag, rtol=1e-2, atol=2e-3)

    # Phase: the in-kernel atan2 must agree with numpy atan2 of the kernel's own
    # real/imag outputs (difference wrapped to [-pi, pi) to ignore the +/-pi cut).
    ref_phase = np.arctan2(np.asarray(imag), np.asarray(real))
    dphi = np.asarray(phase) - ref_phase
    dphi = np.abs((dphi + np.pi) % (2.0 * np.pi) - np.pi)
    assert float(dphi.max()) < 1e-4, float(dphi.max())

    # Cropped variant (crop handled inside the kernel via reduced DFT bases).
    r2, i2, m2, p2 = dft_transform(x, crop=(8, 5))
    jax.block_until_ready((r2, i2, m2, p2))
    np.testing.assert_allclose(np.asarray(r2), ref_real[:, :, :8, :5],
                               rtol=1e-2, atol=2e-3)
    np.testing.assert_allclose(np.asarray(i2), ref_imag[:, :, :8, :5],
                               rtol=1e-2, atol=2e-3)
    np.testing.assert_allclose(np.asarray(m2), ref_mag[:, :, :8, :5],
                               rtol=1e-2, atol=2e-3)

    print("KERNEL_OK")
</pallas_src>

<mosaic_0001>
module attributes {stable_mosaic.version = 11 : i64} {
  func.func @_dft_kernel(%arg0: i32, %arg1: memref<64x16xf32, #tpu.memory_space<vmem>>, %arg2: memref<16x16xf32, #tpu.memory_space<vmem>>, %arg3: memref<16x16xf32, #tpu.memory_space<vmem>>, %arg4: memref<16x9xf32, #tpu.memory_space<vmem>>, %arg5: memref<16x9xf32, #tpu.memory_space<vmem>>, %arg6: memref<4x16x9xf32, #tpu.memory_space<vmem>>, %arg7: memref<4x16x9xf32, #tpu.memory_space<vmem>>, %arg8: memref<4x16x9xf32, #tpu.memory_space<vmem>>, %arg9: memref<4x16x9xf32, #tpu.memory_space<vmem>>) attributes {dimension_semantics = [#tpu.dimension_semantics<parallel>], iteration_bounds = array<i64: 2>, scalar_prefetch = 0 : i64, scratch_operands = 0 : i64, tpu.core_type = #tpu.core_type<tc>, window_params = [{transform_indices = @transform_0, window_bounds = array<i64: 64, 16>}, {pipeline_mode = #tpu.pipeline_mode<synchronous>, transform_indices = @transform_1, window_bounds = array<i64: 16, 16>}, {pipeline_mode = #tpu.pipeline_mode<synchronous>, transform_indices = @transform_2, window_bounds = array<i64: 16, 16>}, {pipeline_mode = #tpu.pipeline_mode<synchronous>, transform_indices = @transform_3, window_bounds = array<i64: 16, 9>}, {pipeline_mode = #tpu.pipeline_mode<synchronous>, transform_indices = @transform_4, window_bounds = array<i64: 16, 9>}, {transform_indices = @transform_5, window_bounds = array<i64: 4, 16, 9>}, {transform_indices = @transform_6, window_bounds = array<i64: 4, 16, 9>}, {transform_indices = @transform_7, window_bounds = array<i64: 4, 16, 9>}, {transform_indices = @transform_8, window_bounds = array<i64: 4, 16, 9>}]} {
    %c0 = arith.constant 0 : index
    %c0_0 = arith.constant 0 : index
    %0 = vector.load %arg2[%c0, %c0_0] : memref<16x16xf32, #tpu.memory_space<vmem>>, vector<16x16xf32>
    %c0_1 = arith.constant 0 : index
    %c0_2 = arith.constant 0 : index
    %1 = vector.load %arg3[%c0_1, %c0_2] : memref<16x16xf32, #tpu.memory_space<vmem>>, vector<16x16xf32>
    %c0_3 = arith.constant 0 : index
    %c0_4 = arith.constant 0 : index
    %2 = vector.load %arg1[%c0_3, %c0_4] : memref<64x16xf32, #tpu.memory_space<vmem>>, vector<64x16xf32>
    %c0_5 = arith.constant 0 : index
    %c0_6 = arith.constant 0 : index
    %3 = vector.load %arg4[%c0_5, %c0_6] : memref<16x9xf32, #tpu.memory_space<vmem>>, vector<16x9xf32>
    %cst = arith.constant dense<0.000000e+00> : vector<64x9xf32>
    %4 = tpu.matmul %2, %3, %cst {dimension_numbers = #tpu.dot_dimension_numbers<[1], [0], [0], [1], [0, 0, 1, 1], [], []>} : vector<64x16xf32>, vector<16x9xf32>, vector<64x9xf32> -> vector<64x9xf32>
    %c0_7 = arith.constant 0 : index
    %c0_8 = arith.constant 0 : index
    %5 = vector.load %arg5[%c0_7, %c0_8] : memref<16x9xf32, #tpu.memory_space<vmem>>, vector<16x9xf32>
    %cst_9 = arith.constant dense<0.000000e+00> : vector<64x9xf32>
    %6 = tpu.matmul %2, %5, %cst_9 {dimension_numbers = #tpu.dot_dimension_numbers<[1], [0], [0], [1], [0, 0, 1, 1], [], []>} : vector<64x16xf32>, vector<16x9xf32>, vector<64x9xf32> -> vector<64x9xf32>
    %7 = vector.extract_strided_slice %4 {offsets = [0, 0], sizes = [16, 9], strides = [1, 1]} : vector<64x9xf32> to vector<16x9xf32>
    %8 = vector.extract_strided_slice %6 {offsets = [0, 0], sizes = [16, 9], strides = [1, 1]} : vector<64x9xf32> to vector<16x9xf32>
    %cst_10 = arith.constant dense<0.000000e+00> : vector<16x9xf32>
    %9 = tpu.matmul %0, %7, %cst_10 {dimension_numbers = #tpu.dot_dimension_numbers<[1], [0], [0], [1], [0, 0, 1, 1], [], []>} : vector<16x16xf32>, vector<16x9xf32>, vector<16x9xf32> -> vector<16x9xf32>
    %cst_11 = arith.constant dense<0.000000e+00> : vector<16x9xf32>
    %10 = tpu.matmul %1, %8, %cst_11 {dimension_numbers = #tpu.dot_dimension_numbers<[1], [0], [0], [1], [0, 0, 1, 1], [], []>} : vector<16x16xf32>, vector<16x9xf32>, vector<16x9xf32> -> vector<16x9xf32>
    %11 = arith.subf %9, %10 : vector<16x9xf32>
    %cst_12 = arith.constant 3.906250e-03 : f32
    %12 = vector.broadcast %cst_12 : f32 to vector<16x9xf32>
    %13 = arith.mulf %11, %12 : vector<16x9xf32>
    %cst_13 = arith.constant dense<0.000000e+00> : vector<16x9xf32>
    %14 = tpu.matmul %0, %8, %cst_13 {dimension_numbers = #tpu.dot_dimension_numbers<[1], [0], [0], [1], [0, 0, 1, 1], [], []>} : vector<16x16xf32>, vector<16x9xf32>, vector<16x9xf32> -> vector<16x9xf32>
    %cst_14 = arith.constant dense<0.000000e+00> : vector<16x9xf32>
    %15 = tpu.matmul %1, %7, %cst_14 {dimension_numbers = #tpu.dot_dimension_numbers<[1], [0], [0], [1], [0, 0, 1, 1], [], []>} : vector<16x16xf32>, vector<16x9xf32>, vector<16x9xf32> -> vector<16x9xf32>
    %16 = arith.addf %14, %15 : vector<16x9xf32>
    %cst_15 = arith.constant 0.000000e+00 : f32
    %17 = vector.broadcast %cst_15 : f32 to vector<16x9xf32>
    %18 = arith.subf %17, %16 : vector<16x9xf32>
    %cst_16 = arith.constant 3.906250e-03 : f32
    %19 = vector.broadcast %cst_16 : f32 to vector<16x9xf32>
    %20 = arith.mulf %18, %19 : vector<16x9xf32>
    %21 = arith.mulf %13, %13 : vector<16x9xf32>
    %22 = arith.mulf %20, %20 : vector<16x9xf32>
    %23 = arith.addf %21, %22 : vector<16x9xf32>
    %24 = math.sqrt %23 : vector<16x9xf32>
    %c0_17 = arith.constant 0 : index
    %c0_18 = arith.constant 0 : index
    %c0_19 = arith.constant 0 : index
    %25 = vector.load %arg6[%c0_17, %c0_18, %c0_19] : memref<4x16x9xf32, #tpu.memory_space<vmem>>, vector<1x16x9xf32>
    %26 = vector.shape_cast %25 : vector<1x16x9xf32> to vector<16x9xf32>
    %27 = vector.shape_cast %13 : vector<16x9xf32> to vector<1x16x9xf32>
    tpu.vector_store %arg6[%c0_17, %c0_18, %c0_19], %27 {strides = array<i32>} : memref<4x16x9xf32, #tpu.memory_space<vmem>>, vector<1x16x9xf32>,
    %c0_20 = arith.constant 0 : index
    %c0_21 = arith.constant 0 : index
    %c0_22 = arith.constant 0 : index
    %28 = vector.load %arg7[%c0_20, %c0_21, %c0_22] : memref<4x16x9xf32, #tpu.memory_space<vmem>>, vector<1x16x9xf32>
    %29 = vector.shape_cast %28 : vector<1x16x9xf32> to vector<16x9xf32>
    %30 = vector.shape_cast %20 : vector<16x9xf32> to vector<1x16x9xf32>
    tpu.vector_store %arg7[%c0_20, %c0_21, %c0_22], %30 {strides = array<i32>} : memref<4x16x9xf32, #tpu.memory_space<vmem>>, vector<1x16x9xf32>,
    %c0_23 = arith.constant 0 : index
    %c0_24 = arith.constant 0 : index
    %c0_25 = arith.constant 0 : index
    %31 = vector.load %arg8[%c0_23, %c0_24, %c0_25] : memref<4x16x9xf32, #tpu.memory_space<vmem>>, vector<1x16x9xf32>
    %32 = vector.shape_cast %31 : vector<1x16x9xf32> to vector<16x9xf32>
    %33 = vector.shape_cast %24 : vector<16x9xf32> to vector<1x16x9xf32>
    tpu.vector_store %arg8[%c0_23, %c0_24, %c0_25], %33 {strides = array<i32>} : memref<4x16x9xf32, #tpu.memory_space<vmem>>, vector<1x16x9xf32>,
    %34 = math.absf %20 : vector<16x9xf32>
    %35 = math.absf %13 : vector<16x9xf32>
    %36 = arith.divf %34, %35 : vector<16x9xf32>
    %cst_26 = arith.constant 2.41421366 : f32
    %37 = vector.broadcast %cst_26 : f32 to vector<16x9xf32>
    %38 = arith.cmpf ogt, %36, %37 : vector<16x9xf32>
    %cst_27 = arith.constant 0.414213568 : f32
    %39 = vector.broadcast %cst_27 : f32 to vector<16x9xf32>
    %40 = arith.cmpf ogt, %36, %39 : vector<16x9xf32>
    %cst_28 = arith.constant -1.000000e+00 : f32
    %41 = vector.broadcast %cst_28 : f32 to vector<16x9xf32>
    %42 = arith.divf %41, %36 : vector<16x9xf32>
    %cst_29 = arith.constant 1.000000e+00 : f32
    %43 = vector.broadcast %cst_29 : f32 to vector<16x9xf32>
    %44 = arith.subf %36, %43 : vector<16x9xf32>
    %cst_30 = arith.constant 1.000000e+00 : f32
    %45 = vector.broadcast %cst_30 : f32 to vector<16x9xf32>
    %46 = arith.addf %36, %45 : vector<16x9xf32>
    %47 = arith.divf %44, %46 : vector<16x9xf32>
    %48 = arith.select %40, %47, %36 : vector<16x9xi1>, vector<16x9xf32>
    %49 = arith.select %38, %42, %48 : vector<16x9xi1>, vector<16x9xf32>
    %cst_31 = arith.constant 0.785398185 : f32
    %cst_32 = arith.constant 0.000000e+00 : f32
    %50 = vector.broadcast %cst_31 : f32 to vector<16x9xf32>
    %51 = vector.broadcast %cst_32 : f32 to vector<16x9xf32>
    %52 = arith.select %40, %50, %51 : vector<16x9xi1>, vector<16x9xf32>
    %cst_33 = arith.constant 1.57079637 : f32
    %53 = vector.broadcast %cst_33 : f32 to vector<16x9xf32>
    %54 = arith.select %38, %53, %52 : vector<16x9xi1>, vector<16x9xf32>
    %55 = arith.mulf %49, %49 : vector<16x9xf32>
    %cst_34 = arith.constant 0.0805374458 : f32
    %56 = vector.broadcast %cst_34 : f32 to vector<16x9xf32>
    %57 = arith.mulf %56, %55 : vector<16x9xf32>
    %cst_35 = arith.constant 0.138776854 : f32
    %58 = vector.broadcast %cst_35 : f32 to vector<16x9xf32>
    %59 = arith.subf %57, %58 : vector<16x9xf32>
    %60 = arith.mulf %59, %55 : vector<16x9xf32>
    %cst_36 = arith.constant 0.199777111 : f32
    %61 = vector.broadcast %cst_36 : f32 to vector<16x9xf32>
    %62 = arith.addf %60, %61 : vector<16x9xf32>
    %63 = arith.mulf %62, %55 : vector<16x9xf32>
    %cst_37 = arith.constant 0.333329499 : f32
    %64 = vector.broadcast %cst_37 : f32 to vector<16x9xf32>
    %65 = arith.subf %63, %64 : vector<16x9xf32>
    %66 = arith.mulf %65, %55 : vector<16x9xf32>
    %67 = arith.mulf %66, %49 : vector<16x9xf32>
    %68 = arith.addf %67, %49 : vector<16x9xf32>
    %69 = arith.addf %54, %68 : vector<16x9xf32>
    %cst_38 = arith.constant 0.000000e+00 : f32
    %70 = vector.broadcast %cst_38 : f32 to vector<16x9xf32>
    %71 = arith.cmpf oge, %20, %70 : vector<16x9xf32>
    %cst_39 = arith.constant 1.000000e+00 : f32
    %cst_40 = arith.constant -1.000000e+00 : f32
    %72 = vector.broadcast %cst_39 : f32 to vector<16x9xf32>
    %73 = vector.broadcast %cst_40 : f32 to vector<16x9xf32>
    %74 = arith.select %71, %72, %73 : vector<16x9xi1>, vector<16x9xf32>
    %cst_41 = arith.constant 0.000000e+00 : f32
    %75 = vector.broadcast %cst_41 : f32 to vector<16x9xf32>
    %76 = arith.cmpf oge, %13, %75 : vector<16x9xf32>
    %77 = arith.mulf %74, %69 : vector<16x9xf32>
    %cst_42 = arith.constant 3.14159274 : f32
    %78 = vector.broadcast %cst_42 : f32 to vector<16x9xf32>
    %79 = arith.subf %78, %69 : vector<16x9xf32>
    %80 = arith.mulf %74, %79 : vector<16x9xf32>
    %81 = arith.select %76, %77, %80 : vector<16x9xi1>, vector<16x9xf32>
    %cst_43 = arith.constant 0.000000e+00 : f32
    %82 = vector.broadcast %cst_43 : f32 to vector<16x9xf32>
    %83 = arith.cmpf oeq, %24, %82 : vector<16x9xf32>
    %cst_44 = arith.constant 0.000000e+00 : f32
    %84 = vector.broadcast %cst_44 : f32 to vector<16x9xf32>
    %85 = arith.select %83, %84, %81 : vector<16x9xi1>, vector<16x9xf32>
    %c0_45 = arith.constant 0 : index
    %c0_46 = arith.constant 0 : index
    %c0_47 = arith.constant 0 : index
    %86 = vector.load %arg9[%c0_45, %c0_46, %c0_47] : memref<4x16x9xf32, #tpu.memory_space<vmem>>, vector<1x16x9xf32>
    %87 = vector.shape_cast %86 : vector<1x16x9xf32> to vector<16x9xf32>
    %88 = vector.shape_cast %85 : vector<16x9xf32> to vector<1x16x9xf32>
    tpu.vector_store %arg9[%c0_45, %c0_46, %c0_47], %88 {strides = array<i32>} : memref<4x16x9xf32, #tpu.memory_space<vmem>>, vector<1x16x9xf32>,
    %89 = vector.extract_strided_slice %4 {offsets = [16, 0], sizes = [16, 9], strides = [1, 1]} : vector<64x9xf32> to vector<16x9xf32>
    %90 = vector.extract_strided_slice %6 {offsets = [16, 0], sizes = [16, 9], strides = [1, 1]} : vector<64x9xf32> to vector<16x9xf32>
    %cst_48 = arith.constant dense<0.000000e+00> : vector<16x9xf32>
    %91 = tpu.matmul %0, %89, %cst_48 {dimension_numbers = #tpu.dot_dimension_numbers<[1], [0], [0], [1], [0, 0, 1, 1], [], []>} : vector<16x16xf32>, vector<16x9xf32>, vector<16x9xf32> -> vector<16x9xf32>
    %cst_49 = arith.constant dense<0.000000e+00> : vector<16x9xf32>
    %92 = tpu.matmul %1, %90, %cst_49 {dimension_numbers = #tpu.dot_dimension_numbers<[1], [0], [0], [1], [0, 0, 1, 1], [], []>} : vector<16x16xf32>, vector<16x9xf32>, vector<16x9xf32> -> vector<16x9xf32>
    %93 = arith.subf %91, %92 : vector<16x9xf32>
    %cst_50 = arith.constant 3.906250e-03 : f32
    %94 = vector.broadcast %cst_50 : f32 to vector<16x9xf32>
    %95 = arith.mulf %93, %94 : vector<16x9xf32>
    %cst_51 = arith.constant dense<0.000000e+00> : vector<16x9xf32>
    %96 = tpu.matmul %0, %90, %cst_51 {dimension_numbers = #tpu.dot_dimension_numbers<[1], [0], [0], [1], [0, 0, 1, 1], [], []>} : vector<16x16xf32>, vector<16x9xf32>, vector<16x9xf32> -> vector<16x9xf32>
    %cst_52 = arith.constant dense<0.000000e+00> : vector<16x9xf32>
    %97 = tpu.matmul %1, %89, %cst_52 {dimension_numbers = #tpu.dot_dimension_numbers<[1], [0], [0], [1], [0, 0, 1, 1], [], []>} : vector<16x16xf32>, vector<16x9xf32>, vector<16x9xf32> -> vector<16x9xf32>
    %98 = arith.addf %96, %97 : vector<16x9xf32>
    %cst_53 = arith.constant 0.000000e+00 : f32
    %99 = vector.broadcast %cst_53 : f32 to vector<16x9xf32>
    %100 = arith.subf %99, %98 : vector<16x9xf32>
    %cst_54 = arith.constant 3.906250e-03 : f32
    %101 = vector.broadcast %cst_54 : f32 to vector<16x9xf32>
    %102 = arith.mulf %100, %101 : vector<16x9xf32>
    %103 = arith.mulf %95, %95 : vector<16x9xf32>
    %104 = arith.mulf %102, %102 : vector<16x9xf32>
    %105 = arith.addf %103, %104 : vector<16x9xf32>
    %106 = math.sqrt %105 : vector<16x9xf32>
    %c1 = arith.constant 1 : index
    %c0_55 = arith.constant 0 : index
    %c0_56 = arith.constant 0 : index
    %107 = vector.load %arg6[%c1, %c0_55, %c0_56] : memref<4x16x9xf32, #tpu.memory_space<vmem>>, vector<1x16x9xf32>
    %108 = vector.shape_cast %107 : vector<1x16x9xf32> to vector<16x9xf32>
    %109 = vector.shape_cast %95 : vector<16x9xf32> to vector<1x16x9xf32>
    tpu.vector_store %arg6[%c1, %c0_55, %c0_56], %109 {strides = array<i32>} : memref<4x16x9xf32, #tpu.memory_space<vmem>>, vector<1x16x9xf32>,
    %c1_57 = arith.constant 1 : index
    %c0_58 = arith.constant 0 : index
    %c0_59 = arith.constant 0 : index
    %110 = vector.load %arg7[%c1_57, %c0_58, %c0_59] : memref<4x16x9xf32, #tpu.memory_space<vmem>>, vector<1x16x9xf32>
    %111 = vector.shape_cast %110 : vector<1x16x9xf32> to vector<16x9xf32>
    %112 = vector.shape_cast %102 : vector<16x9xf32> to vector<1x16x9xf32>
    tpu.vector_store %arg7[%c1_57, %c0_58, %c0_59], %112 {strides = array<i32>} : memref<4x16x9xf32, #tpu.memory_space<vmem>>, vector<1x16x9xf32>,
    %c1_60 = arith.constant 1 : index
    %c0_61 = arith.constant 0 : index
    %c0_62 = arith.constant 0 : index
    %113 = vector.load %arg8[%c1_60, %c0_61, %c0_62] : memref<4x16x9xf32, #tpu.memory_space<vmem>>, vector<1x16x9xf32>
    %114 = vector.shape_cast %113 : vector<1x16x9xf32> to vector<16x9xf32>
    %115 = vector.shape_cast %106 : vector<16x9xf32> to vector<1x16x9xf32>
    tpu.vector_store %arg8[%c1_60, %c0_61, %c0_62], %115 {strides = array<i32>} : memref<4x16x9xf32, #tpu.memory_space<vmem>>, vector<1x16x9xf32>,
    %116 = math.absf %102 : vector<16x9xf32>
    %117 = math.absf %95 : vector<16x9xf32>
    %118 = arith.divf %116, %117 : vector<16x9xf32>
    %cst_63 = arith.constant 2.41421366 : f32
    %119 = vector.broadcast %cst_63 : f32 to vector<16x9xf32>
    %120 = arith.cmpf ogt, %118, %119 : vector<16x9xf32>
    %cst_64 = arith.constant 0.414213568 : f32
    %121 = vector.broadcast %cst_64 : f32 to vector<16x9xf32>
    %122 = arith.cmpf ogt, %118, %121 : vector<16x9xf32>
    %cst_65 = arith.constant -1.000000e+00 : f32
    %123 = vector.broadcast %cst_65 : f32 to vector<16x9xf32>
    %124 = arith.divf %123, %118 : vector<16x9xf32>
    %cst_66 = arith.constant 1.000000e+00 : f32
    %125 = vector.broadcast %cst_66 : f32 to vector<16x9xf32>
    %126 = arith.subf %118, %125 : vector<16x9xf32>
    %cst_67 = arith.constant 1.000000e+00 : f32
    %127 = vector.broadcast %cst_67 : f32 to vector<16x9xf32>
    %128 = arith.addf %118, %127 : vector<16x9xf32>
    %129 = arith.divf %126, %128 : vector<16x9xf32>
    %130 = arith.select %122, %129, %118 : vector<16x9xi1>, vector<16x9xf32>
    %131 = arith.select %120, %124, %130 : vector<16x9xi1>, vector<16x9xf32>
    %cst_68 = arith.constant 0.785398185 : f32
    %cst_69 = arith.constant 0.000000e+00 : f32
    %132 = vector.broadcast %cst_68 : f32 to vector<16x9xf32>
    %133 = vector.broadcast %cst_69 : f32 to vector<16x9xf32>
    %134 = arith.select %122, %132, %133 : vector<16x9xi1>, vector<16x9xf32>
    %cst_70 = arith.constant 1.57079637 : f32
    %135 = vector.broadcast %cst_70 : f32 to vector<16x9xf32>
    %136 = arith.select %120, %135, %134 : vector<16x9xi1>, vector<16x9xf32>
    %137 = arith.mulf %131, %131 : vector<16x9xf32>
    %cst_71 = arith.constant 0.0805374458 : f32
    %138 = vector.broadcast %cst_71 : f32 to vector<16x9xf32>
    %139 = arith.mulf %138, %137 : vector<16x9xf32>
    %cst_72 = arith.constant 0.138776854 : f32
    %140 = vector.broadcast %cst_72 : f32 to vector<16x9xf32>
    %141 = arith.subf %139, %140 : vector<16x9xf32>
    %142 = arith.mulf %141, %137 : vector<16x9xf32>
    %cst_73 = arith.constant 0.199777111 : f32
    %143 = vector.broadcast %cst_73 : f32 to vector<16x9xf32>
    %144 = arith.addf %142, %143 : vector<16x9xf32>
    %145 = arith.mulf %144, %137 : vector<16x9xf32>
    %cst_74 = arith.constant 0.333329499 : f32
    %146 = vector.broadcast %cst_74 : f32 to vector<16x9xf32>
    %147 = arith.subf %145, %146 : vector<16x9xf32>
    %148 = arith.mulf %147, %137 : vector<16x9xf32>
    %149 = arith.mulf %148, %131 : vector<16x9xf32>
    %150 = arith.addf %149, %131 : vector<16x9xf32>
    %151 = arith.addf %136, %150 : vector<16x9xf32>
    %cst_75 = arith.constant 0.000000e+00 : f32
    %152 = vector.broadcast %cst_75 : f32 to vector<16x9xf32>
    %153 = arith.cmpf oge, %102, %152 : vector<16x9xf32>
    %cst_76 = arith.constant 1.000000e+00 : f32
    %cst_77 = arith.constant -1.000000e+00 : f32
    %154 = vector.broadcast %cst_76 : f32 to vector<16x9xf32>
    %155 = vector.broadcast %cst_77 : f32 to vector<16x9xf32>
    %156 = arith.select %153, %154, %155 : vector<16x9xi1>, vector<16x9xf32>
    %cst_78 = arith.constant 0.000000e+00 : f32
    %157 = vector.broadcast %cst_78 : f32 to vector<16x9xf32>
    %158 = arith.cmpf oge, %95, %157 : vector<16x9xf32>
    %159 = arith.mulf %156, %151 : vector<16x9xf32>
    %cst_79 = arith.constant 3.14159274 : f32
    %160 = vector.broadcast %cst_79 : f32 to vector<16x9xf32>
    %161 = arith.subf %160, %151 : vector<16x9xf32>
    %162 = arith.mulf %156, %161 : vector<16x9xf32>
    %163 = arith.select %158, %159, %162 : vector<16x9xi1>, vector<16x9xf32>
    %cst_80 = arith.constant 0.000000e+00 : f32
    %164 = vector.broadcast %cst_80 : f32 to vector<16x9xf32>
    %165 = arith.cmpf oeq, %106, %164 : vector<16x9xf32>
    %cst_81 = arith.constant 0.000000e+00 : f32
    %166 = vector.broadcast %cst_81 : f32 to vector<16x9xf32>
    %167 = arith.select %165, %166, %163 : vector<16x9xi1>, vector<16x9xf32>
    %c1_82 = arith.constant 1 : index
    %c0_83 = arith.constant 0 : index
    %c0_84 = arith.constant 0 : index
    %168 = vector.load %arg9[%c1_82, %c0_83, %c0_84] : memref<4x16x9xf32, #tpu.memory_space<vmem>>, vector<1x16x9xf32>
    %169 = vector.shape_cast %168 : vector<1x16x9xf32> to vector<16x9xf32>
    %170 = vector.shape_cast %167 : vector<16x9xf32> to vector<1x16x9xf32>
    tpu.vector_store %arg9[%c1_82, %c0_83, %c0_84], %170 {strides = array<i32>} : memref<4x16x9xf32, #tpu.memory_space<vmem>>, vector<1x16x9xf32>,
    %171 = vector.extract_strided_slice %4 {offsets = [32, 0], sizes = [16, 9], strides = [1, 1]} : vector<64x9xf32> to vector<16x9xf32>
    %172 = vector.extract_strided_slice %6 {offsets = [32, 0], sizes = [16, 9], strides = [1, 1]} : vector<64x9xf32> to vector<16x9xf32>
    %cst_85 = arith.constant dense<0.000000e+00> : vector<16x9xf32>
    %173 = tpu.matmul %0, %171, %cst_85 {dimension_numbers = #tpu.dot_dimension_numbers<[1], [0], [0], [1], [0, 0, 1, 1], [], []>} : vector<16x16xf32>, vector<16x9xf32>, vector<16x9xf32> -> vector<16x9xf32>
    %cst_86 = arith.constant dense<0.000000e+00> : vector<16x9xf32>
    %174 = tpu.matmul %1, %172, %cst_86 {dimension_numbers = #tpu.dot_dimension_numbers<[1], [0], [0], [1], [0, 0, 1, 1], [], []>} : vector<16x16xf32>, vector<16x9xf32>, vector<16x9xf32> -> vector<16x9xf32>
    %175 = arith.subf %173, %174 : vector<16x9xf32>
    %cst_87 = arith.constant 3.906250e-03 : f32
    %176 = vector.broadcast %cst_87 : f32 to vector<16x9xf32>
    %177 = arith.mulf %175, %176 : vector<16x9xf32>
    %cst_88 = arith.constant dense<0.000000e+00> : vector<16x9xf32>
    %178 = tpu.matmul %0, %172, %cst_88 {dimension_numbers = #tpu.dot_dimension_numbers<[1], [0], [0], [1], [0, 0, 1, 1], [], []>} : vector<16x16xf32>, vector<16x9xf32>, vector<16x9xf32> -> vector<16x9xf32>
    %cst_89 = arith.constant dense<0.000000e+00> : vector<16x9xf32>
    %179 = tpu.matmul %1, %171, %cst_89 {dimension_numbers = #tpu.dot_dimension_numbers<[1], [0], [0], [1], [0, 0, 1, 1], [], []>} : vector<16x16xf32>, vector<16x9xf32>, vector<16x9xf32> -> vector<16x9xf32>
    %180 = arith.addf %178, %179 : vector<16x9xf32>
    %cst_90 = arith.constant 0.000000e+00 : f32
    %181 = vector.broadcast %cst_90 : f32 to vector<16x9xf32>
    %182 = arith.subf %181, %180 : vector<16x9xf32>
    %cst_91 = arith.constant 3.906250e-03 : f32
    %183 = vector.broadcast %cst_91 : f32 to vector<16x9xf32>
    %184 = arith.mulf %182, %183 : vector<16x9xf32>
    %185 = arith.mulf %177, %177 : vector<16x9xf32>
    %186 = arith.mulf %184, %184 : vector<16x9xf32>
    %187 = arith.addf %185, %186 : vector<16x9xf32>
    %188 = math.sqrt %187 : vector<16x9xf32>
    %c2 = arith.constant 2 : index
    %c0_92 = arith.constant 0 : index
    %c0_93 = arith.constant 0 : index
    %189 = vector.load %arg6[%c2, %c0_92, %c0_93] : memref<4x16x9xf32, #tpu.memory_space<vmem>>, vector<1x16x9xf32>
    %190 = vector.shape_cast %189 : vector<1x16x9xf32> to vector<16x9xf32>
    %191 = vector.shape_cast %177 : vector<16x9xf32> to vector<1x16x9xf32>
    tpu.vector_store %arg6[%c2, %c0_92, %c0_93], %191 {strides = array<i32>} : memref<4x16x9xf32, #tpu.memory_space<vmem>>, vector<1x16x9xf32>,
    %c2_94 = arith.constant 2 : index
    %c0_95 = arith.constant 0 : index
    %c0_96 = arith.constant 0 : index
    %192 = vector.load %arg7[%c2_94, %c0_95, %c0_96] : memref<4x16x9xf32, #tpu.memory_space<vmem>>, vector<1x16x9xf32>
    %193 = vector.shape_cast %192 : vector<1x16x9xf32> to vector<16x9xf32>
    %194 = vector.shape_cast %184 : vector<16x9xf32> to vector<1x16x9xf32>
    tpu.vector_store %arg7[%c2_94, %c0_95, %c0_96], %194 {strides = array<i32>} : memref<4x16x9xf32, #tpu.memory_space<vmem>>, vector<1x16x9xf32>,
    %c2_97 = arith.constant 2 : index
    %c0_98 = arith.constant 0 : index
    %c0_99 = arith.constant 0 : index
    %195 = vector.load %arg8[%c2_97, %c0_98, %c0_99] : memref<4x16x9xf32, #tpu.memory_space<vmem>>, vector<1x16x9xf32>
    %196 = vector.shape_cast %195 : vector<1x16x9xf32> to vector<16x9xf32>
    %197 = vector.shape_cast %188 : vector<16x9xf32> to vector<1x16x9xf32>
    tpu.vector_store %arg8[%c2_97, %c0_98, %c0_99], %197 {strides = array<i32>} : memref<4x16x9xf32, #tpu.memory_space<vmem>>, vector<1x16x9xf32>,
    %198 = math.absf %184 : vector<16x9xf32>
    %199 = math.absf %177 : vector<16x9xf32>
    %200 = arith.divf %198, %199 : vector<16x9xf32>
    %cst_100 = arith.constant 2.41421366 : f32
    %201 = vector.broadcast %cst_100 : f32 to vector<16x9xf32>
    %202 = arith.cmpf ogt, %200, %201 : vector<16x9xf32>
    %cst_101 = arith.constant 0.414213568 : f32
    %203 = vector.broadcast %cst_101 : f32 to vector<16x9xf32>
    %204 = arith.cmpf ogt, %200, %203 : vector<16x9xf32>
    %cst_102 = arith.constant -1.000000e+00 : f32
    %205 = vector.broadcast %cst_102 : f32 to vector<16x9xf32>
    %206 = arith.divf %205, %200 : vector<16x9xf32>
    %cst_103 = arith.constant 1.000000e+00 : f32
    %207 = vector.broadcast %cst_103 : f32 to vector<16x9xf32>
    %208 = arith.subf %200, %207 : vector<16x9xf32>
    %cst_104 = arith.constant 1.000000e+00 : f32
    %209 = vector.broadcast %cst_104 : f32 to vector<16x9xf32>
    %210 = arith.addf %200, %209 : vector<16x9xf32>
    %211 = arith.divf %208, %210 : vector<16x9xf32>
    %212 = arith.select %204, %211, %200 : vector<16x9xi1>, vector<16x9xf32>
    %213 = arith.select %202, %206, %212 : vector<16x9xi1>, vector<16x9xf32>
    %cst_105 = arith.constant 0.785398185 : f32
    %cst_106 = arith.constant 0.000000e+00 : f32
    %214 = vector.broadcast %cst_105 : f32 to vector<16x9xf32>
    %215 = vector.broadcast %cst_106 : f32 to vector<16x9xf32>
    %216 = arith.select %204, %214, %215 : vector<16x9xi1>, vector<16x9xf32>
    %cst_107 = arith.constant 1.57079637 : f32
    %217 = vector.broadcast %cst_107 : f32 to vector<16x9xf32>
    %218 = arith.select %202, %217, %216 : vector<16x9xi1>, vector<16x9xf32>
    %219 = arith.mulf %213, %213 : vector<16x9xf32>
    %cst_108 = arith.constant 0.0805374458 : f32
    %220 = vector.broadcast %cst_108 : f32 to vector<16x9xf32>
    %221 = arith.mulf %220, %219 : vector<16x9xf32>
    %cst_109 = arith.constant 0.138776854 : f32
    %222 = vector.broadcast %cst_109 : f32 to vector<16x9xf32>
    %223 = arith.subf %221, %222 : vector<16x9xf32>
    %224 = arith.mulf %223, %219 : vector<16x9xf32>
    %cst_110 = arith.constant 0.199777111 : f32
    %225 = vector.broadcast %cst_110 : f32 to vector<16x9xf32>
    %226 = arith.addf %224, %225 : vector<16x9xf32>
    %227 = arith.mulf %226, %219 : vector<16x9xf32>
    %cst_111 = arith.constant 0.333329499 : f32
    %228 = vector.broadcast %cst_111 : f32 to vector<16x9xf32>
    %229 = arith.subf %227, %228 : vector<16x9xf32>
    %230 = arith.mulf %229, %219 : vector<16x9xf32>
    %231 = arith.mulf %230, %213 : vector<16x9xf32>
    %232 = arith.addf %231, %213 : vector<16x9xf32>
    %233 = arith.addf %218, %232 : vector<16x9xf32>
    %cst_112 = arith.constant 0.000000e+00 : f32
    %234 = vector.broadcast %cst_112 : f32 to vector<16x9xf32>
    %235 = arith.cmpf oge, %184, %234 : vector<16x9xf32>
    %cst_113 = arith.constant 1.000000e+00 : f32
    %cst_114 = arith.constant -1.000000e+00 : f32
    %236 = vector.broadcast %cst_113 : f32 to vector<16x9xf32>
    %237 = vector.broadcast %cst_114 : f32 to vector<16x9xf32>
    %238 = arith.select %235, %236, %237 : vector<16x9xi1>, vector<16x9xf32>
    %cst_115 = arith.constant 0.000000e+00 : f32
    %239 = vector.broadcast %cst_115 : f32 to vector<16x9xf32>
    %240 = arith.cmpf oge, %177, %239 : vector<16x9xf32>
    %241 = arith.mulf %238, %233 : vector<16x9xf32>
    %cst_116 = arith.constant 3.14159274 : f32
    %242 = vector.broadcast %cst_116 : f32 to vector<16x9xf32>
    %243 = arith.subf %242, %233 : vector<16x9xf32>
    %244 = arith.mulf %238, %243 : vector<16x9xf32>
    %245 = arith.select %240, %241, %244 : vector<16x9xi1>, vector<16x9xf32>
    %cst_117 = arith.constant 0.000000e+00 : f32
    %246 = vector.broadcast %cst_117 : f32 to vector<16x9xf32>
    %247 = arith.cmpf oeq, %188, %246 : vector<16x9xf32>
    %cst_118 = arith.constant 0.000000e+00 : f32
    %248 = vector.broadcast %cst_118 : f32 to vector<16x9xf32>
    %249 = arith.select %247, %248, %245 : vector<16x9xi1>, vector<16x9xf32>
    %c2_119 = arith.constant 2 : index
    %c0_120 = arith.constant 0 : index
    %c0_121 = arith.constant 0 : index
    %250 = vector.load %arg9[%c2_119, %c0_120, %c0_121] : memref<4x16x9xf32, #tpu.memory_space<vmem>>, vector<1x16x9xf32>
    %251 = vector.shape_cast %250 : vector<1x16x9xf32> to vector<16x9xf32>
    %252 = vector.shape_cast %249 : vector<16x9xf32> to vector<1x16x9xf32>
    tpu.vector_store %arg9[%c2_119, %c0_120, %c0_121], %252 {strides = array<i32>} : memref<4x16x9xf32, #tpu.memory_space<vmem>>, vector<1x16x9xf32>,
    %253 = vector.extract_strided_slice %4 {offsets = [48, 0], sizes = [16, 9], strides = [1, 1]} : vector<64x9xf32> to vector<16x9xf32>
    %254 = vector.extract_strided_slice %6 {offsets = [48, 0], sizes = [16, 9], strides = [1, 1]} : vector<64x9xf32> to vector<16x9xf32>
    %cst_122 = arith.constant dense<0.000000e+00> : vector<16x9xf32>
    %255 = tpu.matmul %0, %253, %cst_122 {dimension_numbers = #tpu.dot_dimension_numbers<[1], [0], [0], [1], [0, 0, 1, 1], [], []>} : vector<16x16xf32>, vector<16x9xf32>, vector<16x9xf32> -> vector<16x9xf32>
    %cst_123 = arith.constant dense<0.000000e+00> : vector<16x9xf32>
    %256 = tpu.matmul %1, %254, %cst_123 {dimension_numbers = #tpu.dot_dimension_numbers<[1], [0], [0], [1], [0, 0, 1, 1], [], []>} : vector<16x16xf32>, vector<16x9xf32>, vector<16x9xf32> -> vector<16x9xf32>
    %257 = arith.subf %255, %256 : vector<16x9xf32>
    %cst_124 = arith.constant 3.906250e-03 : f32
    %258 = vector.broadcast %cst_124 : f32 to vector<16x9xf32>
    %259 = arith.mulf %257, %258 : vector<16x9xf32>
    %cst_125 = arith.constant dense<0.000000e+00> : vector<16x9xf32>
    %260 = tpu.matmul %0, %254, %cst_125 {dimension_numbers = #tpu.dot_dimension_numbers<[1], [0], [0], [1], [0, 0, 1, 1], [], []>} : vector<16x16xf32>, vector<16x9xf32>, vector<16x9xf32> -> vector<16x9xf32>
    %cst_126 = arith.constant dense<0.000000e+00> : vector<16x9xf32>
    %261 = tpu.matmul %1, %253, %cst_126 {dimension_numbers = #tpu.dot_dimension_numbers<[1], [0], [0], [1], [0, 0, 1, 1], [], []>} : vector<16x16xf32>, vector<16x9xf32>, vector<16x9xf32> -> vector<16x9xf32>
    %262 = arith.addf %260, %261 : vector<16x9xf32>
    %cst_127 = arith.constant 0.000000e+00 : f32
    %263 = vector.broadcast %cst_127 : f32 to vector<16x9xf32>
    %264 = arith.subf %263, %262 : vector<16x9xf32>
    %cst_128 = arith.constant 3.906250e-03 : f32
    %265 = vector.broadcast %cst_128 : f32 to vector<16x9xf32>
    %266 = arith.mulf %264, %265 : vector<16x9xf32>
    %267 = arith.mulf %259, %259 : vector<16x9xf32>
    %268 = arith.mulf %266, %266 : vector<16x9xf32>
    %269 = arith.addf %267, %268 : vector<16x9xf32>
    %270 = math.sqrt %269 : vector<16x9xf32>
    %c3 = arith.constant 3 : index
    %c0_129 = arith.constant 0 : index
    %c0_130 = arith.constant 0 : index
    %271 = vector.load %arg6[%c3, %c0_129, %c0_130] : memref<4x16x9xf32, #tpu.memory_space<vmem>>, vector<1x16x9xf32>
    %272 = vector.shape_cast %271 : vector<1x16x9xf32> to vector<16x9xf32>
    %273 = vector.shape_cast %259 : vector<16x9xf32> to vector<1x16x9xf32>
    tpu.vector_store %arg6[%c3, %c0_129, %c0_130], %273 {strides = array<i32>} : memref<4x16x9xf32, #tpu.memory_space<vmem>>, vector<1x16x9xf32>,
    %c3_131 = arith.constant 3 : index
    %c0_132 = arith.constant 0 : index
    %c0_133 = arith.constant 0 : index
    %274 = vector.load %arg7[%c3_131, %c0_132, %c0_133] : memref<4x16x9xf32, #tpu.memory_space<vmem>>, vector<1x16x9xf32>
    %275 = vector.shape_cast %274 : vector<1x16x9xf32> to vector<16x9xf32>
    %276 = vector.shape_cast %266 : vector<16x9xf32> to vector<1x16x9xf32>
    tpu.vector_store %arg7[%c3_131, %c0_132, %c0_133], %276 {strides = array<i32>} : memref<4x16x9xf32, #tpu.memory_space<vmem>>, vector<1x16x9xf32>,
    %c3_134 = arith.constant 3 : index
    %c0_135 = arith.constant 0 : index
    %c0_136 = arith.constant 0 : index
    %277 = vector.load %arg8[%c3_134, %c0_135, %c0_136] : memref<4x16x9xf32, #tpu.memory_space<vmem>>, vector<1x16x9xf32>
    %278 = vector.shape_cast %277 : vector<1x16x9xf32> to vector<16x9xf32>
    %279 = vector.shape_cast %270 : vector<16x9xf32> to vector<1x16x9xf32>
    tpu.vector_store %arg8[%c3_134, %c0_135, %c0_136], %279 {strides = array<i32>} : memref<4x16x9xf32, #tpu.memory_space<vmem>>, vector<1x16x9xf32>,
    %280 = math.absf %266 : vector<16x9xf32>
    %281 = math.absf %259 : vector<16x9xf32>
    %282 = arith.divf %280, %281 : vector<16x9xf32>
    %cst_137 = arith.constant 2.41421366 : f32
    %283 = vector.broadcast %cst_137 : f32 to vector<16x9xf32>
    %284 = arith.cmpf ogt, %282, %283 : vector<16x9xf32>
    %cst_138 = arith.constant 0.414213568 : f32
    %285 = vector.broadcast %cst_138 : f32 to vector<16x9xf32>
    %286 = arith.cmpf ogt, %282, %285 : vector<16x9xf32>
    %cst_139 = arith.constant -1.000000e+00 : f32
    %287 = vector.broadcast %cst_139 : f32 to vector<16x9xf32>
    %288 = arith.divf %287, %282 : vector<16x9xf32>
    %cst_140 = arith.constant 1.000000e+00 : f32
    %289 = vector.broadcast %cst_140 : f32 to vector<16x9xf32>
    %290 = arith.subf %282, %289 : vector<16x9xf32>
    %cst_141 = arith.constant 1.000000e+00 : f32
    %291 = vector.broadcast %cst_141 : f32 to vector<16x9xf32>
    %292 = arith.addf %282, %291 : vector<16x9xf32>
    %293 = arith.divf %290, %292 : vector<16x9xf32>
    %294 = arith.select %286, %293, %282 : vector<16x9xi1>, vector<16x9xf32>
    %295 = arith.select %284, %288, %294 : vector<16x9xi1>, vector<16x9xf32>
    %cst_142 = arith.constant 0.785398185 : f32
    %cst_143 = arith.constant 0.000000e+00 : f32
    %296 = vector.broadcast %cst_142 : f32 to vector<16x9xf32>
    %297 = vector.broadcast %cst_143 : f32 to vector<16x9xf32>
    %298 = arith.select %286, %296, %297 : vector<16x9xi1>, vector<16x9xf32>
    %cst_144 = arith.constant 1.57079637 : f32
    %299 = vector.broadcast %cst_144 : f32 to vector<16x9xf32>
    %300 = arith.select %284, %299, %298 : vector<16x9xi1>, vector<16x9xf32>
    %301 = arith.mulf %295, %295 : vector<16x9xf32>
    %cst_145 = arith.constant 0.0805374458 : f32
    %302 = vector.broadcast %cst_145 : f32 to vector<16x9xf32>
    %303 = arith.mulf %302, %301 : vector<16x9xf32>
    %cst_146 = arith.constant 0.138776854 : f32
    %304 = vector.broadcast %cst_146 : f32 to vector<16x9xf32>
    %305 = arith.subf %303, %304 : vector<16x9xf32>
    %306 = arith.mulf %305, %301 : vector<16x9xf32>
    %cst_147 = arith.constant 0.199777111 : f32
    %307 = vector.broadcast %cst_147 : f32 to vector<16x9xf32>
    %308 = arith.addf %306, %307 : vector<16x9xf32>
    %309 = arith.mulf %308, %301 : vector<16x9xf32>
    %cst_148 = arith.constant 0.333329499 : f32
    %310 = vector.broadcast %cst_148 : f32 to vector<16x9xf32>
    %311 = arith.subf %309, %310 : vector<16x9xf32>
    %312 = arith.mulf %311, %301 : vector<16x9xf32>
    %313 = arith.mulf %312, %295 : vector<16x9xf32>
    %314 = arith.addf %313, %295 : vector<16x9xf32>
    %315 = arith.addf %300, %314 : vector<16x9xf32>
    %cst_149 = arith.constant 0.000000e+00 : f32
    %316 = vector.broadcast %cst_149 : f32 to vector<16x9xf32>
    %317 = arith.cmpf oge, %266, %316 : vector<16x9xf32>
    %cst_150 = arith.constant 1.000000e+00 : f32
    %cst_151 = arith.constant -1.000000e+00 : f32
    %318 = vector.broadcast %cst_150 : f32 to vector<16x9xf32>
    %319 = vector.broadcast %cst_151 : f32 to vector<16x9xf32>
    %320 = arith.select %317, %318, %319 : vector<16x9xi1>, vector<16x9xf32>
    %cst_152 = arith.constant 0.000000e+00 : f32
    %321 = vector.broadcast %cst_152 : f32 to vector<16x9xf32>
    %322 = arith.cmpf oge, %259, %321 : vector<16x9xf32>
    %323 = arith.mulf %320, %315 : vector<16x9xf32>
    %cst_153 = arith.constant 3.14159274 : f32
    %324 = vector.broadcast %cst_153 : f32 to vector<16x9xf32>
    %325 = arith.subf %324, %315 : vector<16x9xf32>
    %326 = arith.mulf %320, %325 : vector<16x9xf32>
    %327 = arith.select %322, %323, %326 : vector<16x9xi1>, vector<16x9xf32>
    %cst_154 = arith.constant 0.000000e+00 : f32
    %328 = vector.broadcast %cst_154 : f32 to vector<16x9xf32>
    %329 = arith.cmpf oeq, %270, %328 : vector<16x9xf32>
    %cst_155 = arith.constant 0.000000e+00 : f32
    %330 = vector.broadcast %cst_155 : f32 to vector<16x9xf32>
    %331 = arith.select %329, %330, %327 : vector<16x9xi1>, vector<16x9xf32>
    %c3_156 = arith.constant 3 : index
    %c0_157 = arith.constant 0 : index
    %c0_158 = arith.constant 0 : index
    %332 = vector.load %arg9[%c3_156, %c0_157, %c0_158] : memref<4x16x9xf32, #tpu.memory_space<vmem>>, vector<1x16x9xf32>
    %333 = vector.shape_cast %332 : vector<1x16x9xf32> to vector<16x9xf32>
    %334 = vector.shape_cast %331 : vector<16x9xf32> to vector<1x16x9xf32>
    tpu.vector_store %arg9[%c3_156, %c0_157, %c0_158], %334 {strides = array<i32>} : memref<4x16x9xf32, #tpu.memory_space<vmem>>, vector<1x16x9xf32>,
    return
  }
  func.func @transform_0(%arg0: i32) -> (i32, i32) {
    %c0_i32 = arith.constant 0 : i32
    %c0_i32_0 = arith.constant 0 : i32
    return %arg0, %c0_i32 : i32, i32
  }
  func.func @transform_1(%arg0: i32) -> (i32, i32) {
    %c0_i32 = arith.constant 0 : i32
    %c0_i32_0 = arith.constant 0 : i32
    %c0_i32_1 = arith.constant 0 : i32
    return %c0_i32, %c0_i32_0 : i32, i32
  }
  func.func @transform_2(%arg0: i32) -> (i32, i32) {
    %c0_i32 = arith.constant 0 : i32
    %c0_i32_0 = arith.constant 0 : i32
    %c0_i32_1 = arith.constant 0 : i32
    return %c0_i32, %c0_i32_0 : i32, i32
  }
  func.func @transform_3(%arg0: i32) -> (i32, i32) {
    %c0_i32 = arith.constant 0 : i32
    %c0_i32_0 = arith.constant 0 : i32
    %c0_i32_1 = arith.constant 0 : i32
    return %c0_i32, %c0_i32_0 : i32, i32
  }
  func.func @transform_4(%arg0: i32) -> (i32, i32) {
    %c0_i32 = arith.constant 0 : i32
    %c0_i32_0 = arith.constant 0 : i32
    %c0_i32_1 = arith.constant 0 : i32
    return %c0_i32, %c0_i32_0 : i32, i32
  }
  func.func @transform_5(%arg0: i32) -> (i32, i32, i32) {
    %c0_i32 = arith.constant 0 : i32
    %c0_i32_0 = arith.constant 0 : i32
    %c0_i32_1 = arith.constant 0 : i32
    return %arg0, %c0_i32, %c0_i32_0 : i32, i32, i32
  }
  func.func @transform_6(%arg0: i32) -> (i32, i32, i32) {
    %c0_i32 = arith.constant 0 : i32
    %c0_i32_0 = arith.constant 0 : i32
    %c0_i32_1 = arith.constant 0 : i32
    return %arg0, %c0_i32, %c0_i32_0 : i32, i32, i32
  }
  func.func @transform_7(%arg0: i32) -> (i32, i32, i32) {
    %c0_i32 = arith.constant 0 : i32
    %c0_i32_0 = arith.constant 0 : i32
    %c0_i32_1 = arith.constant 0 : i32
    return %arg0, %c0_i32, %c0_i32_0 : i32, i32, i32
  }
  func.func @transform_8(%arg0: i32) -> (i32, i32, i32) {
    %c0_i32 = arith.constant 0 : i32
    %c0_i32_0 = arith.constant 0 : i32
    %c0_i32_1 = arith.constant 0 : i32
    return %arg0, %c0_i32, %c0_i32_0 : i32, i32, i32
  }
}

</mosaic_0001>

<llo_original>
// kernel: dft_transform.1
$region0: #{dft_transform.1}
  #allocation0 [shape = 'u32[]', space=smem, size = 0x4, offset = 0x4, fixed_abs, tag = 'smem constant byte address 0x4 - core index']
  #allocation1 [shape = 'u32[144,128]{1,0:T(1,128)}', space=vmem, size = 0x12000, scoped, tag = 'internal scratch']
  %s0 = inlined_call_operand.hbm [shape: f32[128,16], index: 0, kind: input, shape index: {}]
  %s1 = inlined_call_operand.hbm [shape: f32[16,16], index: 1, kind: input, shape index: {}]
  %s2 = inlined_call_operand.hbm [shape: f32[16,16], index: 2, kind: input, shape index: {}]
  %s3 = inlined_call_operand.hbm [shape: f32[16,9], index: 3, kind: input, shape index: {}]
  %s4 = inlined_call_operand.vmem [shape: f32[16,9], index: 4, kind: input, shape index: {}]
  %s5 = inlined_call_operand.vmem [shape: f32[8,16,9], index: 5, kind: output, shape index: {0}]
  %s6 = inlined_call_operand.vmem [shape: f32[8,16,9], index: 6, kind: output, shape index: {1}]
  %s7 = inlined_call_operand.vmem [shape: f32[8,16,9], index: 7, kind: output, shape index: {2}]
  %s8 = inlined_call_operand.vmem [shape: f32[8,16,9], index: 8, kind: output, shape index: {3}]
  %9 = xla_tuple %s5, %s6, %s7, %s8
  %s10 = sld [smem:[#allocation0]]
  $region93: #{dft_transform.1} parent=0
    _
  %s12 = ssub.s32 1, %s10
  %s13 = scalar_select 0, %s12, %s10
  $region1: #{dft_transform.1} parent=0
    #allocation2 [shape = 'u8[65536]{0}', space=vmem, size = 0x10000, scoped, tag = 'input window, operand 0']
    #allocation3 [shape = 's32[2]{0}', space=sflag, size = 0x8, scoped, tag = 'scoped memory for dft_transform.1']
    #allocation4 [shape = 'u8[8192]{0}', space=vmem, size = 0x2000, scoped, tag = 'input window, operand 1, single buffered']
    #allocation5 [shape = 's32[1]{0}', space=sflag, size = 0x4, scoped, tag = 'scoped memory for dft_transform.1']
    #allocation6 [shape = 'u8[8192]{0}', space=vmem, size = 0x2000, scoped, tag = 'input window, operand 2, single buffered']
    #allocation7 [shape = 'u8[8192]{0}', space=vmem, size = 0x2000, scoped, tag = 'input window, operand 3, single buffered']
    #allocation8 [shape = 's32[1]{0}', space=sflag, size = 0x4, scoped, tag = 'scoped memory for dft_transform.1']
    %14 = vsyncpa [#allocation3], 0
    %s15 = scalar_lea.sflag [#allocation3], 1
    %16 = vsyncpa %s15, 0
    %17 = vsyncpa [#allocation5], 0
    %18 = vsyncpa [#allocation8], 0
    loop: start=0, step=1, limit=4
    $region2: #{dft_transform.1} parent=1 // loop_pre_header
      _
    $region3: #{dft_transform.1} parent=1 // loop_header
      %s20 = sphi 0, %s24
      %p21 = scmp.ge.s32.totalorder %s20, 4
      %s30 = sphi 0, %s32
      %s33 = sphi 0, %s30
      %s34 = sphi 0, %s33
      %s50 = sphi 0, %s34
      %s54 = sphi 0, %s54
      %s56 = sphi 0, %s54
      %s57 = sphi 0, %s56
      %s71 = sphi 0, %s57
      %s75 = sphi 0, %s75
      %s77 = sphi 0, %s75
      %s78 = sphi 0, %s77
      %s92 = sphi 0, %s78
      %s96 = sphi 0, %s96
      %s98 = sphi 0, %s96
      %s99 = sphi 0, %s98
      %s113 = sphi 0, %s99
      %s117 = sphi 0, %s117
      %s119 = sphi 0, %s117
      %s120 = sphi 0, %s119
      %s134 = sphi 0, %s120
      %s140 = sphi 0, %s142
      %s143 = sphi 0, %s140
      %s144 = sphi 0, %s143
      %s160 = sphi 0, %s144
      %s166 = sphi 0, %s168
      %s169 = sphi 0, %s166
      %s170 = sphi 0, %s169
      %s186 = sphi 0, %s170
      %s192 = sphi 0, %s194
      %s195 = sphi 0, %s192
      %s196 = sphi 0, %s195
      %s212 = sphi 0, %s196
      %s218 = sphi 0, %s220
      %s221 = sphi 0, %s218
      %s222 = sphi 0, %s221
      %s238 = sphi 0, %s222
    $region4: #{dft_transform.1} parent=1 // loop_header_branch
      %23 = sbr.rel (%p21) target = $region8
    $region5: #{dft_transform.1} parent=1 // loop_body
      %s25 = ssub.s32 %s20, 1
      %s26 = ssub.s32 %s20, 2
      %s27 = sadd.s32 %s20, 1
      %s28 = ssub.s32 %s20, %s27
      %p29 = scmp.eq.s32.totalorder %s28, 0
      %s31 = sadd.s32 %s30, 1
      %s32 = scalar_select %p29, %s30, %s31
      %p35 = pneg %p29
      %p36 = scmp.eq.s32.totalorder %s20, 1
      %p37 = por %p35, %p36
      %p38 = scmp.ne.s32.totalorder %s30, %s33
      %p39 = scmp.eq.s32.totalorder %s20, 0
      %p40 = por %p38, %p39
      %p41 = scmp.ne.s32.totalorder %s30, %s33
      %p42 = scmp.eq.s32.totalorder %s25, 1
      %p43 = por %p41, %p42
      %p44 = scmp.ne.s32.totalorder %s33, %s34
      %p45 = scmp.eq.s32.totalorder %s25, 0
      %p46 = por %p44, %p45
      %p47 = scmp.ne.s32.totalorder %s33, %s34
      %p48 = scmp.eq.s32.totalorder %s26, 1
      %p49 = por %p47, %p48
      %p51 = scmp.ne.s32.totalorder %s34, %s50
      %p52 = scmp.eq.s32.totalorder %s26, 0
      %p53 = por %p51, %p52
      %s55 = sadd.s32 %s54, 1
      %p58 = scmp.eq.s32.totalorder %s20, 1
      %p59 = scmp.ne.s32.totalorder %s54, %s56
      %p60 = scmp.eq.s32.totalorder %s20, 0
      %p61 = por %p59, %p60
      %p62 = scmp.ne.s32.totalorder %s54, %s56
      %p63 = scmp.eq.s32.totalorder %s25, 1
      %p64 = por %p62, %p63
      %p65 = scmp.ne.s32.totalorder %s56, %s57
      %p66 = scmp.eq.s32.totalorder %s25, 0
      %p67 = por %p65, %p66
      %p68 = scmp.ne.s32.totalorder %s56, %s57
      %p69 = scmp.eq.s32.totalorder %s26, 1
      %p70 = por %p68, %p69
      %p72 = scmp.ne.s32.totalorder %s57, %s71
      %p73 = scmp.eq.s32.totalorder %s26, 0
      %p74 = por %p72, %p73
      %s76 = sadd.s32 %s75, 1
      %p79 = scmp.eq.s32.totalorder %s20, 1
      %p80 = scmp.ne.s32.totalorder %s75, %s77
      %p81 = scmp.eq.s32.totalorder %s20, 0
      %p82 = por %p80, %p81
      %p83 = scmp.ne.s32.totalorder %s75, %s77
      %p84 = scmp.eq.s32.totalorder %s25, 1
      %p85 = por %p83, %p84
      %p86 = scmp.ne.s32.totalorder %s77, %s78
      %p87 = scmp.eq.s32.totalorder %s25, 0
      %p88 = por %p86, %p87
      %p89 = scmp.ne.s32.totalorder %s77, %s78
      %p90 = scmp.eq.s32.totalorder %s26, 1
      %p91 = por %p89, %p90
      %p93 = scmp.ne.s32.totalorder %s78, %s92
      %p94 = scmp.eq.s32.totalorder %s26, 0
      %p95 = por %p93, %p94
      %s97 = sadd.s32 %s96, 1
      %p100 = scmp.eq.s32.totalorder %s20, 1
      %p101 = scmp.ne.s32.totalorder %s96, %s98
      %p102 = scmp.eq.s32.totalorder %s20, 0
      %p103 = por %p101, %p102
      %p104 = scmp.ne.s32.totalorder %s96, %s98
      %p105 = scmp.eq.s32.totalorder %s25, 1
      %p106 = por %p104, %p105
      %p107 = scmp.ne.s32.totalorder %s98, %s99
      %p108 = scmp.eq.s32.totalorder %s25, 0
      %p109 = por %p107, %p108
      %p110 = scmp.ne.s32.totalorder %s98, %s99
      %p111 = scmp.eq.s32.totalorder %s26, 1
      %p112 = por %p110, %p111
      %p114 = scmp.ne.s32.totalorder %s99, %s113
      %p115 = scmp.eq.s32.totalorder %s26, 0
      %p116 = por %p114, %p115
      %s118 = sadd.s32 %s117, 1
      %p121 = scmp.eq.s32.totalorder %s20, 1
      %p122 = scmp.ne.s32.totalorder %s117, %s119
      %p123 = scmp.eq.s32.totalorder %s20, 0
      %p124 = por %p122, %p123
      %p125 = scmp.ne.s32.totalorder %s117, %s119
      %p126 = scmp.eq.s32.totalorder %s25, 1
      %p127 = por %p125, %p126
      %p128 = scmp.ne.s32.totalorder %s119, %s120
      %p129 = scmp.eq.s32.totalorder %s25, 0
      %p130 = por %p128, %p129
      %p131 = scmp.ne.s32.totalorder %s119, %s120
      %p132 = scmp.eq.s32.totalorder %s26, 1
      %p133 = por %p131, %p132
      %p135 = scmp.ne.s32.totalorder %s120, %s134
      %p136 = scmp.eq.s32.totalorder %s26, 0
      %p137 = por %p135, %p136
      %s138 = ssub.s32 %s20, %s27
      %p139 = scmp.eq.s32.totalorder %s138, 0
      %s141 = sadd.s32 %s140, 1
      %s142 = scalar_select %p139, %s140, %s141
      %p145 = pneg %p139
      %p146 = scmp.eq.s32.totalorder %s20, 1
      %p147 = por %p145, %p146
      %p148 = scmp.ne.s32.totalorder %s140, %s143
      %p149 = scmp.eq.s32.totalorder %s20, 0
      %p150 = por %p148, %p149
      %p151 = scmp.ne.s32.totalorder %s140, %s143
      %p152 = scmp.eq.s32.totalorder %s25, 1
      %p153 = por %p151, %p152
      %p154 = scmp.ne.s32.totalorder %s143, %s144
      %p155 = scmp.eq.s32.totalorder %s25, 0
      %p156 = por %p154, %p155
      %p157 = scmp.ne.s32.totalorder %s143, %s144
      %p158 = scmp.eq.s32.totalorder %s26, 1
      %p159 = por %p157, %p158
      %p161 = scmp.ne.s32.totalorder %s144, %s160
      %p162 = scmp.eq.s32.totalorder %s26, 0
      %p163 = por %p161, %p162
      %s164 = ssub.s32 %s20, %s27
      %p165 = scmp.eq.s32.totalorder %s164, 0
      %s167 = sadd.s32 %s166, 1
      %s168 = scalar_select %p165, %s166, %s167
      %p171 = pneg %p165
      %p172 = scmp.eq.s32.totalorder %s20, 1
      %p173 = por %p171, %p172
      %p174 = scmp.ne.s32.totalorder %s166, %s169
      %p175 = scmp.eq.s32.totalorder %s20, 0
      %p176 = por %p174, %p175
      %p177 = scmp.ne.s32.totalorder %s166, %s169
      %p178 = scmp.eq.s32.totalorder %s25, 1
      %p179 = por %p177, %p178
      %p180 = scmp.ne.s32.totalorder %s169, %s170
      %p181 = scmp.eq.s32.totalorder %s25, 0
      %p182 = por %p180, %p181
      %p183 = scmp.ne.s32.totalorder %s169, %s170
      %p184 = scmp.eq.s32.totalorder %s26, 1
      %p185 = por %p183, %p184
      %p187 = scmp.ne.s32.totalorder %s170, %s186
      %p188 = scmp.eq.s32.totalorder %s26, 0
      %p189 = por %p187, %p188
      %s190 = ssub.s32 %s20, %s27
      %p191 = scmp.eq.s32.totalorder %s190, 0
      %s193 = sadd.s32 %s192, 1
      %s194 = scalar_select %p191, %s192, %s193
      %p197 = pneg %p191
      %p198 = scmp.eq.s32.totalorder %s20, 1
      %p199 = por %p197, %p198
      %p200 = scmp.ne.s32.totalorder %s192, %s195
      %p201 = scmp.eq.s32.totalorder %s20, 0
      %p202 = por %p200, %p201
      %p203 = scmp.ne.s32.totalorder %s192, %s195
      %p204 = scmp.eq.s32.totalorder %s25, 1
      %p205 = por %p203, %p204
      %p206 = scmp.ne.s32.totalorder %s195, %s196
      %p207 = scmp.eq.s32.totalorder %s25, 0
      %p208 = por %p206, %p207
      %p209 = scmp.ne.s32.totalorder %s195, %s196
      %p210 = scmp.eq.s32.totalorder %s26, 1
      %p211 = por %p209, %p210
      %p213 = scmp.ne.s32.totalorder %s196, %s212
      %p214 = scmp.eq.s32.totalorder %s26, 0
      %p215 = por %p213, %p214
      %s216 = ssub.s32 %s20, %s27
      %p217 = scmp.eq.s32.totalorder %s216, 0
      %s219 = sadd.s32 %s218, 1
      %s220 = scalar_select %p217, %s218, %s219
      %p223 = pneg %p217
      %p224 = scmp.eq.s32.totalorder %s20, 1
      %p225 = por %p223, %p224
      %p226 = scmp.ne.s32.totalorder %s218, %s221
      %p227 = scmp.eq.s32.totalorder %s20, 0
      %p228 = por %p226, %p227
      %p229 = scmp.ne.s32.totalorder %s218, %s221
      %p230 = scmp.eq.s32.totalorder %s25, 1
      %p231 = por %p229, %p230
      %p232 = scmp.ne.s32.totalorder %s221, %s222
      %p233 = scmp.eq.s32.totalorder %s25, 0
      %p234 = por %p232, %p233
      %p235 = scmp.ne.s32.totalorder %s221, %s222
      %p236 = scmp.eq.s32.totalorder %s26, 1
      %p237 = por %p235, %p236
      %p239 = scmp.ne.s32.totalorder %s222, %s238
      %p240 = scmp.eq.s32.totalorder %s26, 0
      %p241 = por %p239, %p240
      %p242 = scmp.le.s32.totalorder 1, %s20
      %p243 = scmp.lt.s32.totalorder %s20, 3
      %p244 = pnand %p242, %p243
      %p245 = pneg %p244
      // Predicated region
      $region9: #{dft_transform.1} parent=5 // pred_check
        _
      $region10: #{dft_transform.1} parent=5 // pred_check_branch
        %247 = sbr.rel (%p244) target = $region12
      $region11: #{dft_transform.1} parent=5 // pred_region
        %s248 = ssub.s32 %s20, 1
        // Predicated region
        $region13: #{dft_transform.1} parent=11 // pred_check
          %p249 = pneg %p67
        $region14: #{dft_transform.1} parent=11 // pred_check_branch
          %251 = sbr.rel (%p249) target = $region16
        $region15: #{dft_transform.1} parent=11 // pred_region
          %s253 = ssub.s32 256, 256
          %254 = vsyncadd [#allocation5], %s253
          %s255 = sshll.u32 [#allocation4], 4
          %s256 = int_to_ptr.vmem [resolvable:$true] %s255
          %261 = dma.hbm_to_vmem [thread:$0]  %s1, 256, %s256, [#allocation5], 128, 128, 8
        $region16: #{dft_transform.1} parent=11 // pred_fallthru
          _
        // Predicated region
        $region17: #{dft_transform.1} parent=11 // pred_check
          %p262 = pneg %p88
        $region18: #{dft_transform.1} parent=11 // pred_check_branch
          %264 = sbr.rel (%p262) target = $region20
        $region19: #{dft_transform.1} parent=11 // pred_region
          %s266 = ssub.s32 256, 256
          %267 = vsyncadd [#allocation5], %s266
          %s268 = sshll.u32 [#allocation6], 4
          %s269 = int_to_ptr.vmem [resolvable:$true] %s268
          %274 = dma.hbm_to_vmem [thread:$0]  %s2, 256, %s269, [#allocation5], 128, 128, 8
        $region20: #{dft_transform.1} parent=11 // pred_fallthru
          _
        // Predicated region
        $region21: #{dft_transform.1} parent=11 // pred_check
          %p275 = pneg %p109
        $region22: #{dft_transform.1} parent=11 // pred_check_branch
          %277 = sbr.rel (%p275) target = $region24
        $region23: #{dft_transform.1} parent=11 // pred_region
          %s279 = ssub.s32 256, 256
          %280 = vsyncadd [#allocation8], %s279
          %s281 = sshll.u32 [#allocation7], 4
          %s282 = int_to_ptr.vmem [resolvable:$true] %s281
          %287 = dma.hbm_to_vmem [thread:$0]  %s3, 256, %s282, [#allocation8], 128, 128, 8
        $region24: #{dft_transform.1} parent=11 // pred_fallthru
          _
        // Predicated region
        $region25: #{dft_transform.1} parent=11 // pred_check
          %p288 = pneg %p130
        $region26: #{dft_transform.1} parent=11 // pred_check_branch
          %290 = sbr.rel (%p288) target = $region28
        $region27: #{dft_transform.1} parent=11 // pred_region
          _
        $region28: #{dft_transform.1} parent=11 // pred_fallthru
          _
      $region12: #{dft_transform.1} parent=5 // pred_fallthru
        _
      %p291 = scmp.lt.s32.totalorder %s20, 2
      // Predicated region
      $region29: #{dft_transform.1} parent=5 // pred_check
        %p292 = pneg %p291
      $region30: #{dft_transform.1} parent=5 // pred_check_branch
        %294 = sbr.rel (%p292) target = $region32
      $region31: #{dft_transform.1} parent=5 // pred_region
        // Predicated region
        $region33: #{dft_transform.1} parent=31 // pred_check
          %p295 = pneg %p40
        $region34: #{dft_transform.1} parent=31 // pred_check_branch
          %297 = sbr.rel (%p295) target = $region36
        $region35: #{dft_transform.1} parent=31 // pred_region
          %s298 = sand.u32 %s30, 1
          %s299 = scalar_lea.sflag [#allocation3], %s298
          %s300 = sand.u32 %s30, 1
          %s301 = smul.addr %s300, 64
          %s302 = scalar_lea.vmem [#allocation2], %s301
          %s303 = smul.u32 8, %s20
          %s305 = ssub.s32 1024, 1024
          %306 = vsyncadd %s299, %s305
          %s307 = smul.addr %s303, 128
          %s308 = scalar_lea.hbm %s0, %s307
          %s309 = sshll.u32 %s302, 4
          %s310 = int_to_ptr.vmem [resolvable:$true] %s309
          %315 = dma.hbm_to_vmem [thread:$0]  %s308, 1024, %s310, %s299, 128, 128, 8
        $region36: #{dft_transform.1} parent=31 // pred_fallthru
          _
      $region32: #{dft_transform.1} parent=5 // pred_fallthru
        _
      %p316 = scmp.le.s32.totalorder 1, %s20
      %p317 = scmp.lt.s32.totalorder %s20, 3
      %p318 = pnand %p316, %p317
      %p319 = pneg %p318
      // Predicated region
      $region37: #{dft_transform.1} parent=5 // pred_check
        _
      $region38: #{dft_transform.1} parent=5 // pred_check_branch
        %321 = sbr.rel (%p318) target = $region40
      $region39: #{dft_transform.1} parent=5 // pred_region
        %s322 = ssub.s32 %s20, 1
        %s323 = sand.u32 %s33, 1
        %s324 = scalar_lea.sflag [#allocation3], %s323
        %s325 = sand.u32 %s33, 1
        %s326 = smul.addr %s325, 64
        %s327 = scalar_lea.vmem [#allocation2], %s326
        // Predicated region
        $region41: #{dft_transform.1} parent=39 // pred_check
          %p328 = pneg %p46
        $region42: #{dft_transform.1} parent=39 // pred_check_branch
          %330 = sbr.rel (%p328) target = $region44
        $region43: #{dft_transform.1} parent=39 // pred_region
          %331 = dma.done %s324, 1024
        $region44: #{dft_transform.1} parent=39 // pred_fallthru
          _
        // Predicated region
        $region45: #{dft_transform.1} parent=39 // pred_check
          %p332 = pneg %p67
        $region46: #{dft_transform.1} parent=39 // pred_check_branch
          %334 = sbr.rel (%p332) target = $region48
        $region47: #{dft_transform.1} parent=39 // pred_region
          %335 = dma.done [#allocation5], 256
        $region48: #{dft_transform.1} parent=39 // pred_fallthru
          _
        // Predicated region
        $region49: #{dft_transform.1} parent=39 // pred_check
          %p336 = pneg %p88
        $region50: #{dft_transform.1} parent=39 // pred_check_branch
          %338 = sbr.rel (%p336) target = $region52
        $region51: #{dft_transform.1} parent=39 // pred_region
          %339 = dma.done [#allocation5], 256
        $region52: #{dft_transform.1} parent=39 // pred_fallthru
          _
        // Predicated region
        $region53: #{dft_transform.1} parent=39 // pred_check
          %p340 = pneg %p109
        $region54: #{dft_transform.1} parent=39 // pred_check_branch
          %342 = sbr.rel (%p340) target = $region56
        $region55: #{dft_transform.1} parent=39 // pred_region
          %343 = dma.done [#allocation8], 256
        $region56: #{dft_transform.1} parent=39 // pred_fallthru
          _
        %s344 = sand.u32 %s33, 1
        %s345 = scalar_lea.sflag [#allocation3], %s344
        %s346 = sand.u32 %s33, 1
        %s347 = smul.addr %s346, 64
        %s348 = scalar_lea.vmem [#allocation2], %s347
        %p349 = pneg %p46
        %p350 = pneg %p43
        %p351 = pneg %p67
        %p352 = pneg %p64
        %p353 = pneg %p88
        %p354 = pneg %p85
        %p355 = pneg %p109
        %p356 = pneg %p106
        %p357 = pneg %p130
        %p358 = pneg %p127
        %p359 = pneg %p156
        %p360 = pneg %p153
        %s361 = smul.u32 4, %s25
        %p362 = scmp.lt.s32.totalorder %s361, 7
        %s363 = scalar_select %p362, %s361, 7
        %s364 = smul.addr %s363, 2
        %s365 = smul.addr %s364, 8
        %s366 = scalar_lea.vmem %s5, %s365
        %p367 = pneg %p182
        %p368 = pneg %p179
        %s369 = smul.u32 4, %s25
        %p370 = scmp.lt.s32.totalorder %s369, 7
        %s371 = scalar_select %p370, %s369, 7
        %s372 = smul.addr %s371, 2
        %s373 = smul.addr %s372, 8
        %s374 = scalar_lea.vmem %s6, %s373
        %p375 = pneg %p208
        %p376 = pneg %p205
        %s377 = smul.u32 4, %s25
        %p378 = scmp.lt.s32.totalorder %s377, 7
        %s379 = scalar_select %p378, %s377, 7
        %s380 = smul.addr %s379, 2
        %s381 = smul.addr %s380, 8
        %s382 = scalar_lea.vmem %s7, %s381
        %p383 = pneg %p234
        %p384 = pneg %p231
        %s385 = smul.u32 4, %s25
        %p386 = scmp.lt.s32.totalorder %s385, 7
        %s387 = scalar_select %p386, %s385, 7
        %s388 = smul.addr %s387, 2
        %s389 = smul.addr %s388, 8
        %s390 = scalar_lea.vmem %s8, %s389
        %s391 = smul.u32 8, %s25
        %s392 = smul.u32 4, %s25
        %p393 = scmp.lt.s32.totalorder %s392, 7
        %s394 = scalar_select %p393, %s392, 7
        %s395 = smul.addr %s394, 2
        %s396 = smul.addr %s395, 8
        %s397 = scalar_lea.vmem %s5, %s396
        %s398 = smul.u32 4, %s25
        %s399 = smul.u32 4, %s25
        %p400 = scmp.lt.s32.totalorder %s399, 7
        %s401 = scalar_select %p400, %s399, 7
        %s402 = smul.addr %s401, 2
        %s403 = smul.addr %s402, 8
        %s404 = scalar_lea.vmem %s6, %s403
        %s405 = smul.u32 4, %s25
        %s406 = smul.u32 4, %s25
        %p407 = scmp.lt.s32.totalorder %s406, 7
        %s408 = scalar_select %p407, %s406, 7
        %s409 = smul.addr %s408, 2
        %s410 = smul.addr %s409, 8
        %s411 = scalar_lea.vmem %s7, %s410
        %s412 = smul.u32 4, %s25
        %s413 = smul.u32 4, %s25
        %p414 = scmp.lt.s32.totalorder %s413, 7
        %s415 = scalar_select %p414, %s413, 7
        %s416 = smul.addr %s415, 2
        %s417 = smul.addr %s416, 8
        %s418 = scalar_lea.vmem %s8, %s417
        %s419 = smul.u32 4, %s25
        %v420 = vld [vmem:[#allocation4] sm:$0xff]
        %v421 = vld [vmem:[#allocation4 + $0x8] sm:$0xff]
        %v422 = vld [vmem:[#allocation6] sm:$0xff]
        %v423 = vld [vmem:[#allocation6 + $0x8] sm:$0xff]
        %v424 = vld [vmem:[%s327] sm:$0xff]
        %v425 = vld [vmem:[%s327 + $0x8] sm:$0xff]
        %v426 = vld [vmem:[%s327 + $0x10] sm:$0xff]
        %v427 = vld [vmem:[%s327 + $0x18] sm:$0xff]
        %v428 = vld [vmem:[%s327 + $0x20] sm:$0xff]
        %v429 = vld [vmem:[%s327 + $0x28] sm:$0xff]
        %v430 = vld [vmem:[%s327 + $0x30] sm:$0xff]
        %v431 = vld [vmem:[%s327 + $0x38] sm:$0xff]
        %v432 = vld [vmem:[#allocation7] sm:$0xff]
        %v433 = vld [vmem:[#allocation7 + $0x8] sm:$0xff]
        %vm434 = vcmask 130048
        %v436 = vsel %vm434, %v424, 0
        %v439 = vsel %vm434, %v425, 0
        %v442 = vsel %vm434, %v426, 0
        %v445 = vsel %vm434, %v427, 0
        %v448 = vsel %vm434, %v428, 0
        %v451 = vsel %vm434, %v429, 0
        %v454 = vsel %vm434, %v430, 0
        %v457 = vsel %vm434, %v431, 0
        %459 = vmatprep.subr.mxu0 0.0
        %460 = vmatpush1.msra.mxu0 %v432
        %461 = vmatprep.subr.mxu0 0.0
        %462 = vmatpush1.msra.mxu0 %v433
        %463 = vmatprep.subr.mxu0 0.0
        %464 = vmatpush1.msra.mxu0 0.0
        %465 = vmatprep.subr.mxu0 0.0
        %466 = vmatpush1.msra.mxu0 0.0
        %467 = vmatprep.subr.mxu0 0.0
        %468 = vmatpush1.msra.mxu0 0.0
        %469 = vmatprep.subr.mxu0 0.0
        %470 = vmatpush1.msra.mxu0 0.0
        %471 = vmatprep.subr.mxu0 0.0
        %472 = vmatpush1.msra.mxu0 0.0
        %473 = vmatprep.subr.mxu0 0.0
        %474 = vmatpush1.msra.mxu0 0.0
        %475 = vmatprep.subr.mxu0 0.0
        %476 = vmatpush1.msra.mxu0 0.0
        %477 = vmatprep.subr.mxu0 0.0
        %478 = vmatpush1.msra.mxu0 0.0
        %479 = vmatprep.subr.mxu0 0.0
        %480 = vmatpush1.msra.mxu0 0.0
        %481 = vmatprep.subr.mxu0 0.0
        %482 = vmatpush1.msra.mxu0 0.0
        %483 = vmatprep.subr.mxu0 0.0
        %484 = vmatpush1.msra.mxu0 0.0
        %485 = vmatprep.subr.mxu0 0.0
        %486 = vmatpush1.msra.mxu0 0.0
        %487 = vmatprep.subr.mxu0 0.0
        %488 = vmatpush1.msra.mxu0 0.0
        %489 = vmatprep.subr.mxu0 0.0
        %490 = vmatpush1.msra.mxu0 0.0
        %491 = vmatprep.subr.mxu0 0.0
        %492 = vmatpush1.msra.mxu0 0.0
        %493 = vmatprep.subr.mxu0 0.0
        %494 = vmatpush1.msra.mxu0 0.0
        %495 = vmatprep.subr.mxu0 0.0
        %496 = vmatpush1.msra.mxu0 0.0
        %497 = vmatprep.subr.mxu0 0.0
        %498 = vmatpush1.msra.mxu0 0.0
        %499 = vmatprep.subr.mxu0 0.0
        %500 = vmatpush1.msra.mxu0 0.0
        %501 = vmatprep.subr.mxu0 0.0
        %502 = vmatpush1.msra.mxu0 0.0
        %503 = vmatprep.subr.mxu0 0.0
        %504 = vmatpush1.msra.mxu0 0.0
        %505 = vmatprep.subr.mxu0 0.0
        %506 = vmatpush1.msra.mxu0 0.0
        %507 = vmatprep.subr.mxu0 0.0
        %508 = vmatpush1.msra.mxu0 0.0
        %509 = vmatprep.subr.mxu0 0.0
        %510 = vmatpush1.msra.mxu0 0.0
        %511 = vmatprep.subr.mxu0 0.0
        %512 = vmatpush1.msra.mxu0 0.0
        %513 = vmatprep.subr.mxu0 0.0
        %514 = vmatpush1.msra.mxu0 0.0
        %515 = vmatprep.subr.mxu0 0.0
        %516 = vmatpush1.msra.mxu0 0.0
        %517 = vmatprep.subr.mxu0 0.0
        %518 = vmatpush1.msra.mxu0 0.0
        %519 = vmatprep.subr.mxu0 0.0
        %520 = vmatpush1.msra.mxu0 0.0
        %521 = vmatprep.subr.mxu0 0.0
        %522 = vmatpush1.msra.mxu0 0.0
        %523 = vmatprep.mubr.f32.mxu0 0.0
        %524 = vmatmul.mubr.f32.gmra.mrb[0].mxu0 %v436
        %v525 = vpop.f32.mrb[0].mxu0
        %v526 = vadd.f32 0.0, %v525
        %v527 = vpop.f32.mrb[0].mxu0
        %528 = vmatprep.mubr.f32.mxu0 0.0
        %529 = vmatmul.mubr.f32.gmra.mrb[0].mxu0 %v439
        %v530 = vpop.f32.mrb[0].mxu0
        %v531 = vadd.f32 0.0, %v530
        %v532 = vpop.f32.mrb[0].mxu0
        %533 = vmatprep.mubr.f32.mxu0 0.0
        %534 = vmatmul.mubr.f32.gmra.mrb[0].mxu0 %v442
        %v535 = vpop.f32.mrb[0].mxu0
        %v536 = vadd.f32 0.0, %v535
        %v537 = vpop.f32.mrb[0].mxu0
        %538 = vmatprep.mubr.f32.mxu0 0.0
        %539 = vmatmul.mubr.f32.gmra.mrb[0].mxu0 %v445
        %v540 = vpop.f32.mrb[0].mxu0
        %v541 = vadd.f32 0.0, %v540
        %v542 = vpop.f32.mrb[0].mxu0
        %543 = vmatprep.mubr.f32.mxu0 0.0
        %544 = vmatmul.mubr.f32.gmra.mrb[0].mxu0 %v448
        %v545 = vpop.f32.mrb[0].mxu0
        %v546 = vadd.f32 0.0, %v545
        %v547 = vpop.f32.mrb[0].mxu0
        %548 = vmatprep.mubr.f32.mxu0 0.0
        %549 = vmatmul.mubr.f32.gmra.mrb[0].mxu0 %v451
        %v550 = vpop.f32.mrb[0].mxu0
        %v551 = vadd.f32 0.0, %v550
        %v552 = vpop.f32.mrb[0].mxu0
        %553 = vmatprep.mubr.f32.mxu0 0.0
        %554 = vmatmul.mubr.f32.gmra.mrb[0].mxu0 %v454
        %v555 = vpop.f32.mrb[0].mxu0
        %v556 = vadd.f32 0.0, %v555
        %v557 = vpop.f32.mrb[0].mxu0
        %558 = vmatprep.mubr.f32.mxu0 0.0
        %559 = vmatmul.mubr.f32.gmra.mrb[0].mxu0 %v457
        %v560 = vpop.f32.mrb[0].mxu0
        %v561 = vadd.f32 0.0, %v560
        %v562 = vpop.f32.mrb[0].mxu0
        %563 = vdwg.mxu0
        %v564 = vld [vmem:[%s4] sm:$0xff]
        %v565 = vld [vmem:[%s4 + $0x8] sm:$0xff]
        %566 = vmatprep.subr.mxu0 0.0
        %567 = vmatpush1.msra.mxu0 %v564
        %568 = vmatprep.subr.mxu0 0.0
        %569 = vmatpush1.msra.mxu0 %v565
        %570 = vmatprep.subr.mxu0 0.0
        %571 = vmatpush1.msra.mxu0 0.0
        %572 = vmatprep.subr.mxu0 0.0
        %573 = vmatpush1.msra.mxu0 0.0
        %574 = vmatprep.subr.mxu0 0.0
        %575 = vmatpush1.msra.mxu0 0.0
        %576 = vmatprep.subr.mxu0 0.0
        %577 = vmatpush1.msra.mxu0 0.0
        %578 = vmatprep.subr.mxu0 0.0
        %579 = vmatpush1.msra.mxu0 0.0
        %580 = vmatprep.subr.mxu0 0.0
        %581 = vmatpush1.msra.mxu0 0.0
        %582 = vmatprep.subr.mxu0 0.0
        %583 = vmatpush1.msra.mxu0 0.0
        %584 = vmatprep.subr.mxu0 0.0
        %585 = vmatpush1.msra.mxu0 0.0
        %586 = vmatprep.subr.mxu0 0.0
        %587 = vmatpush1.msra.mxu0 0.0
        %588 = vmatprep.subr.mxu0 0.0
        %589 = vmatpush1.msra.mxu0 0.0
        %590 = vmatprep.subr.mxu0 0.0
        %591 = vmatpush1.msra.mxu0 0.0
        %592 = vmatprep.subr.mxu0 0.0
        %593 = vmatpush1.msra.mxu0 0.0
        %594 = vmatprep.subr.mxu0 0.0
        %595 = vmatpush1.msra.mxu0 0.0
        %596 = vmatprep.subr.mxu0 0.0
        %597 = vmatpush1.msra.mxu0 0.0
        %598 = vmatprep.subr.mxu0 0.0
        %599 = vmatpush1.msra.mxu0 0.0
        %600 = vmatprep.subr.mxu0 0.0
        %601 = vmatpush1.msra.mxu0 0.0
        %602 = vmatprep.subr.mxu0 0.0
        %603 = vmatpush1.msra.mxu0 0.0
        %604 = vmatprep.subr.mxu0 0.0
        %605 = vmatpush1.msra.mxu0 0.0
        %606 = vmatprep.subr.mxu0 0.0
        %607 = vmatpush1.msra.mxu0 0.0
        %608 = vmatprep.subr.mxu0 0.0
        %609 = vmatpush1.msra.mxu0 0.0
        %610 = vmatprep.subr.mxu0 0.0
        %611 = vmatpush1.msra.mxu0 0.0
        %612 = vmatprep.subr.mxu0 0.0
        %613 = vmatpush1.msra.mxu0 0.0
        %614 = vmatprep.subr.mxu0 0.0
        %615 = vmatpush1.msra.mxu0 0.0
        %616 = vmatprep.subr.mxu0 0.0
        %617 = vmatpush1.msra.mxu0 0.0
        %618 = vmatprep.subr.mxu0 0.0
        %619 = vmatpush1.msra.mxu0 0.0
        %620 = vmatprep.subr.mxu0 0.0
        %621 = vmatpush1.msra.mxu0 0.0
        %622 = vmatprep.subr.mxu0 0.0
        %623 = vmatpush1.msra.mxu0 0.0
        %624 = vmatprep.subr.mxu0 0.0
        %625 = vmatpush1.msra.mxu0 0.0
        %626 = vmatprep.subr.mxu0 0.0
        %627 = vmatpush1.msra.mxu0 0.0
        %628 = vmatprep.subr.mxu0 0.0
        %629 = vmatpush1.msra.mxu0 0.0
        %630 = vmatprep.mubr.f32.mxu0 0.0
        %631 = vmatmul.mubr.f32.gmra.mrb[0].mxu0 %v436
        %v632 = vpop.f32.mrb[0].mxu0
        %v633 = vadd.f32 0.0, %v632
        %v634 = vpop.f32.mrb[0].mxu0
        %635 = vmatprep.mubr.f32.mxu0 0.0
        %636 = vmatmul.mubr.f32.gmra.mrb[0].mxu0 %v439
        %v637 = vpop.f32.mrb[0].mxu0
        %v638 = vadd.f32 0.0, %v637
        %v639 = vpop.f32.mrb[0].mxu0
        %640 = vmatprep.mubr.f32.mxu0 0.0
        %641 = vmatmul.mubr.f32.gmra.mrb[0].mxu0 %v442
        %v642 = vpop.f32.mrb[0].mxu0
        %v643 = vadd.f32 0.0, %v642
        %v644 = vpop.f32.mrb[0].mxu0
        %645 = vmatprep.mubr.f32.mxu0 0.0
        %646 = vmatmul.mubr.f32.gmra.mrb[0].mxu0 %v445
        %v647 = vpop.f32.mrb[0].mxu0
        %v648 = vadd.f32 0.0, %v647
        %v649 = vpop.f32.mrb[0].mxu0
        %650 = vmatprep.mubr.f32.mxu0 0.0
        %651 = vmatmul.mubr.f32.gmra.mrb[0].mxu0 %v448
        %v652 = vpop.f32.mrb[0].mxu0
        %v653 = vadd.f32 0.0, %v652
        %v654 = vpop.f32.mrb[0].mxu0
        %655 = vmatprep.mubr.f32.mxu0 0.0
        %656 = vmatmul.mubr.f32.gmra.mrb[0].mxu0 %v451
        %v657 = vpop.f32.mrb[0].mxu0
        %v658 = vadd.f32 0.0, %v657
        %v659 = vpop.f32.mrb[0].mxu0
        %660 = vmatprep.mubr.f32.mxu0 0.0
        %661 = vmatmul.mubr.f32.gmra.mrb[0].mxu0 %v454
        %v662 = vpop.f32.mrb[0].mxu0
        %v663 = vadd.f32 0.0, %v662
        %v664 = vpop.f32.mrb[0].mxu0
        %665 = vmatprep.mubr.f32.mxu0 0.0
        %666 = vmatmul.mubr.f32.gmra.mrb[0].mxu0 %v457
        %v667 = vpop.f32.mrb[0].mxu0
        %v668 = vadd.f32 0.0, %v667
        %v669 = vpop.f32.mrb[0].mxu0
        %670 = vdwg.mxu0
        %v672 = vsel %vm434, %v420, 0
        %v675 = vsel %vm434, %v421, 0
        %677 = vmatprep.subr.mxu0 0.0
        %678 = vmatpush1.msra.mxu0 %v526
        %679 = vmatprep.subr.mxu0 0.0
        %680 = vmatpush1.msra.mxu0 %v531
        %681 = vmatprep.subr.mxu0 0.0
        %682 = vmatpush1.msra.mxu0 0.0
        %683 = vmatprep.subr.mxu0 0.0
        %684 = vmatpush1.msra.mxu0 0.0
        %685 = vmatprep.subr.mxu0 0.0
        %686 = vmatpush1.msra.mxu0 0.0
        %687 = vmatprep.subr.mxu0 0.0
        %688 = vmatpush1.msra.mxu0 0.0
        %689 = vmatprep.subr.mxu0 0.0
        %690 = vmatpush1.msra.mxu0 0.0
        %691 = vmatprep.subr.mxu0 0.0
        %692 = vmatpush1.msra.mxu0 0.0
        %693 = vmatprep.subr.mxu0 0.0
        %694 = vmatpush1.msra.mxu0 0.0
        %695 = vmatprep.subr.mxu0 0.0
        %696 = vmatpush1.msra.mxu0 0.0
        %697 = vmatprep.subr.mxu0 0.0
        %698 = vmatpush1.msra.mxu0 0.0
        %699 = vmatprep.subr.mxu0 0.0
        %700 = vmatpush1.msra.mxu0 0.0
        %701 = vmatprep.subr.mxu0 0.0
        %702 = vmatpush1.msra.mxu0 0.0
        %703 = vmatprep.subr.mxu0 0.0
        %704 = vmatpush1.msra.mxu0 0.0
        %705 = vmatprep.subr.mxu0 0.0
        %706 = vmatpush1.msra.mxu0 0.0
        %707 = vmatprep.subr.mxu0 0.0
        %708 = vmatpush1.msra.mxu0 0.0
        %709 = vmatprep.subr.mxu0 0.0
        %710 = vmatpush1.msra.mxu0 0.0
        %711 = vmatprep.subr.mxu0 0.0
        %712 = vmatpush1.msra.mxu0 0.0
        %713 = vmatprep.subr.mxu0 0.0
        %714 = vmatpush1.msra.mxu0 0.0
        %715 = vmatprep.subr.mxu0 0.0
        %716 = vmatpush1.msra.mxu0 0.0
        %717 = vmatprep.subr.mxu0 0.0
        %718 = vmatpush1.msra.mxu0 0.0
        %719 = vmatprep.subr.mxu0 0.0
        %720 = vmatpush1.msra.mxu0 0.0
        %721 = vmatprep.subr.mxu0 0.0
        %722 = vmatpush1.msra.mxu0 0.0
        %723 = vmatprep.subr.mxu0 0.0
        %724 = vmatpush1.msra.mxu0 0.0
        %725 = vmatprep.subr.mxu0 0.0
        %726 = vmatpush1.msra.mxu0 0.0
        %727 = vmatprep.subr.mxu0 0.0
        %728 = vmatpush1.msra.mxu0 0.0
        %729 = vmatprep.subr.mxu0 0.0
        %730 = vmatpush1.msra.mxu0 0.0
        %731 = vmatprep.subr.mxu0 0.0
        %732 = vmatpush1.msra.mxu0 0.0
        %733 = vmatprep.subr.mxu0 0.0
        %734 = vmatpush1.msra.mxu0 0.0
        %735 = vmatprep.subr.mxu0 0.0
        %736 = vmatpush1.msra.mxu0 0.0
        %737 = vmatprep.subr.mxu0 0.0
        %738 = vmatpush1.msra.mxu0 0.0
        %739 = vmatprep.subr.mxu0 0.0
        %740 = vmatpush1.msra.mxu0 0.0
        %741 = vmatprep.mubr.f32.mxu0 0.0
        %742 = vmatmul.mubr.f32.gmra.mrb[0].mxu0 %v672
        %v743 = vpop.f32.mrb[0].mxu0
        %v744 = vadd.f32 0.0, %v743
        %v745 = vpop.f32.mrb[0].mxu0
        %746 = vmatprep.mubr.f32.mxu0 0.0
        %747 = vmatmul.mubr.f32.gmra.mrb[0].mxu0 %v675
        %v748 = vpop.f32.mrb[0].mxu0
        %v749 = vadd.f32 0.0, %v748
        %v750 = vpop.f32.mrb[0].mxu0
        %751 = vdwg.mxu0
        %v753 = vsel %vm434, %v422, 0
        %v756 = vsel %vm434, %v423, 0
        %758 = vmatprep.subr.mxu0 0.0
        %759 = vmatpush1.msra.mxu0 %v633
        %760 = vmatprep.subr.mxu0 0.0
        %761 = vmatpush1.msra.mxu0 %v638
        %762 = vmatprep.subr.mxu0 0.0
        %763 = vmatpush1.msra.mxu0 0.0
        %764 = vmatprep.subr.mxu0 0.0
        %765 = vmatpush1.msra.mxu0 0.0
        %766 = vmatprep.subr.mxu0 0.0
        %767 = vmatpush1.msra.mxu0 0.0
        %768 = vmatprep.subr.mxu0 0.0
        %769 = vmatpush1.msra.mxu0 0.0
        %770 = vmatprep.subr.mxu0 0.0
        %771 = vmatpush1.msra.mxu0 0.0
        %772 = vmatprep.subr.mxu0 0.0
        %773 = vmatpush1.msra.mxu0 0.0
        %774 = vmatprep.subr.mxu0 0.0
        %775 = vmatpush1.msra.mxu0 0.0
        %776 = vmatprep.subr.mxu0 0.0
        %777 = vmatpush1.msra.mxu0 0.0
        %778 = vmatprep.subr.mxu0 0.0
        %779 = vmatpush1.msra.mxu0 0.0
        %780 = vmatprep.subr.mxu0 0.0
        %781 = vmatpush1.msra.mxu0 0.0
        %782 = vmatprep.subr.mxu0 0.0
        %783 = vmatpush1.msra.mxu0 0.0
        %784 = vmatprep.subr.mxu0 0.0
        %785 = vmatpush1.msra.mxu0 0.0
        %786 = vmatprep.subr.mxu0 0.0
        %787 = vmatpush1.msra.mxu0 0.0
        %788 = vmatprep.subr.mxu0 0.0
        %789 = vmatpush1.msra.mxu0 0.0
        %790 = vmatprep.subr.mxu0 0.0
        %791 = vmatpush1.msra.mxu0 0.0
        %792 = vmatprep.subr.mxu0 0.0
        %793 = vmatpush1.msra.mxu0 0.0
        %794 = vmatprep.subr.mxu0 0.0
        %795 = vmatpush1.msra.mxu0 0.0
        %796 = vmatprep.subr.mxu0 0.0
        %797 = vmatpush1.msra.mxu0 0.0
        %798 = vmatprep.subr.mxu0 0.0
        %799 = vmatpush1.msra.mxu0 0.0
        %800 = vmatprep.subr.mxu0 0.0
        %801 = vmatpush1.msra.mxu0 0.0
        %802 = vmatprep.subr.mxu0 0.0
        %803 = vmatpush1.msra.mxu0 0.0
        %804 = vmatprep.subr.mxu0 0.0
        %805 = vmatpush1.msra.mxu0 0.0
        %806 = vmatprep.subr.mxu0 0.0
        %807 = vmatpush1.msra.mxu0 0.0
        %808 = vmatprep.subr.mxu0 0.0
        %809 = vmatpush1.msra.mxu0 0.0
        %810 = vmatprep.subr.mxu0 0.0
        %811 = vmatpush1.msra.mxu0 0.0
        %812 = vmatprep.subr.mxu0 0.0
        %813 = vmatpush1.msra.mxu0 0.0
        %814 = vmatprep.subr.mxu0 0.0
        %815 = vmatpush1.msra.mxu0 0.0
        %816 = vmatprep.subr.mxu0 0.0
        %817 = vmatpush1.msra.mxu0 0.0
        %818 = vmatprep.subr.mxu0 0.0
        %819 = vmatpush1.msra.mxu0 0.0
        %820 = vmatprep.subr.mxu0 0.0
        %821 = vmatpush1.msra.mxu0 0.0
        %822 = vmatprep.mubr.f32.mxu0 0.0
        %823 = vmatmul.mubr.f32.gmra.mrb[0].mxu0 %v753
        %v824 = vpop.f32.mrb[0].mxu0
        %v825 = vadd.f32 0.0, %v824
        %v826 = vpop.f32.mrb[0].mxu0
        %827 = vmatprep.mubr.f32.mxu0 0.0
        %828 = vmatmul.mubr.f32.gmra.mrb[0].mxu0 %v756
        %v829 = vpop.f32.mrb[0].mxu0
        %v830 = vadd.f32 0.0, %v829
        %v831 = vpop.f32.mrb[0].mxu0
        %832 = vdwg.mxu0
        %v833 = vsub.f32 %v744, %v825
        %v834 = vsub.f32 %v749, %v830
        %v835 = vmul.f32 %v833, 0.00390625
        %v836 = vmul.f32 %v834, 0.00390625
        %837 = vmatprep.subr.mxu0 0.0
        %838 = vmatpush1.msra.mxu0 %v526
        %839 = vmatprep.subr.mxu0 0.0
        %840 = vmatpush1.msra.mxu0 %v531
        %841 = vmatprep.subr.mxu0 0.0
        %842 = vmatpush1.msra.mxu0 0.0
        %843 = vmatprep.subr.mxu0 0.0
        %844 = vmatpush1.msra.mxu0 0.0
        %845 = vmatprep.subr.mxu0 0.0
        %846 = vmatpush1.msra.mxu0 0.0
        %847 = vmatprep.subr.mxu0 0.0
        %848 = vmatpush1.msra.mxu0 0.0
        %849 = vmatprep.subr.mxu0 0.0
        %850 = vmatpush1.msra.mxu0 0.0
        %851 = vmatprep.subr.mxu0 0.0
        %852 = vmatpush1.msra.mxu0 0.0
        %853 = vmatprep.subr.mxu0 0.0
        %854 = vmatpush1.msra.mxu0 0.0
        %855 = vmatprep.subr.mxu0 0.0
        %856 = vmatpush1.msra.mxu0 0.0
        %857 = vmatprep.subr.mxu0 0.0
        %858 = vmatpush1.msra.mxu0 0.0
        %859 = vmatprep.subr.mxu0 0.0
        %860 = vmatpush1.msra.mxu0 0.0
        %861 = vmatprep.subr.mxu0 0.0
        %862 = vmatpush1.msra.mxu0 0.0
        %863 = vmatprep.subr.mxu0 0.0
        %864 = vmatpush1.msra.mxu0 0.0
        %865 = vmatprep.subr.mxu0 0.0
        %866 = vmatpush1.msra.mxu0 0.0
        %867 = vmatprep.subr.mxu0 0.0
        %868 = vmatpush1.msra.mxu0 0.0
        %869 = vmatprep.subr.mxu0 0.0
        %870 = vmatpush1.msra.mxu0 0.0
        %871 = vmatprep.subr.mxu0 0.0
        %872 = vmatpush1.msra.mxu0 0.0
        %873 = vmatprep.subr.mxu0 0.0
        %874 = vmatpush1.msra.mxu0 0.0
        %875 = vmatprep.subr.mxu0 0.0
        %876 = vmatpush1.msra.mxu0 0.0
        %877 = vmatprep.subr.mxu0 0.0
        %878 = vmatpush1.msra.mxu0 0.0
        %879 = vmatprep.subr.mxu0 0.0
        %880 = vmatpush1.msra.mxu0 0.0
        %881 = vmatprep.subr.mxu0 0.0
        %882 = vmatpush1.msra.mxu0 0.0
        %883 = vmatprep.subr.mxu0 0.0
        %884 = vmatpush1.msra.mxu0 0.0
        %885 = vmatprep.subr.mxu0 0.0
        %886 = vmatpush1.msra.mxu0 0.0
        %887 = vmatprep.subr.mxu0 0.0
        %888 = vmatpush1.msra.mxu0 0.0
        %889 = vmatprep.subr.mxu0 0.0
        %890 = vmatpush1.msra.mxu0 0.0
        %891 = vmatprep.subr.mxu0 0.0
        %892 = vmatpush1.msra.mxu0 0.0
        %893 = vmatprep.subr.mxu0 0.0
        %894 = vmatpush1.msra.mxu0 0.0
        %895 = vmatprep.subr.mxu0 0.0
        %896 = vmatpush1.msra.mxu0 0.0
        %897 = vmatprep.subr.mxu0 0.0
        %898 = vmatpush1.msra.mxu0 0.0
        %899 = vmatprep.subr.mxu0 0.0
        %900 = vmatpush1.msra.mxu0 0.0
        %901 = vmatprep.mubr.f32.mxu0 0.0
        %902 = vmatmul.mubr.f32.gmra.mrb[0].mxu0 %v753
        %v903 = vpop.f32.mrb[0].mxu0
        %v904 = vadd.f32 0.0, %v903
        %v905 = vpop.f32.mrb[0].mxu0
        %906 = vmatprep.mubr.f32.mxu0 0.0
        %907 = vmatmul.mubr.f32.gmra.mrb[0].mxu0 %v756
        %v908 = vpop.f32.mrb[0].mxu0
        %v909 = vadd.f32 0.0, %v908
        %v910 = vpop.f32.mrb[0].mxu0
        %911 = vdwg.mxu0
        %912 = vmatprep.subr.mxu0 0.0
        %913 = vmatpush1.msra.mxu0 %v633
        %914 = vmatprep.subr.mxu0 0.0
        %915 = vmatpush1.msra.mxu0 %v638
        %916 = vmatprep.subr.mxu0 0.0
        %917 = vmatpush1.msra.mxu0 0.0
        %918 = vmatprep.subr.mxu0 0.0
        %919 = vmatpush1.msra.mxu0 0.0
        %920 = vmatprep.subr.mxu0 0.0
        %921 = vmatpush1.msra.mxu0 0.0
        %922 = vmatprep.subr.mxu0 0.0
        %923 = vmatpush1.msra.mxu0 0.0
        %924 = vmatprep.subr.mxu0 0.0
        %925 = vmatpush1.msra.mxu0 0.0
        %926 = vmatprep.subr.mxu0 0.0
        %927 = vmatpush1.msra.mxu0 0.0
        %928 = vmatprep.subr.mxu0 0.0
        %929 = vmatpush1.msra.mxu0 0.0
        %930 = vmatprep.subr.mxu0 0.0
        %931 = vmatpush1.msra.mxu0 0.0
        %932 = vmatprep.subr.mxu0 0.0
        %933 = vmatpush1.msra.mxu0 0.0
        %934 = vmatprep.subr.mxu0 0.0
        %935 = vmatpush1.msra.mxu0 0.0
        %936 = vmatprep.subr.mxu0 0.0
        %937 = vmatpush1.msra.mxu0 0.0
        %938 = vmatprep.subr.mxu0 0.0
        %939 = vmatpush1.msra.mxu0 0.0
        %940 = vmatprep.subr.mxu0 0.0
        %941 = vmatpush1.msra.mxu0 0.0
        %942 = vmatprep.subr.mxu0 0.0
        %943 = vmatpush1.msra.mxu0 0.0
        %944 = vmatprep.subr.mxu0 0.0
        %945 = vmatpush1.msra.mxu0 0.0
        %946 = vmatprep.subr.mxu0 0.0
        %947 = vmatpush1.msra.mxu0 0.0
        %948 = vmatprep.subr.mxu0 0.0
        %949 = vmatpush1.msra.mxu0 0.0
        %950 = vmatprep.subr.mxu0 0.0
        %951 = vmatpush1.msra.mxu0 0.0
        %952 = vmatprep.subr.mxu0 0.0
        %953 = vmatpush1.msra.mxu0 0.0
        %954 = vmatprep.subr.mxu0 0.0
        %955 = vmatpush1.msra.mxu0 0.0
        %956 = vmatprep.subr.mxu0 0.0
        %957 = vmatpush1.msra.mxu0 0.0
        %958 = vmatprep.subr.mxu0 0.0
        %959 = vmatpush1.msra.mxu0 0.0
        %960 = vmatprep.subr.mxu0 0.0
        %961 = vmatpush1.msra.mxu0 0.0
        %962 = vmatprep.subr.mxu0 0.0
        %963 = vmatpush1.msra.mxu0 0.0
        %964 = vmatprep.subr.mxu0 0.0
        %965 = vmatpush1.msra.mxu0 0.0
        %966 = vmatprep.subr.mxu0 0.0
        %967 = vmatpush1.msra.mxu0 0.0
        %968 = vmatprep.subr.mxu0 0.0
        %969 = vmatpush1.msra.mxu0 0.0
        %970 = vmatprep.subr.mxu0 0.0
        %971 = vmatpush1.msra.mxu0 0.0
        %972 = vmatprep.subr.mxu0 0.0
        %973 = vmatpush1.msra.mxu0 0.0
        %974 = vmatprep.subr.mxu0 0.0
        %975 = vmatpush1.msra.mxu0 0.0
        %976 = vmatprep.mubr.f32.mxu0 0.0
        %977 = vmatmul.mubr.f32.gmra.mrb[0].mxu0 %v672
        %v978 = vpop.f32.mrb[0].mxu0
        %v979 = vadd.f32 %v904, %v978
        %v980 = vpop.f32.mrb[0].mxu0
        %981 = vmatprep.mubr.f32.mxu0 0.0
        %982 = vmatmul.mubr.f32.gmra.mrb[0].mxu0 %v675
        %v983 = vpop.f32.mrb[0].mxu0
        %v984 = vadd.f32 %v909, %v983
        %v985 = vpop.f32.mrb[0].mxu0
        %986 = vdwg.mxu0
        %v987 = vsub.f32 0.0, %v979
        %v988 = vsub.f32 0.0, %v984
        %v989 = vmul.f32 %v987, 0.00390625
        %v990 = vmul.f32 %v988, 0.00390625
        %v991 = vmul.f32 %v835, %v835
        %v992 = vmul.f32 %v836, %v836
        %v993 = vmul.f32 %v989, %v989
        %v994 = vmul.f32 %v990, %v990
        %v995 = vadd.f32 %v991, %v993
        %v996 = vadd.f32 %v992, %v994
        %v997 = vrsqrt.pop %v995
        %v998 = vmul.f32 %v995, %v997
        %vm999 = vcmp.eq.f32.partialorder %v995, inf
        %v1000 = vsel %vm999, %v995, %v998
        %vm1001 = vcmp.eq.f32.partialorder %v995, 0.0
        %v1002 = vand.u32 %v995, 2147483648
        %v1003 = vsel %vm1001, %v1002, %v1000
        %v1004 = vrsqrt.pop %v996
        %v1005 = vmul.f32 %v996, %v1004
        %vm1006 = vcmp.eq.f32.partialorder %v996, inf
        %v1007 = vsel %vm1006, %v996, %v1005
        %vm1008 = vcmp.eq.f32.partialorder %v996, 0.0
        %v1009 = vand.u32 %v996, 2147483648
        %v1010 = vsel %vm1008, %v1009, %v1007
        %vm1011 = vcmask 72704
        %1012 = vst.msk [vmem:[%s397] sm:$0xff] %vm1011, %v835
        %1013 = vst.msk [vmem:[%s397 + $0x8] sm:$0xff] %vm1011, %v836
        %1014 = vst.msk [vmem:[%s404] sm:$0xff] %vm1011, %v989
        %1015 = vst.msk [vmem:[%s404 + $0x8] sm:$0xff] %vm1011, %v990
        %1016 = vst.msk [vmem:[%s411] sm:$0xff] %vm1011, %v1003
        %1017 = vst.msk [vmem:[%s411 + $0x8] sm:$0xff] %vm1011, %v1010
        %v1018 = vand.u32 2147483647, %v989
        %v1019 = vand.u32 2147483647, %v990
        %v1020 = vand.u32 2147483647, %v835
        %v1021 = vand.u32 2147483647, %v836
        %v1022 = vrcp.pop %v1020
        %v1023 = vmul.f32 %v1018, %v1022
        %v1024 = vrcp.pop %v1021
        %v1025 = vmul.f32 %v1019, %v1024
        %vm1026 = vcmp.gt.f32.partialorder %v1023, 2.4142137
        %vm1027 = vcmp.gt.f32.partialorder %v1025, 2.4142137
        %vm1028 = vcmp.gt.f32.partialorder %v1023, 0.41421357
        %vm1029 = vcmp.gt.f32.partialorder %v1025, 0.41421357
        %v1030 = vrcp.pop %v1023
        %v1031 = vmul.f32 -1.0, %v1030
        %v1032 = vrcp.pop %v1025
        %v1033 = vmul.f32 -1.0, %v1032
        %v1034 = vsub.f32 %v1023, 1.0
        %v1035 = vsub.f32 %v1025, 1.0
        %v1036 = vadd.f32 %v1023, 1.0
        %v1037 = vadd.f32 %v1025, 1.0
        %v1038 = vrcp.pop %v1036
        %v1039 = vmul.f32 %v1034, %v1038
        %v1040 = vrcp.pop %v1037
        %v1041 = vmul.f32 %v1035, %v1040
        %v1042 = vsel %vm1028, %v1039, %v1023
        %v1043 = vsel %vm1029, %v1041, %v1025
        %v1044 = vsel %vm1026, %v1031, %v1042
        %v1045 = vsel %vm1027, %v1033, %v1043
        %v1046 = vsel %vm1028, 0.7853982, 0.0
        %v1047 = vsel %vm1029, 0.7853982, 0.0
        %v1048 = vsel %vm1026, 1.5707964, %v1046
        %v1049 = vsel %vm1027, 1.5707964, %v1047
        %v1050 = vmul.f32 %v1044, %v1044
        %v1051 = vmul.f32 %v1045, %v1045
        %v1052 = vmul.f32 %v1050, 0.080537446
        %v1053 = vmul.f32 %v1051, 0.080537446
        %v1054 = vsub.f32 %v1052, 0.13877685
        %v1055 = vsub.f32 %v1053, 0.13877685
        %v1056 = vmul.f32 %v1054, %v1050
        %v1057 = vmul.f32 %v1055, %v1051
        %v1058 = vadd.f32 %v1056, 0.19977711
        %v1059 = vadd.f32 %v1057, 0.19977711
        %v1060 = vmul.f32 %v1058, %v1050
        %v1061 = vmul.f32 %v1059, %v1051
        %v1062 = vsub.f32 %v1060, 0.3333295
        %v1063 = vsub.f32 %v1061, 0.3333295
        %v1064 = vmul.f32 %v1062, %v1050
        %v1065 = vmul.f32 %v1063, %v1051
        %v1066 = vmul.f32 %v1064, %v1044
        %v1067 = vmul.f32 %v1065, %v1045
        %v1068 = vadd.f32 %v1066, %v1044
        %v1069 = vadd.f32 %v1067, %v1045
        %v1070 = vadd.f32 %v1048, %v1068
        %v1071 = vadd.f32 %v1049, %v1069
        %vm1072 = vcmp.ge.f32.partialorder %v989, 0.0
        %vm1073 = vcmp.ge.f32.partialorder %v990, 0.0
        %v1074 = vsel %vm1072, 1.0, -1.0
        %v1075 = vsel %vm1073, 1.0, -1.0
        %vm1076 = vcmp.ge.f32.partialorder %v835, 0.0
        %vm1077 = vcmp.ge.f32.partialorder %v836, 0.0
        %v1078 = vmul.f32 %v1074, %v1070
        %v1079 = vmul.f32 %v1075, %v1071
        %v1080 = vsub.f32 3.1415927, %v1070
        %v1081 = vsub.f32 3.1415927, %v1071
        %v1082 = vmul.f32 %v1074, %v1080
        %v1083 = vmul.f32 %v1075, %v1081
        %v1084 = vsel %vm1076, %v1078, %v1082
        %v1085 = vsel %vm1077, %v1079, %v1083
        %vm1086 = vcmp.eq.f32.partialorder %v1003, 0.0
        %vm1087 = vcmp.eq.f32.partialorder %v1010, 0.0
        %v1088 = vsel %vm1086, 0.0, %v1084
        %v1089 = vsel %vm1087, 0.0, %v1085
        %1090 = vst.msk [vmem:[%s418] sm:$0xff] %vm1011, %v1088
        %1091 = vst.msk [vmem:[%s418 + $0x8] sm:$0xff] %vm1011, %v1089
        %1092 = vmatprep.subr.mxu0 0.0
        %1093 = vmatpush1.msra.mxu0 %v536
        %1094 = vmatprep.subr.mxu0 0.0
        %1095 = vmatpush1.msra.mxu0 %v541
        %1096 = vmatprep.subr.mxu0 0.0
        %1097 = vmatpush1.msra.mxu0 0.0
        %1098 = vmatprep.subr.mxu0 0.0
        %1099 = vmatpush1.msra.mxu0 0.0
        %1100 = vmatprep.subr.mxu0 0.0
        %1101 = vmatpush1.msra.mxu0 0.0
        %1102 = vmatprep.subr.mxu0 0.0
        %1103 = vmatpush1.msra.mxu0 0.0
        %1104 = vmatprep.subr.mxu0 0.0
        %1105 = vmatpush1.msra.mxu0 0.0
        %1106 = vmatprep.subr.mxu0 0.0
        %1107 = vmatpush1.msra.mxu0 0.0
        %1108 = vmatprep.subr.mxu0 0.0
        %1109 = vmatpush1.msra.mxu0 0.0
        %1110 = vmatprep.subr.mxu0 0.0
        %1111 = vmatpush1.msra.mxu0 0.0
        %1112 = vmatprep.subr.mxu0 0.0
        %1113 = vmatpush1.msra.mxu0 0.0
        %1114 = vmatprep.subr.mxu0 0.0
        %1115 = vmatpush1.msra.mxu0 0.0
        %1116 = vmatprep.subr.mxu0 0.0
        %1117 = vmatpush1.msra.mxu0 0.0
        %1118 = vmatprep.subr.mxu0 0.0
        %1119 = vmatpush1.msra.mxu0 0.0
        %1120 = vmatprep.subr.mxu0 0.0
        %1121 = vmatpush1.msra.mxu0 0.0
        %1122 = vmatprep.subr.mxu0 0.0
        %1123 = vmatpush1.msra.mxu0 0.0
        %1124 = vmatprep.subr.mxu0 0.0
        %1125 = vmatpush1.msra.mxu0 0.0
        %1126 = vmatprep.subr.mxu0 0.0
        %1127 = vmatpush1.msra.mxu0 0.0
        %1128 = vmatprep.subr.mxu0 0.0
        %1129 = vmatpush1.msra.mxu0 0.0
        %1130 = vmatprep.subr.mxu0 0.0
        %1131 = vmatpush1.msra.mxu0 0.0
        %1132 = vmatprep.subr.mxu0 0.0
        %1133 = vmatpush1.msra.mxu0 0.0
        %1134 = vmatprep.subr.mxu0 0.0
        %1135 = vmatpush1.msra.mxu0 0.0
        %1136 = vmatprep.subr.mxu0 0.0
        %1137 = vmatpush1.msra.mxu0 0.0
        %1138 = vmatprep.subr.mxu0 0.0
        %1139 = vmatpush1.msra.mxu0 0.0
        %1140 = vmatprep.subr.mxu0 0.0
        %1141 = vmatpush1.msra.mxu0 0.0
        %1142 = vmatprep.subr.mxu0 0.0
        %1143 = vmatpush1.msra.mxu0 0.0
        %1144 = vmatprep.subr.mxu0 0.0
        %1145 = vmatpush1.msra.mxu0 0.0
        %1146 = vmatprep.subr.mxu0 0.0
        %1147 = vmatpush1.msra.mxu0 0.0
        %1148 = vmatprep.subr.mxu0 0.0
        %1149 = vmatpush1.msra.mxu0 0.0
        %1150 = vmatprep.subr.mxu0 0.0
        %1151 = vmatpush1.msra.mxu0 0.0
        %1152 = vmatprep.subr.mxu0 0.0
        %1153 = vmatpush1.msra.mxu0 0.0
        %1154 = vmatprep.subr.mxu0 0.0
        %1155 = vmatpush1.msra.mxu0 0.0
        %1156 = vmatprep.mubr.f32.mxu0 0.0
        %1157 = vmatmul.mubr.f32.gmra.mrb[0].mxu0 %v672
        %v1158 = vpop.f32.mrb[0].mxu0
        %v1159 = vadd.f32 0.0, %v1158
        %v1160 = vpop.f32.mrb[0].mxu0
        %1161 = vmatprep.mubr.f32.mxu0 0.0
        %1162 = vmatmul.mubr.f32.gmra.mrb[0].mxu0 %v675
        %v1163 = vpop.f32.mrb[0].mxu0
        %v1164 = vadd.f32 0.0, %v1163
        %v1165 = vpop.f32.mrb[0].mxu0
        %1166 = vdwg.mxu0
        %1167 = vmatprep.subr.mxu0 0.0
        %1168 = vmatpush1.msra.mxu0 %v643
        %1169 = vmatprep.subr.mxu0 0.0
        %1170 = vmatpush1.msra.mxu0 %v648
        %1171 = vmatprep.subr.mxu0 0.0
        %1172 = vmatpush1.msra.mxu0 0.0
        %1173 = vmatprep.subr.mxu0 0.0
        %1174 = vmatpush1.msra.mxu0 0.0
        %1175 = vmatprep.subr.mxu0 0.0
        %1176 = vmatpush1.msra.mxu0 0.0
        %1177 = vmatprep.subr.mxu0 0.0
        %1178 = vmatpush1.msra.mxu0 0.0
        %1179 = vmatprep.subr.mxu0 0.0
        %1180 = vmatpush1.msra.mxu0 0.0
        %1181 = vmatprep.subr.mxu0 0.0
        %1182 = vmatpush1.msra.mxu0 0.0
        %1183 = vmatprep.subr.mxu0 0.0
        %1184 = vmatpush1.msra.mxu0 0.0
        %1185 = vmatprep.subr.mxu0 0.0
        %1186 = vmatpush1.msra.mxu0 0.0
        %1187 = vmatprep.subr.mxu0 0.0
        %1188 = vmatpush1.msra.mxu0 0.0
        %1189 = vmatprep.subr.mxu0 0.0
        %1190 = vmatpush1.msra.mxu0 0.0
        %1191 = vmatprep.subr.mxu0 0.0
        %1192 = vmatpush1.msra.mxu0 0.0
        %1193 = vmatprep.subr.mxu0 0.0
        %1194 = vmatpush1.msra.mxu0 0.0
        %1195 = vmatprep.subr.mxu0 0.0
        %1196 = vmatpush1.msra.mxu0 0.0
        %1197 = vmatprep.subr.mxu0 0.0
        %1198 = vmatpush1.msra.mxu0 0.0
        %1199 = vmatprep.subr.mxu0 0.0
        %1200 = vmatpush1.msra.mxu0 0.0
        %1201 = vmatprep.subr.mxu0 0.0
        %1202 = vmatpush1.msra.mxu0 0.0
        %1203 = vmatprep.subr.mxu0 0.0
        %1204 = vmatpush1.msra.mxu0 0.0
        %1205 = vmatprep.subr.mxu0 0.0
        %1206 = vmatpush1.msra.mxu0 0.0
        %1207 = vmatprep.subr.mxu0 0.0
        %1208 = vmatpush1.msra.mxu0 0.0
        %1209 = vmatprep.subr.mxu0 0.0
        %1210 = vmatpush1.msra.mxu0 0.0
        %1211 = vmatprep.subr.mxu0 0.0
        %1212 = vmatpush1.msra.mxu0 0.0
        %1213 = vmatprep.subr.mxu0 0.0
        %1214 = vmatpush1.msra.mxu0 0.0
        %1215 = vmatprep.subr.mxu0 0.0
        %1216 = vmatpush1.msra.mxu0 0.0
        %1217 = vmatprep.subr.mxu0 0.0
        %1218 = vmatpush1.msra.mxu0 0.0
        %1219 = vmatprep.subr.mxu0 0.0
        %1220 = vmatpush1.msra.mxu0 0.0
        %1221 = vmatprep.subr.mxu0 0.0
        %1222 = vmatpush1.msra.mxu0 0.0
        %1223 = vmatprep.subr.mxu0 0.0
        %1224 = vmatpush1.msra.mxu0 0.0
        %1225 = vmatprep.subr.mxu0 0.0
        %1226 = vmatpush1.msra.mxu0 0.0
        %1227 = vmatprep.subr.mxu0 0.0
        %1228 = vmatpush1.msra.mxu0 0.0
        %1229 = vmatprep.subr.mxu0 0.0
        %1230 = vmatpush1.msra.mxu0 0.0
        %1231 = vmatprep.mubr.f32.mxu0 0.0
        %1232 = vmatmul.mubr.f32.gmra.mrb[0].mxu0 %v753
        %v1233 = vpop.f32.mrb[0].mxu0
        %v1234 = vadd.f32 0.0, %v1233
        %v1235 = vpop.f32.mrb[0].mxu0
        %1236 = vmatprep.mubr.f32.mxu0 0.0
        %1237 = vmatmul.mubr.f32.gmra.mrb[0].mxu0 %v756
        %v1238 = vpop.f32.mrb[0].mxu0
        %v1239 = vadd.f32 0.0, %v1238
        %v1240 = vpop.f32.mrb[0].mxu0
        %1241 = vdwg.mxu0
        %v1242 = vsub.f32 %v1159, %v1234
        %v1243 = vsub.f32 %v1164, %v1239
        %v1244 = vmul.f32 %v1242, 0.00390625
        %v1245 = vmul.f32 %v1243, 0.00390625
        %1246 = vmatprep.subr.mxu0 0.0
        %1247 = vmatpush1.msra.mxu0 %v536
        %1248 = vmatprep.subr.mxu0 0.0
        %1249 = vmatpush1.msra.mxu0 %v541
        %1250 = vmatprep.subr.mxu0 0.0
        %1251 = vmatpush1.msra.mxu0 0.0
        %1252 = vmatprep.subr.mxu0 0.0
        %1253 = vmatpush1.msra.mxu0 0.0
        %1254 = vmatprep.subr.mxu0 0.0
        %1255 = vmatpush1.msra.mxu0 0.0
        %1256 = vmatprep.subr.mxu0 0.0
        %1257 = vmatpush1.msra.mxu0 0.0
        %1258 = vmatprep.subr.mxu0 0.0
        %1259 = vmatpush1.msra.mxu0 0.0
        %1260 = vmatprep.subr.mxu0 0.0
        %1261 = vmatpush1.msra.mxu0 0.0
        %1262 = vmatprep.subr.mxu0 0.0
        %1263 = vmatpush1.msra.mxu0 0.0
        %1264 = vmatprep.subr.mxu0 0.0
        %1265 = vmatpush1.msra.mxu0 0.0
        %1266 = vmatprep.subr.mxu0 0.0
        %1267 = vmatpush1.msra.mxu0 0.0
        %1268 = vmatprep.subr.mxu0 0.0
        %1269 = vmatpush1.msra.mxu0 0.0
        %1270 = vmatprep.subr.mxu0 0.0
        %1271 = vmatpush1.msra.mxu0 0.0
        %1272 = vmatprep.subr.mxu0 0.0
        %1273 = vmatpush1.msra.mxu0 0.0
        %1274 = vmatprep.subr.mxu0 0.0
        %1275 = vmatpush1.msra.mxu0 0.0
        %1276 = vmatprep.subr.mxu0 0.0
        %1277 = vmatpush1.msra.mxu0 0.0
        %1278 = vmatprep.subr.mxu0 0.0
        %1279 = vmatpush1.msra.mxu0 0.0
        %1280 = vmatprep.subr.mxu0 0.0
        %1281 = vmatpush1.msra.mxu0 0.0
        %1282 = vmatprep.subr.mxu0 0.0
        %1283 = vmatpush1.msra.mxu0 0.0
        %1284 = vmatprep.subr.mxu0 0.0
        %1285 = vmatpush1.msra.mxu0 0.0
        %1286 = vmatprep.subr.mxu0 0.0
        %1287 = vmatpush1.msra.mxu0 0.0
        %1288 = vmatprep.subr.mxu0 0.0
        %1289 = vmatpush1.msra.mxu0 0.0
        %1290 = vmatprep.subr.mxu0 0.0
        %1291 = vmatpush1.msra.mxu0 0.0
        %1292 = vmatprep.subr.mxu0 0.0
        %1293 = vmatpush1.msra.mxu0 0.0
        %1294 = vmatprep.subr.mxu0 0.0
        %1295 = vmatpush1.msra.mxu0 0.0
        %1296 = vmatprep.subr.mxu0 0.0
        %1297 = vmatpush1.msra.mxu0 0.0
        %1298 = vmatprep.subr.mxu0 0.0
        %1299 = vmatpush1.msra.mxu0 0.0
        %1300 = vmatprep.subr.mxu0 0.0
        %1301 = vmatpush1.msra.mxu0 0.0
        %1302 = vmatprep.subr.mxu0 0.0
        %1303 = vmatpush1.msra.mxu0 0.0
        %1304 = vmatprep.subr.mxu0 0.0
        %1305 = vmatpush1.msra.mxu0 0.0
        %1306 = vmatprep.subr.mxu0 0.0
        %1307 = vmatpush1.msra.mxu0 0.0
        %1308 = vmatprep.subr.mxu0 0.0
        %1309 = vmatpush1.msra.mxu0 0.0
        %1310 = vmatprep.mubr.f32.mxu0 0.0
        %1311 = vmatmul.mubr.f32.gmra.mrb[0].mxu0 %v753
        %v1312 = vpop.f32.mrb[0].mxu0
        %v1313 = vadd.f32 0.0, %v1312
        %v1314 = vpop.f32.mrb[0].mxu0
        %1315 = vmatprep.mubr.f32.mxu0 0.0
        %1316 = vmatmul.mubr.f32.gmra.mrb[0].mxu0 %v756
        %v1317 = vpop.f32.mrb[0].mxu0
        %v1318 = vadd.f32 0.0, %v1317
        %v1319 = vpop.f32.mrb[0].mxu0
        %1320 = vdwg.mxu0
        %1321 = vmatprep.subr.mxu0 0.0
        %1322 = vmatpush1.msra.mxu0 %v643
        %1323 = vmatprep.subr.mxu0 0.0
        %1324 = vmatpush1.msra.mxu0 %v648
        %1325 = vmatprep.subr.mxu0 0.0
        %1326 = vmatpush1.msra.mxu0 0.0
        %1327 = vmatprep.subr.mxu0 0.0
        %1328 = vmatpush1.msra.mxu0 0.0
        %1329 = vmatprep.subr.mxu0 0.0
        %1330 = vmatpush1.msra.mxu0 0.0
        %1331 = vmatprep.subr.mxu0 0.0
        %1332 = vmatpush1.msra.mxu0 0.0
        %1333 = vmatprep.subr.mxu0 0.0
        %1334 = vmatpush1.msra.mxu0 0.0
        %1335 = vmatprep.subr.mxu0 0.0
        %1336 = vmatpush1.msra.mxu0 0.0
        %1337 = vmatprep.subr.mxu0 0.0
        %1338 = vmatpush1.msra.mxu0 0.0
        %1339 = vmatprep.subr.mxu0 0.0
        %1340 = vmatpush1.msra.mxu0 0.0
        %1341 = vmatprep.subr.mxu0 0.0
        %1342 = vmatpush1.msra.mxu0 0.0
        %1343 = vmatprep.subr.mxu0 0.0
        %1344 = vmatpush1.msra.mxu0 0.0
        %1345 = vmatprep.subr.mxu0 0.0
        %1346 = vmatpush1.msra.mxu0 0.0
        %1347 = vmatprep.subr.mxu0 0.0
        %1348 = vmatpush1.msra.mxu0 0.0
        %1349 = vmatprep.subr.mxu0 0.0
        %1350 = vmatpush1.msra.mxu0 0.0
        %1351 = vmatprep.subr.mxu0 0.0
        %1352 = vmatpush1.msra.mxu0 0.0
        %1353 = vmatprep.subr.mxu0 0.0
        %1354 = vmatpush1.msra.mxu0 0.0
        %1355 = vmatprep.subr.mxu0 0.0
        %1356 = vmatpush1.msra.mxu0 0.0
        %1357 = vmatprep.subr.mxu0 0.0
        %1358 = vmatpush1.msra.mxu0 0.0
        %1359 = vmatprep.subr.mxu0 0.0
        %1360 = vmatpush1.msra.mxu0 0.0
        %1361 = vmatprep.subr.mxu0 0.0
        %1362 = vmatpush1.msra.mxu0 0.0
        %1363 = vmatprep.subr.mxu0 0.0
        %1364 = vmatpush1.msra.mxu0 0.0
        %1365 = vmatprep.subr.mxu0 0.0
        %1366 = vmatpush1.msra.mxu0 0.0
        %1367 = vmatprep.subr.mxu0 0.0
        %1368 = vmatpush1.msra.mxu0 0.0
        %1369 = vmatprep.subr.mxu0 0.0
        %1370 = vmatpush1.msra.mxu0 0.0
        %1371 = vmatprep.subr.mxu0 0.0
        %1372 = vmatpush1.msra.mxu0 0.0
        %1373 = vmatprep.subr.mxu0 0.0
        %1374 = vmatpush1.msra.mxu0 0.0
        %1375 = vmatprep.subr.mxu0 0.0
        %1376 = vmatpush1.msra.mxu0 0.0
        %1377 = vmatprep.subr.mxu0 0.0
        %1378 = vmatpush1.msra.mxu0 0.0
        %1379 = vmatprep.subr.mxu0 0.0
        %1380 = vmatpush1.msra.mxu0 0.0
        %1381 = vmatprep.subr.mxu0 0.0
        %1382 = vmatpush1.msra.mxu0 0.0
        %1383 = vmatprep.subr.mxu0 0.0
        %1384 = vmatpush1.msra.mxu0 0.0
        %1385 = vmatprep.mubr.f32.mxu0 0.0
        %1386 = vmatmul.mubr.f32.gmra.mrb[0].mxu0 %v672
        %v1387 = vpop.f32.mrb[0].mxu0
        %v1388 = vadd.f32 %v1313, %v1387
        %v1389 = vpop.f32.mrb[0].mxu0
        %1390 = vmatprep.mubr.f32.mxu0 0.0
        %1391 = vmatmul.mubr.f32.gmra.mrb[0].mxu0 %v675
        %v1392 = vpop.f32.mrb[0].mxu0
        %v1393 = vadd.f32 %v1318, %v1392
        %v1394 = vpop.f32.mrb[0].mxu0
        %1395 = vdwg.mxu0
        %v1396 = vsub.f32 0.0, %v1388
        %v1397 = vsub.f32 0.0, %v1393
        %v1398 = vmul.f32 %v1396, 0.00390625
        %v1399 = vmul.f32 %v1397, 0.00390625
        %v1400 = vmul.f32 %v1244, %v1244
        %v1401 = vmul.f32 %v1245, %v1245
        %v1402 = vmul.f32 %v1398, %v1398
        %v1403 = vmul.f32 %v1399, %v1399
        %v1404 = vadd.f32 %v1400, %v1402
        %v1405 = vadd.f32 %v1401, %v1403
        %v1406 = vrsqrt.pop %v1404
        %v1407 = vmul.f32 %v1404, %v1406
        %vm1408 = vcmp.eq.f32.partialorder %v1404, inf
        %v1409 = vsel %vm1408, %v1404, %v1407
        %vm1410 = vcmp.eq.f32.partialorder %v1404, 0.0
        %v1411 = vand.u32 %v1404, 2147483648
        %v1412 = vsel %vm1410, %v1411, %v1409
        %v1413 = vrsqrt.pop %v1405
        %v1414 = vmul.f32 %v1405, %v1413
        %vm1415 = vcmp.eq.f32.partialorder %v1405, inf
        %v1416 = vsel %vm1415, %v1405, %v1414
        %vm1417 = vcmp.eq.f32.partialorder %v1405, 0.0
        %v1418 = vand.u32 %v1405, 2147483648
        %v1419 = vsel %vm1417, %v1418, %v1416
        %s1420 = scalar_lea.vmem %s397, 16
        %1421 = vst.msk [vmem:[%s1420] sm:$0xff] %vm1011, %v1244
        %1422 = vst.msk [vmem:[%s1420 + $0x8] sm:$0xff] %vm1011, %v1245
        %s1423 = scalar_lea.vmem %s404, 16
        %1424 = vst.msk [vmem:[%s1423] sm:$0xff] %vm1011, %v1398
        %1425 = vst.msk [vmem:[%s1423 + $0x8] sm:$0xff] %vm1011, %v1399
        %s1426 = scalar_lea.vmem %s411, 16
        %1427 = vst.msk [vmem:[%s1426] sm:$0xff] %vm1011, %v1412
        %1428 = vst.msk [vmem:[%s1426 + $0x8] sm:$0xff] %vm1011, %v1419
        %v1429 = vand.u32 2147483647, %v1398
        %v1430 = vand.u32 2147483647, %v1399
        %v1431 = vand.u32 2147483647, %v1244
        %v1432 = vand.u32 2147483647, %v1245
        %v1433 = vrcp.pop %v1431
        %v1434 = vmul.f32 %v1429, %v1433
        %v1435 = vrcp.pop %v1432
        %v1436 = vmul.f32 %v1430, %v1435
        %vm1437 = vcmp.gt.f32.partialorder %v1434, 2.4142137
        %vm1438 = vcmp.gt.f32.partialorder %v1436, 2.4142137
        %vm1439 = vcmp.gt.f32.partialorder %v1434, 0.41421357
        %vm1440 = vcmp.gt.f32.partialorder %v1436, 0.41421357
        %v1441 = vrcp.pop %v1434
        %v1442 = vmul.f32 -1.0, %v1441
        %v1443 = vrcp.pop %v1436
        %v1444 = vmul.f32 -1.0, %v1443
        %v1445 = vsub.f32 %v1434, 1.0
        %v1446 = vsub.f32 %v1436, 1.0
        %v1447 = vadd.f32 %v1434, 1.0
        %v1448 = vadd.f32 %v1436, 1.0
        %v1449 = vrcp.pop %v1447
        %v1450 = vmul.f32 %v1445, %v1449
        %v1451 = vrcp.pop %v1448
        %v1452 = vmul.f32 %v1446, %v1451
        %v1453 = vsel %vm1439, %v1450, %v1434
        %v1454 = vsel %vm1440, %v1452, %v1436
        %v1455 = vsel %vm1437, %v1442, %v1453
        %v1456 = vsel %vm1438, %v1444, %v1454
        %v1457 = vsel %vm1439, 0.7853982, 0.0
        %v1458 = vsel %vm1440, 0.7853982, 0.0
        %v1459 = vsel %vm1437, 1.5707964, %v1457
        %v1460 = vsel %vm1438, 1.5707964, %v1458
        %v1461 = vmul.f32 %v1455, %v1455
        %v1462 = vmul.f32 %v1456, %v1456
        %v1463 = vmul.f32 %v1461, 0.080537446
        %v1464 = vmul.f32 %v1462, 0.080537446
        %v1465 = vsub.f32 %v1463, 0.13877685
        %v1466 = vsub.f32 %v1464, 0.13877685
        %v1467 = vmul.f32 %v1465, %v1461
        %v1468 = vmul.f32 %v1466, %v1462
        %v1469 = vadd.f32 %v1467, 0.19977711
        %v1470 = vadd.f32 %v1468, 0.19977711
        %v1471 = vmul.f32 %v1469, %v1461
        %v1472 = vmul.f32 %v1470, %v1462
        %v1473 = vsub.f32 %v1471, 0.3333295
        %v1474 = vsub.f32 %v1472, 0.3333295
        %v1475 = vmul.f32 %v1473, %v1461
        %v1476 = vmul.f32 %v1474, %v1462
        %v1477 = vmul.f32 %v1475, %v1455
        %v1478 = vmul.f32 %v1476, %v1456
        %v1479 = vadd.f32 %v1477, %v1455
        %v1480 = vadd.f32 %v1478, %v1456
        %v1481 = vadd.f32 %v1459, %v1479
        %v1482 = vadd.f32 %v1460, %v1480
        %vm1483 = vcmp.ge.f32.partialorder %v1398, 0.0
        %vm1484 = vcmp.ge.f32.partialorder %v1399, 0.0
        %v1485 = vsel %vm1483, 1.0, -1.0
        %v1486 = vsel %vm1484, 1.0, -1.0
        %vm1487 = vcmp.ge.f32.partialorder %v1244, 0.0
        %vm1488 = vcmp.ge.f32.partialorder %v1245, 0.0
        %v1489 = vmul.f32 %v1485, %v1481
        %v1490 = vmul.f32 %v1486, %v1482
        %v1491 = vsub.f32 3.1415927, %v1481
        %v1492 = vsub.f32 3.1415927, %v1482
        %v1493 = vmul.f32 %v1485, %v1491
        %v1494 = vmul.f32 %v1486, %v1492
        %v1495 = vsel %vm1487, %v1489, %v1493
        %v1496 = vsel %vm1488, %v1490, %v1494
        %vm1497 = vcmp.eq.f32.partialorder %v1412, 0.0
        %vm1498 = vcmp.eq.f32.partialorder %v1419, 0.0
        %v1499 = vsel %vm1497, 0.0, %v1495
        %v1500 = vsel %vm1498, 0.0, %v1496
        %s1501 = scalar_lea.vmem %s418, 16
        %1502 = vst.msk [vmem:[%s1501] sm:$0xff] %vm1011, %v1499
        %1503 = vst.msk [vmem:[%s1501 + $0x8] sm:$0xff] %vm1011, %v1500
        %1504 = vmatprep.subr.mxu0 0.0
        %1505 = vmatpush1.msra.mxu0 %v546
        %1506 = vmatprep.subr.mxu0 0.0
        %1507 = vmatpush1.msra.mxu0 %v551
        %1508 = vmatprep.subr.mxu0 0.0
        %1509 = vmatpush1.msra.mxu0 0.0
        %1510 = vmatprep.subr.mxu0 0.0
        %1511 = vmatpush1.msra.mxu0 0.0
        %1512 = vmatprep.subr.mxu0 0.0
        %1513 = vmatpush1.msra.mxu0 0.0
        %1514 = vmatprep.subr.mxu0 0.0
        %1515 = vmatpush1.msra.mxu0 0.0
        %1516 = vmatprep.subr.mxu0 0.0
        %1517 = vmatpush1.msra.mxu0 0.0
        %1518 = vmatprep.subr.mxu0 0.0
        %1519 = vmatpush1.msra.mxu0 0.0
        %1520 = vmatprep.subr.mxu0 0.0
        %1521 = vmatpush1.msra.mxu0 0.0
        %1522 = vmatprep.subr.mxu0 0.0
        %1523 = vmatpush1.msra.mxu0 0.0
        %1524 = vmatprep.subr.mxu0 0.0
        %1525 = vmatpush1.msra.mxu0 0.0
        %1526 = vmatprep.subr.mxu0 0.0
        %1527 = vmatpush1.msra.mxu0 0.0
        %1528 = vmatprep.subr.mxu0 0.0
        %1529 = vmatpush1.msra.mxu0 0.0
        %1530 = vmatprep.subr.mxu0 0.0
        %1531 = vmatpush1.msra.mxu0 0.0
        %1532 = vmatprep.subr.mxu0 0.0
        %1533 = vmatpush1.msra.mxu0 0.0
        %1534 = vmatprep.subr.mxu0 0.0
        %1535 = vmatpush1.msra.mxu0 0.0
        %1536 = vmatprep.subr.mxu0 0.0
        %1537 = vmatpush1.msra.mxu0 0.0
        %1538 = vmatprep.subr.mxu0 0.0
        %1539 = vmatpush1.msra.mxu0 0.0
        %1540 = vmatprep.subr.mxu0 0.0
        %1541 = vmatpush1.msra.mxu0 0.0
        %1542 = vmatprep.subr.mxu0 0.0
        %1543 = vmatpush1.msra.mxu0 0.0
        %1544 = vmatprep.subr.mxu0 0.0
        %1545 = vmatpush1.msra.mxu0 0.0
        %1546 = vmatprep.subr.mxu0 0.0
        %1547 = vmatpush1.msra.mxu0 0.0
        %1548 = vmatprep.subr.mxu0 0.0
        %1549 = vmatpush1.msra.mxu0 0.0
        %1550 = vmatprep.subr.mxu0 0.0
        %1551 = vmatpush1.msra.mxu0 0.0
        %1552 = vmatprep.subr.mxu0 0.0
        %1553 = vmatpush1.msra.mxu0 0.0
        %1554 = vmatprep.subr.mxu0 0.0
        %1555 = vmatpush1.msra.mxu0 0.0
        %1556 = vmatprep.subr.mxu0 0.0
        %1557 = vmatpush1.msra.mxu0 0.0
        %1558 = vmatprep.subr.mxu0 0.0
        %1559 = vmatpush1.msra.mxu0 0.0
        %1560 = vmatprep.subr.mxu0 0.0
        %1561 = vmatpush1.msra.mxu0 0.0
        %1562 = vmatprep.subr.mxu0 0.0
        %1563 = vmatpush1.msra.mxu0 0.0
        %1564 = vmatprep.subr.mxu0 0.0
        %1565 = vmatpush1.msra.mxu0 0.0
        %1566 = vmatprep.subr.mxu0 0.0
        %1567 = vmatpush1.msra.mxu0 0.0
        %1568 = vmatprep.mubr.f32.mxu0 0.0
        %1569 = vmatmul.mubr.f32.gmra.mrb[0].mxu0 %v672
        %v1570 = vpop.f32.mrb[0].mxu0
        %v1571 = vadd.f32 0.0, %v1570
        %v1572 = vpop.f32.mrb[0].mxu0
        %1573 = vmatprep.mubr.f32.mxu0 0.0
        %1574 = vmatmul.mubr.f32.gmra.mrb[0].mxu0 %v675
        %v1575 = vpop.f32.mrb[0].mxu0
        %v1576 = vadd.f32 0.0, %v1575
        %v1577 = vpop.f32.mrb[0].mxu0
        %1578 = vdwg.mxu0
        %1579 = vmatprep.subr.mxu0 0.0
        %1580 = vmatpush1.msra.mxu0 %v653
        %1581 = vmatprep.subr.mxu0 0.0
        %1582 = vmatpush1.msra.mxu0 %v658
        %1583 = vmatprep.subr.mxu0 0.0
        %1584 = vmatpush1.msra.mxu0 0.0
        %1585 = vmatprep.subr.mxu0 0.0
        %1586 = vmatpush1.msra.mxu0 0.0
        %1587 = vmatprep.subr.mxu0 0.0
        %1588 = vmatpush1.msra.mxu0 0.0
        %1589 = vmatprep.subr.mxu0 0.0
        %1590 = vmatpush1.msra.mxu0 0.0
        %1591 = vmatprep.subr.mxu0 0.0
        %1592 = vmatpush1.msra.mxu0 0.0
        %1593 = vmatprep.subr.mxu0 0.0
        %1594 = vmatpush1.msra.mxu0 0.0
        %1595 = vmatprep.subr.mxu0 0.0
        %1596 = vmatpush1.msra.mxu0 0.0
        %1597 = vmatprep.subr.mxu0 0.0
        %1598 = vmatpush1.msra.mxu0 0.0
        %1599 = vmatprep.subr.mxu0 0.0
        %1600 = vmatpush1.msra.mxu0 0.0
        %1601 = vmatprep.subr.mxu0 0.0
        %1602 = vmatpush1.msra.mxu0 0.0
        %1603 = vmatprep.subr.mxu0 0.0
        %1604 = vmatpush1.msra.mxu0 0.0
        %1605 = vmatprep.subr.mxu0 0.0
        %1606 = vmatpush1.msra.mxu0 0.0
        %1607 = vmatprep.subr.mxu0 0.0
        %1608 = vmatpush1.msra.mxu0 0.0
        %1609 = vmatprep.subr.mxu0 0.0
        %1610 = vmatpush1.msra.mxu0 0.0
        %1611 = vmatprep.subr.mxu0 0.0
        %1612 = vmatpush1.msra.mxu0 0.0
        %1613 = vmatprep.subr.mxu0 0.0
        %1614 = vmatpush1.msra.mxu0 0.0
        %1615 = vmatprep.subr.mxu0 0.0
        %1616 = vmatpush1.msra.mxu0 0.0
        %1617 = vmatprep.subr.mxu0 0.0
        %1618 = vmatpush1.msra.mxu0 0.0
        %1619 = vmatprep.subr.mxu0 0.0
        %1620 = vmatpush1.msra.mxu0 0.0
        %1621 = vmatprep.subr.mxu0 0.0
        %1622 = vmatpush1.msra.mxu0 0.0
        %1623 = vmatprep.subr.mxu0 0.0
        %1624 = vmatpush1.msra.mxu0 0.0
        %1625 = vmatprep.subr.mxu0 0.0
        %1626 = vmatpush1.msra.mxu0 0.0
        %1627 = vmatprep.subr.mxu0 0.0
        %1628 = vmatpush1.msra.mxu0 0.0
        %1629 = vmatprep.subr.mxu0 0.0
        %1630 = vmatpush1.msra.mxu0 0.0
        %1631 = vmatprep.subr.mxu0 0.0
        %1632 = vmatpush1.msra.mxu0 0.0
        %1633 = vmatprep.subr.mxu0 0.0
        %1634 = vmatpush1.msra.mxu0 0.0
        %1635 = vmatprep.subr.mxu0 0.0
        %1636 = vmatpush1.msra.mxu0 0.0
        %1637 = vmatprep.subr.mxu0 0.0
        %1638 = vmatpush1.msra.mxu0 0.0
        %1639 = vmatprep.subr.mxu0 0.0
        %1640 = vmatpush1.msra.mxu0 0.0
        %1641 = vmatprep.subr.mxu0 0.0
        %1642 = vmatpush1.msra.mxu0 0.0
        %1643 = vmatprep.mubr.f32.mxu0 0.0
        %1644 = vmatmul.mubr.f32.gmra.mrb[0].mxu0 %v753
        %v1645 = vpop.f32.mrb[0].mxu0
        %v1646 = vadd.f32 0.0, %v1645
        %v1647 = vpop.f32.mrb[0].mxu0
        %1648 = vmatprep.mubr.f32.mxu0 0.0
        %1649 = vmatmul.mubr.f32.gmra.mrb[0].mxu0 %v756
        %v1650 = vpop.f32.mrb[0].mxu0
        %v1651 = vadd.f32 0.0, %v1650
        %v1652 = vpop.f32.mrb[0].mxu0
        %1653 = vdwg.mxu0
        %v1654 = vsub.f32 %v1571, %v1646
        %v1655 = vsub.f32 %v1576, %v1651
        %v1656 = vmul.f32 %v1654, 0.00390625
        %v1657 = vmul.f32 %v1655, 0.00390625
        %1658 = vmatprep.subr.mxu0 0.0
        %1659 = vmatpush1.msra.mxu0 %v546
        %1660 = vmatprep.subr.mxu0 0.0
        %1661 = vmatpush1.msra.mxu0 %v551
        %1662 = vmatprep.subr.mxu0 0.0
        %1663 = vmatpush1.msra.mxu0 0.0
        %1664 = vmatprep.subr.mxu0 0.0
        %1665 = vmatpush1.msra.mxu0 0.0
        %1666 = vmatprep.subr.mxu0 0.0
        %1667 = vmatpush1.msra.mxu0 0.0
        %1668 = vmatprep.subr.mxu0 0.0
        %1669 = vmatpush1.msra.mxu0 0.0
        %1670 = vmatprep.subr.mxu0 0.0
        %1671 = vmatpush1.msra.mxu0 0.0
        %1672 = vmatprep.subr.mxu0 0.0
        %1673 = vmatpush1.msra.mxu0 0.0
        %1674 = vmatprep.subr.mxu0 0.0
        %1675 = vmatpush1.msra.mxu0 0.0
        %1676 = vmatprep.subr.mxu0 0.0
        %1677 = vmatpush1.msra.mxu0 0.0
        %1678 = vmatprep.subr.mxu0 0.0
        %1679 = vmatpush1.msra.mxu0 0.0
        %1680 = vmatprep.subr.mxu0 0.0
        %1681 = vmatpush1.msra.mxu0 0.0
        %1682 = vmatprep.subr.mxu0 0.0
        %1683 = vmatpush1.msra.mxu0 0.0
        %1684 = vmatprep.subr.mxu0 0.0
        %1685 = vmatpush1.msra.mxu0 0.0
        %1686 = vmatprep.subr.mxu0 0.0
        %1687 = vmatpush1.msra.mxu0 0.0
        %1688 = vmatprep.subr.mxu0 0.0
        %1689 = vmatpush1.msra.mxu0 0.0
        %1690 = vmatprep.subr.mxu0 0.0
        %1691 = vmatpush1.msra.mxu0 0.0
        %1692 = vmatprep.subr.mxu0 0.0
        %1693 = vmatpush1.msra.mxu0 0.0
        %1694 = vmatprep.subr.mxu0 0.0
        %1695 = vmatpush1.msra.mxu0 0.0
        %1696 = vmatprep.subr.mxu0 0.0
        %1697 = vmatpush1.msra.mxu0 0.0
        %1698 = vmatprep.subr.mxu0 0.0
        %1699 = vmatpush1.msra.mxu0 0.0
        %1700 = vmatprep.subr.mxu0 0.0
        %1701 = vmatpush1.msra.mxu0 0.0
        %1702 = vmatprep.subr.mxu0 0.0
        %1703 = vmatpush1.msra.mxu0 0.0
        %1704 = vmatprep.subr.mxu0 0.0
        %1705 = vmatpush1.msra.mxu0 0.0
        %1706 = vmatprep.subr.mxu0 0.0
        %1707 = vmatpush1.msra.mxu0 0.0
        %1708 = vmatprep.subr.mxu0 0.0
        %1709 = vmatpush1.msra.mxu0 0.0
        %1710 = vmatprep.subr.mxu0 0.0
        %1711 = vmatpush1.msra.mxu0 0.0
        %1712 = vmatprep.subr.mxu0 0.0
        %1713 = vmatpush1.msra.mxu0 0.0
        %1714 = vmatprep.subr.mxu0 0.0
        %1715 = vmatpush1.msra.mxu0 0.0
        %1716 = vmatprep.subr.mxu0 0.0
        %1717 = vmatpush1.msra.mxu0 0.0
        %1718 = vmatprep.subr.mxu0 0.0
        %1719 = vmatpush1.msra.mxu0 0.0
        %1720 = vmatprep.subr.mxu0 0.0
        %1721 = vmatpush1.msra.mxu0 0.0
        %1722 = vmatprep.mubr.f32.mxu0 0.0
        %1723 = vmatmul.mubr.f32.gmra.mrb[0].mxu0 %v753
        %v1724 = vpop.f32.mrb[0].mxu0
        %v1725 = vadd.f32 0.0, %v1724
        %v1726 = vpop.f32.mrb[0].mxu0
        %1727 = vmatprep.mubr.f32.mxu0 0.0
        %1728 = vmatmul.mubr.f32.gmra.mrb[0].mxu0 %v756
        %v1729 = vpop.f32.mrb[0].mxu0
        %v1730 = vadd.f32 0.0, %v1729
        %v1731 = vpop.f32.mrb[0].mxu0
        %1732 = vdwg.mxu0
        %1733 = vmatprep.subr.mxu0 0.0
        %1734 = vmatpush1.msra.mxu0 %v653
        %1735 = vmatprep.subr.mxu0 0.0
        %1736 = vmatpush1.msra.mxu0 %v658
        %1737 = vmatprep.subr.mxu0 0.0
        %1738 = vmatpush1.msra.mxu0 0.0
        %1739 = vmatprep.subr.mxu0 0.0
        %1740 = vmatpush1.msra.mxu0 0.0
        %1741 = vmatprep.subr.mxu0 0.0
        %1742 = vmatpush1.msra.mxu0 0.0
        %1743 = vmatprep.subr.mxu0 0.0
        %1744 = vmatpush1.msra.mxu0 0.0
        %1745 = vmatprep.subr.mxu0 0.0
        %1746 = vmatpush1.msra.mxu0 0.0
        %1747 = vmatprep.subr.mxu0 0.0
        %1748 = vmatpush1.msra.mxu0 0.0
        %1749 = vmatprep.subr.mxu0 0.0
        %1750 = vmatpush1.msra.mxu0 0.0
        %1751 = vmatprep.subr.mxu0 0.0
        %1752 = vmatpush1.msra.mxu0 0.0
        %1753 = vmatprep.subr.mxu0 0.0
        %1754 = vmatpush1.msra.mxu0 0.0
        %1755 = vmatprep.subr.mxu0 0.0
        %1756 = vmatpush1.msra.mxu0 0.0
        %1757 = vmatprep.subr.mxu0 0.0
        %1758 = vmatpush1.msra.mxu0 0.0
        %1759 = vmatprep.subr.mxu0 0.0
        %1760 = vmatpush1.msra.mxu0 0.0
        %1761 = vmatprep.subr.mxu0 0.0
        %1762 = vmatpush1.msra.mxu0 0.0
        %1763 = vmatprep.subr.mxu0 0.0
        %1764 = vmatpush1.msra.mxu0 0.0
        %1765 = vmatprep.subr.mxu0 0.0
        %1766 = vmatpush1.msra.mxu0 0.0
        %1767 = vmatprep.subr.mxu0 0.0
        %1768 = vmatpush1.msra.mxu0 0.0
        %1769 = vmatprep.subr.mxu0 0.0
        %1770 = vmatpush1.msra.mxu0 0.0
        %1771 = vmatprep.subr.mxu0 0.0
        %1772 = vmatpush1.msra.mxu0 0.0
        %1773 = vmatprep.subr.mxu0 0.0
        %1774 = vmatpush1.msra.mxu0 0.0
        %1775 = vmatprep.subr.mxu0 0.0
        %1776 = vmatpush1.msra.mxu0 0.0
        %1777 = vmatprep.subr.mxu0 0.0
        %1778 = vmatpush1.msra.mxu0 0.0
        %1779 = vmatprep.subr.mxu0 0.0
        %1780 = vmatpush1.msra.mxu0 0.0
        %1781 = vmatprep.subr.mxu0 0.0
        %1782 = vmatpush1.msra.mxu0 0.0
        %1783 = vmatprep.subr.mxu0 0.0
        %1784 = vmatpush1.msra.mxu0 0.0
        %1785 = vmatprep.subr.mxu0 0.0
        %1786 = vmatpush1.msra.mxu0 0.0
        %1787 = vmatprep.subr.mxu0 0.0
        %1788 = vmatpush1.msra.mxu0 0.0
        %1789 = vmatprep.subr.mxu0 0.0
        %1790 = vmatpush1.msra.mxu0 0.0
        %1791 = vmatprep.subr.mxu0 0.0
        %1792 = vmatpush1.msra.mxu0 0.0
        %1793 = vmatprep.subr.mxu0 0.0
        %1794 = vmatpush1.msra.mxu0 0.0
        %1795 = vmatprep.subr.mxu0 0.0
        %1796 = vmatpush1.msra.mxu0 0.0
        %1797 = vmatprep.mubr.f32.mxu0 0.0
        %1798 = vmatmul.mubr.f32.gmra.mrb[0].mxu0 %v672
        %v1799 = vpop.f32.mrb[0].mxu0
        %v1800 = vadd.f32 %v1725, %v1799
        %v1801 = vpop.f32.mrb[0].mxu0
        %1802 = vmatprep.mubr.f32.mxu0 0.0
        %1803 = vmatmul.mubr.f32.gmra.mrb[0].mxu0 %v675
        %v1804 = vpop.f32.mrb[0].mxu0
        %v1805 = vadd.f32 %v1730, %v1804
        %v1806 = vpop.f32.mrb[0].mxu0
        %1807 = vdwg.mxu0
        %v1808 = vsub.f32 0.0, %v1800
        %v1809 = vsub.f32 0.0, %v1805
        %v1810 = vmul.f32 %v1808, 0.00390625
        %v1811 = vmul.f32 %v1809, 0.00390625
        %v1812 = vmul.f32 %v1656, %v1656
        %v1813 = vmul.f32 %v1657, %v1657
        %v1814 = vmul.f32 %v1810, %v1810
        %v1815 = vmul.f32 %v1811, %v1811
        %v1816 = vadd.f32 %v1812, %v1814
        %v1817 = vadd.f32 %v1813, %v1815
        %v1818 = vrsqrt.pop %v1816
        %v1819 = vmul.f32 %v1816, %v1818
        %vm1820 = vcmp.eq.f32.partialorder %v1816, inf
        %v1821 = vsel %vm1820, %v1816, %v1819
        %vm1822 = vcmp.eq.f32.partialorder %v1816, 0.0
        %v1823 = vand.u32 %v1816, 2147483648
        %v1824 = vsel %vm1822, %v1823, %v1821
        %v1825 = vrsqrt.pop %v1817
        %v1826 = vmul.f32 %v1817, %v1825
        %vm1827 = vcmp.eq.f32.partialorder %v1817, inf
        %v1828 = vsel %vm1827, %v1817, %v1826
        %vm1829 = vcmp.eq.f32.partialorder %v1817, 0.0
        %v1830 = vand.u32 %v1817, 2147483648
        %v1831 = vsel %vm1829, %v1830, %v1828
        %s1832 = scalar_lea.vmem %s397, 32
        %1833 = vst.msk [vmem:[%s1832] sm:$0xff] %vm1011, %v1656
        %1834 = vst.msk [vmem:[%s1832 + $0x8] sm:$0xff] %vm1011, %v1657
        %s1835 = scalar_lea.vmem %s404, 32
        %1836 = vst.msk [vmem:[%s1835] sm:$0xff] %vm1011, %v1810
        %1837 = vst.msk [vmem:[%s1835 + $0x8] sm:$0xff] %vm1011, %v1811
        %s1838 = scalar_lea.vmem %s411, 32
        %1839 = vst.msk [vmem:[%s1838] sm:$0xff] %vm1011, %v1824
        %1840 = vst.msk [vmem:[%s1838 + $0x8] sm:$0xff] %vm1011, %v1831
        %v1841 = vand.u32 2147483647, %v1810
        %v1842 = vand.u32 2147483647, %v1811
        %v1843 = vand.u32 2147483647, %v1656
        %v1844 = vand.u32 2147483647, %v1657
        %v1845 = vrcp.pop %v1843
        %v1846 = vmul.f32 %v1841, %v1845
        %v1847 = vrcp.pop %v1844
        %v1848 = vmul.f32 %v1842, %v1847
        %vm1849 = vcmp.gt.f32.partialorder %v1846, 2.4142137
        %vm1850 = vcmp.gt.f32.partialorder %v1848, 2.4142137
        %vm1851 = vcmp.gt.f32.partialorder %v1846, 0.41421357
        %vm1852 = vcmp.gt.f32.partialorder %v1848, 0.41421357
        %v1853 = vrcp.pop %v1846
        %v1854 = vmul.f32 -1.0, %v1853
        %v1855 = vrcp.pop %v1848
        %v1856 = vmul.f32 -1.0, %v1855
        %v1857 = vsub.f32 %v1846, 1.0
        %v1858 = vsub.f32 %v1848, 1.0
        %v1859 = vadd.f32 %v1846, 1.0
        %v1860 = vadd.f32 %v1848, 1.0
        %v1861 = vrcp.pop %v1859
        %v1862 = vmul.f32 %v1857, %v1861
        %v1863 = vrcp.pop %v1860
        %v1864 = vmul.f32 %v1858, %v1863
        %v1865 = vsel %vm1851, %v1862, %v1846
        %v1866 = vsel %vm1852, %v1864, %v1848
        %v1867 = vsel %vm1849, %v1854, %v1865
        %v1868 = vsel %vm1850, %v1856, %v1866
        %v1869 = vsel %vm1851, 0.7853982, 0.0
        %v1870 = vsel %vm1852, 0.7853982, 0.0
        %v1871 = vsel %vm1849, 1.5707964, %v1869
        %v1872 = vsel %vm1850, 1.5707964, %v1870
        %v1873 = vmul.f32 %v1867, %v1867
        %v1874 = vmul.f32 %v1868, %v1868
        %v1875 = vmul.f32 %v1873, 0.080537446
        %v1876 = vmul.f32 %v1874, 0.080537446
        %v1877 = vsub.f32 %v1875, 0.13877685
        %v1878 = vsub.f32 %v1876, 0.13877685
        %v1879 = vmul.f32 %v1877, %v1873
        %v1880 = vmul.f32 %v1878, %v1874
        %v1881 = vadd.f32 %v1879, 0.19977711
        %v1882 = vadd.f32 %v1880, 0.19977711
        %v1883 = vmul.f32 %v1881, %v1873
        %v1884 = vmul.f32 %v1882, %v1874
        %v1885 = vsub.f32 %v1883, 0.3333295
        %v1886 = vsub.f32 %v1884, 0.3333295
        %v1887 = vmul.f32 %v1885, %v1873
        %v1888 = vmul.f32 %v1886, %v1874
        %v1889 = vmul.f32 %v1887, %v1867
        %v1890 = vmul.f32 %v1888, %v1868
        %v1891 = vadd.f32 %v1889, %v1867
        %v1892 = vadd.f32 %v1890, %v1868
        %v1893 = vadd.f32 %v1871, %v1891
        %v1894 = vadd.f32 %v1872, %v1892
        %vm1895 = vcmp.ge.f32.partialorder %v1810, 0.0
        %vm1896 = vcmp.ge.f32.partialorder %v1811, 0.0
        %v1897 = vsel %vm1895, 1.0, -1.0
        %v1898 = vsel %vm1896, 1.0, -1.0
        %vm1899 = vcmp.ge.f32.partialorder %v1656, 0.0
        %vm1900 = vcmp.ge.f32.partialorder %v1657, 0.0
        %v1901 = vmul.f32 %v1897, %v1893
        %v1902 = vmul.f32 %v1898, %v1894
        %v1903 = vsub.f32 3.1415927, %v1893
        %v1904 = vsub.f32 3.1415927, %v1894
        %v1905 = vmul.f32 %v1897, %v1903
        %v1906 = vmul.f32 %v1898, %v1904
        %v1907 = vsel %vm1899, %v1901, %v1905
        %v1908 = vsel %vm1900, %v1902, %v1906
        %vm1909 = vcmp.eq.f32.partialorder %v1824, 0.0
        %vm1910 = vcmp.eq.f32.partialorder %v1831, 0.0
        %v1911 = vsel %vm1909, 0.0, %v1907
        %v1912 = vsel %vm1910, 0.0, %v1908
        %s1913 = scalar_lea.vmem %s418, 32
        %1914 = vst.msk [vmem:[%s1913] sm:$0xff] %vm1011, %v1911
        %1915 = vst.msk [vmem:[%s1913 + $0x8] sm:$0xff] %vm1011, %v1912
        %1916 = vmatprep.subr.mxu0 0.0
        %1917 = vmatpush1.msra.mxu0 %v556
        %1918 = vmatprep.subr.mxu0 0.0
        %1919 = vmatpush1.msra.mxu0 %v561
        %1920 = vmatprep.subr.mxu0 0.0
        %1921 = vmatpush1.msra.mxu0 0.0
        %1922 = vmatprep.subr.mxu0 0.0
        %1923 = vmatpush1.msra.mxu0 0.0
        %1924 = vmatprep.subr.mxu0 0.0
        %1925 = vmatpush1.msra.mxu0 0.0
        %1926 = vmatprep.subr.mxu0 0.0
        %1927 = vmatpush1.msra.mxu0 0.0
        %1928 = vmatprep.subr.mxu0 0.0
        %1929 = vmatpush1.msra.mxu0 0.0
        %1930 = vmatprep.subr.mxu0 0.0
        %1931 = vmatpush1.msra.mxu0 0.0
        %1932 = vmatprep.subr.mxu0 0.0
        %1933 = vmatpush1.msra.mxu0 0.0
        %1934 = vmatprep.subr.mxu0 0.0
        %1935 = vmatpush1.msra.mxu0 0.0
        %1936 = vmatprep.subr.mxu0 0.0
        %1937 = vmatpush1.msra.mxu0 0.0
        %1938 = vmatprep.subr.mxu0 0.0
        %1939 = vmatpush1.msra.mxu0 0.0
        %1940 = vmatprep.subr.mxu0 0.0
        %1941 = vmatpush1.msra.mxu0 0.0
        %1942 = vmatprep.subr.mxu0 0.0
        %1943 = vmatpush1.msra.mxu0 0.0
        %1944 = vmatprep.subr.mxu0 0.0
        %1945 = vmatpush1.msra.mxu0 0.0
        %1946 = vmatprep.subr.mxu0 0.0
        %1947 = vmatpush1.msra.mxu0 0.0
        %1948 = vmatprep.subr.mxu0 0.0
        %1949 = vmatpush1.msra.mxu0 0.0
        %1950 = vmatprep.subr.mxu0 0.0
        %1951 = vmatpush1.msra.mxu0 0.0
        %1952 = vmatprep.subr.mxu0 0.0
        %1953 = vmatpush1.msra.mxu0 0.0
        %1954 = vmatprep.subr.mxu0 0.0
        %1955 = vmatpush1.msra.mxu0 0.0
        %1956 = vmatprep.subr.mxu0 0.0
        %1957 = vmatpush1.msra.mxu0 0.0
        %1958 = vmatprep.subr.mxu0 0.0
        %1959 = vmatpush1.msra.mxu0 0.0
        %1960 = vmatprep.subr.mxu0 0.0
        %1961 = vmatpush1.msra.mxu0 0.0
        %1962 = vmatprep.subr.mxu0 0.0
        %1963 = vmatpush1.msra.mxu0 0.0
        %1964 = vmatprep.subr.mxu0 0.0
        %1965 = vmatpush1.msra.mxu0 0.0
        %1966 = vmatprep.subr.mxu0 0.0
        %1967 = vmatpush1.msra.mxu0 0.0
        %1968 = vmatprep.subr.mxu0 0.0
        %1969 = vmatpush1.msra.mxu0 0.0
        %1970 = vmatprep.subr.mxu0 0.0
        %1971 = vmatpush1.msra.mxu0 0.0
        %1972 = vmatprep.subr.mxu0 0.0
        %1973 = vmatpush1.msra.mxu0 0.0
        %1974 = vmatprep.subr.mxu0 0.0
        %1975 = vmatpush1.msra.mxu0 0.0
        %1976 = vmatprep.subr.mxu0 0.0
        %1977 = vmatpush1.msra.mxu0 0.0
        %1978 = vmatprep.subr.mxu0 0.0
        %1979 = vmatpush1.msra.mxu0 0.0
        %1980 = vmatprep.mubr.f32.mxu0 0.0
        %1981 = vmatmul.mubr.f32.gmra.mrb[0].mxu0 %v672
        %v1982 = vpop.f32.mrb[0].mxu0
        %v1983 = vadd.f32 0.0, %v1982
        %v1984 = vpop.f32.mrb[0].mxu0
        %1985 = vmatprep.mubr.f32.mxu0 0.0
        %1986 = vmatmul.mubr.f32.gmra.mrb[0].mxu0 %v675
        %v1987 = vpop.f32.mrb[0].mxu0
        %v1988 = vadd.f32 0.0, %v1987
        %v1989 = vpop.f32.mrb[0].mxu0
        %1990 = vdwg.mxu0
        %1991 = vmatprep.subr.mxu0 0.0
        %1992 = vmatpush1.msra.mxu0 %v663
        %1993 = vmatprep.subr.mxu0 0.0
        %1994 = vmatpush1.msra.mxu0 %v668
        %1995 = vmatprep.subr.mxu0 0.0
        %1996 = vmatpush1.msra.mxu0 0.0
        %1997 = vmatprep.subr.mxu0 0.0
        %1998 = vmatpush1.msra.mxu0 0.0
        %1999 = vmatprep.subr.mxu0 0.0
        %2000 = vmatpush1.msra.mxu0 0.0
        %2001 = vmatprep.subr.mxu0 0.0
        %2002 = vmatpush1.msra.mxu0 0.0
        %2003 = vmatprep.subr.mxu0 0.0
        %2004 = vmatpush1.msra.mxu0 0.0
        %2005 = vmatprep.subr.mxu0 0.0
        %2006 = vmatpush1.msra.mxu0 0.0
        %2007 = vmatprep.subr.mxu0 0.0
        %2008 = vmatpush1.msra.mxu0 0.0
        %2009 = vmatprep.subr.mxu0 0.0
        %2010 = vmatpush1.msra.mxu0 0.0
        %2011 = vmatprep.subr.mxu0 0.0
        %2012 = vmatpush1.msra.mxu0 0.0
        %2013 = vmatprep.subr.mxu0 0.0
        %2014 = vmatpush1.msra.mxu0 0.0
        %2015 = vmatprep.subr.mxu0 0.0
        %2016 = vmatpush1.msra.mxu0 0.0
        %2017 = vmatprep.subr.mxu0 0.0
        %2018 = vmatpush1.msra.mxu0 0.0
        %2019 = vmatprep.subr.mxu0 0.0
        %2020 = vmatpush1.msra.mxu0 0.0
        %2021 = vmatprep.subr.mxu0 0.0
        %2022 = vmatpush1.msra.mxu0 0.0
        %2023 = vmatprep.subr.mxu0 0.0
        %2024 = vmatpush1.msra.mxu0 0.0
        %2025 = vmatprep.subr.mxu0 0.0
        %2026 = vmatpush1.msra.mxu0 0.0
        %2027 = vmatprep.subr.mxu0 0.0
        %2028 = vmatpush1.msra.mxu0 0.0
        %2029 = vmatprep.subr.mxu0 0.0
        %2030 = vmatpush1.msra.mxu0 0.0
        %2031 = vmatprep.subr.mxu0 0.0
        %2032 = vmatpush1.msra.mxu0 0.0
        %2033 = vmatprep.subr.mxu0 0.0
        %2034 = vmatpush1.msra.mxu0 0.0
        %2035 = vmatprep.subr.mxu0 0.0
        %2036 = vmatpush1.msra.mxu0 0.0
        %2037 = vmatprep.subr.mxu0 0.0
        %2038 = vmatpush1.msra.mxu0 0.0
        %2039 = vmatprep.subr.mxu0 0.0
        %2040 = vmatpush1.msra.mxu0 0.0
        %2041 = vmatprep.subr.mxu0 0.0
        %2042 = vmatpush1.msra.mxu0 0.0
        %2043 = vmatprep.subr.mxu0 0.0
        %2044 = vmatpush1.msra.mxu0 0.0
        %2045 = vmatprep.subr.mxu0 0.0
        %2046 = vmatpush1.msra.mxu0 0.0
        %2047 = vmatprep.subr.mxu0 0.0
        %2048 = vmatpush1.msra.mxu0 0.0
        %2049 = vmatprep.subr.mxu0 0.0
        %2050 = vmatpush1.msra.mxu0 0.0
        %2051 = vmatprep.subr.mxu0 0.0
        %2052 = vmatpush1.msra.mxu0 0.0
        %2053 = vmatprep.subr.mxu0 0.0
        %2054 = vmatpush1.msra.mxu0 0.0
        %2055 = vmatprep.mubr.f32.mxu0 0.0
        %2056 = vmatmul.mubr.f32.gmra.mrb[0].mxu0 %v753
        %v2057 = vpop.f32.mrb[0].mxu0
        %v2058 = vadd.f32 0.0, %v2057
        %v2059 = vpop.f32.mrb[0].mxu0
        %2060 = vmatprep.mubr.f32.mxu0 0.0
        %2061 = vmatmul.mubr.f32.gmra.mrb[0].mxu0 %v756
        %v2062 = vpop.f32.mrb[0].mxu0
        %v2063 = vadd.f32 0.0, %v2062
        %v2064 = vpop.f32.mrb[0].mxu0
        %2065 = vdwg.mxu0
        %v2066 = vsub.f32 %v1983, %v2058
        %v2067 = vsub.f32 %v1988, %v2063
        %v2068 = vmul.f32 %v2066, 0.00390625
        %v2069 = vmul.f32 %v2067, 0.00390625
        %2070 = vmatprep.subr.mxu0 0.0
        %2071 = vmatpush1.msra.mxu0 %v556
        %2072 = vmatprep.subr.mxu0 0.0
        %2073 = vmatpush1.msra.mxu0 %v561
        %2074 = vmatprep.subr.mxu0 0.0
        %2075 = vmatpush1.msra.mxu0 0.0
        %2076 = vmatprep.subr.mxu0 0.0
        %2077 = vmatpush1.msra.mxu0 0.0
        %2078 = vmatprep.subr.mxu0 0.0
        %2079 = vmatpush1.msra.mxu0 0.0
        %2080 = vmatprep.subr.mxu0 0.0
        %2081 = vmatpush1.msra.mxu0 0.0
        %2082 = vmatprep.subr.mxu0 0.0
        %2083 = vmatpush1.msra.mxu0 0.0
        %2084 = vmatprep.subr.mxu0 0.0
        %2085 = vmatpush1.msra.mxu0 0.0
        %2086 = vmatprep.subr.mxu0 0.0
        %2087 = vmatpush1.msra.mxu0 0.0
        %2088 = vmatprep.subr.mxu0 0.0
        %2089 = vmatpush1.msra.mxu0 0.0
        %2090 = vmatprep.subr.mxu0 0.0
        %2091 = vmatpush1.msra.mxu0 0.0
        %2092 = vmatprep.subr.mxu0 0.0
        %2093 = vmatpush1.msra.mxu0 0.0
        %2094 = vmatprep.subr.mxu0 0.0
        %2095 = vmatpush1.msra.mxu0 0.0
        %2096 = vmatprep.subr.mxu0 0.0
        %2097 = vmatpush1.msra.mxu0 0.0
        %2098 = vmatprep.subr.mxu0 0.0
        %2099 = vmatpush1.msra.mxu0 0.0
        %2100 = vmatprep.subr.mxu0 0.0
        %2101 = vmatpush1.msra.mxu0 0.0
        %2102 = vmatprep.subr.mxu0 0.0
        %2103 = vmatpush1.msra.mxu0 0.0
        %2104 = vmatprep.subr.mxu0 0.0
        %2105 = vmatpush1.msra.mxu0 0.0
        %2106 = vmatprep.subr.mxu0 0.0
        %2107 = vmatpush1.msra.mxu0 0.0
        %2108 = vmatprep.subr.mxu0 0.0
        %2109 = vmatpush1.msra.mxu0 0.0
        %2110 = vmatprep.subr.mxu0 0.0
        %2111 = vmatpush1.msra.mxu0 0.0
        %2112 = vmatprep.subr.mxu0 0.0
        %2113 = vmatpush1.msra.mxu0 0.0
        %2114 = vmatprep.subr.mxu0 0.0
        %2115 = vmatpush1.msra.mxu0 0.0
        %2116 = vmatprep.subr.mxu0 0.0
        %2117 = vmatpush1.msra.mxu0 0.0
        %2118 = vmatprep.subr.mxu0 0.0
        %2119 = vmatpush1.msra.mxu0 0.0
        %2120 = vmatprep.subr.mxu0 0.0
        %2121 = vmatpush1.msra.mxu0 0.0
        %2122 = vmatprep.subr.mxu0 0.0
        %2123 = vmatpush1.msra.mxu0 0.0
        %2124 = vmatprep.subr.mxu0 0.0
        %2125 = vmatpush1.msra.mxu0 0.0
        %2126 = vmatprep.subr.mxu0 0.0
        %2127 = vmatpush1.msra.mxu0 0.0
        %2128 = vmatprep.subr.mxu0 0.0
        %2129 = vmatpush1.msra.mxu0 0.0
        %2130 = vmatprep.subr.mxu0 0.0
        %2131 = vmatpush1.msra.mxu0 0.0
        %2132 = vmatprep.subr.mxu0 0.0
        %2133 = vmatpush1.msra.mxu0 0.0
        %2134 = vmatprep.mubr.f32.mxu0 0.0
        %2135 = vmatmul.mubr.f32.gmra.mrb[0].mxu0 %v753
        %v2136 = vpop.f32.mrb[0].mxu0
        %v2137 = vadd.f32 0.0, %v2136
        %v2138 = vpop.f32.mrb[0].mxu0
        %2139 = vmatprep.mubr.f32.mxu0 0.0
        %2140 = vmatmul.mubr.f32.gmra.mrb[0].mxu0 %v756
        %v2141 = vpop.f32.mrb[0].mxu0
        %v2142 = vadd.f32 0.0, %v2141
        %v2143 = vpop.f32.mrb[0].mxu0
        %2144 = vdwg.mxu0
        %2145 = vmatprep.subr.mxu0 0.0
        %2146 = vmatpush1.msra.mxu0 %v663
        %2147 = vmatprep.subr.mxu0 0.0
        %2148 = vmatpush1.msra.mxu0 %v668
        %2149 = vmatprep.subr.mxu0 0.0
        %2150 = vmatpush1.msra.mxu0 0.0
        %2151 = vmatprep.subr.mxu0 0.0
        %2152 = vmatpush1.msra.mxu0 0.0
        %2153 = vmatprep.subr.mxu0 0.0
        %2154 = vmatpush1.msra.mxu0 0.0
        %2155 = vmatprep.subr.mxu0 0.0
        %2156 = vmatpush1.msra.mxu0 0.0
        %2157 = vmatprep.subr.mxu0 0.0
        %2158 = vmatpush1.msra.mxu0 0.0
        %2159 = vmatprep.subr.mxu0 0.0
        %2160 = vmatpush1.msra.mxu0 0.0
        %2161 = vmatprep.subr.mxu0 0.0
        %2162 = vmatpush1.msra.mxu0 0.0
        %2163 = vmatprep.subr.mxu0 0.0
        %2164 = vmatpush1.msra.mxu0 0.0
        %2165 = vmatprep.subr.mxu0 0.0
        %2166 = vmatpush1.msra.mxu0 0.0
        %2167 = vmatprep.subr.mxu0 0.0
        %2168 = vmatpush1.msra.mxu0 0.0
        %2169 = vmatprep.subr.mxu0 0.0
        %2170 = vmatpush1.msra.mxu0 0.0
        %2171 = vmatprep.subr.mxu0 0.0
        %2172 = vmatpush1.msra.mxu0 0.0
        %2173 = vmatprep.subr.mxu0 0.0
        %2174 = vmatpush1.msra.mxu0 0.0
        %2175 = vmatprep.subr.mxu0 0.0
        %2176 = vmatpush1.msra.mxu0 0.0
        %2177 = vmatprep.subr.mxu0 0.0
        %2178 = vmatpush1.msra.mxu0 0.0
        %2179 = vmatprep.subr.mxu0 0.0
        %2180 = vmatpush1.msra.mxu0 0.0
        %2181 = vmatprep.subr.mxu0 0.0
        %2182 = vmatpush1.msra.mxu0 0.0
        %2183 = vmatprep.subr.mxu0 0.0
        %2184 = vmatpush1.msra.mxu0 0.0
        %2185 = vmatprep.subr.mxu0 0.0
        %2186 = vmatpush1.msra.mxu0 0.0
        %2187 = vmatprep.subr.mxu0 0.0
        %2188 = vmatpush1.msra.mxu0 0.0
        %2189 = vmatprep.subr.mxu0 0.0
        %2190 = vmatpush1.msra.mxu0 0.0
        %2191 = vmatprep.subr.mxu0 0.0
        %2192 = vmatpush1.msra.mxu0 0.0
        %2193 = vmatprep.subr.mxu0 0.0
        %2194 = vmatpush1.msra.mxu0 0.0
        %2195 = vmatprep.subr.mxu0 0.0
        %2196 = vmatpush1.msra.mxu0 0.0
        %2197 = vmatprep.subr.mxu0 0.0
        %2198 = vmatpush1.msra.mxu0 0.0
        %2199 = vmatprep.subr.mxu0 0.0
        %2200 = vmatpush1.msra.mxu0 0.0
        %2201 = vmatprep.subr.mxu0 0.0
        %2202 = vmatpush1.msra.mxu0 0.0
        %2203 = vmatprep.subr.mxu0 0.0
        %2204 = vmatpush1.msra.mxu0 0.0
        %2205 = vmatprep.subr.mxu0 0.0
        %2206 = vmatpush1.msra.mxu0 0.0
        %2207 = vmatprep.subr.mxu0 0.0
        %2208 = vmatpush1.msra.mxu0 0.0
        %2209 = vmatprep.mubr.f32.mxu0 0.0
        %2210 = vmatmul.mubr.f32.gmra.mrb[0].mxu0 %v672
        %v2211 = vpop.f32.mrb[0].mxu0
        %v2212 = vadd.f32 %v2137, %v2211
        %v2213 = vpop.f32.mrb[0].mxu0
        %2214 = vmatprep.mubr.f32.mxu0 0.0
        %2215 = vmatmul.mubr.f32.gmra.mrb[0].mxu0 %v675
        %v2216 = vpop.f32.mrb[0].mxu0
        %v2217 = vadd.f32 %v2142, %v2216
        %v2218 = vpop.f32.mrb[0].mxu0
        %2219 = vdwg.mxu0
        %v2220 = vsub.f32 0.0, %v2212
        %v2221 = vsub.f32 0.0, %v2217
        %v2222 = vmul.f32 %v2220, 0.00390625
        %v2223 = vmul.f32 %v2221, 0.00390625
        %v2224 = vmul.f32 %v2068, %v2068
        %v2225 = vmul.f32 %v2069, %v2069
        %v2226 = vmul.f32 %v2222, %v2222
        %v2227 = vmul.f32 %v2223, %v2223
        %v2228 = vadd.f32 %v2224, %v2226
        %v2229 = vadd.f32 %v2225, %v2227
        %v2230 = vrsqrt.pop %v2228
        %v2231 = vmul.f32 %v2228, %v2230
        %vm2232 = vcmp.eq.f32.partialorder %v2228, inf
        %v2233 = vsel %vm2232, %v2228, %v2231
        %vm2234 = vcmp.eq.f32.partialorder %v2228, 0.0
        %v2235 = vand.u32 %v2228, 2147483648
        %v2236 = vsel %vm2234, %v2235, %v2233
        %v2237 = vrsqrt.pop %v2229
        %v2238 = vmul.f32 %v2229, %v2237
        %vm2239 = vcmp.eq.f32.partialorder %v2229, inf
        %v2240 = vsel %vm2239, %v2229, %v2238
        %vm2241 = vcmp.eq.f32.partialorder %v2229, 0.0
        %v2242 = vand.u32 %v2229, 2147483648
        %v2243 = vsel %vm2241, %v2242, %v2240
        %s2244 = scalar_lea.vmem %s397, 48
        %2245 = vst.msk [vmem:[%s2244] sm:$0xff] %vm1011, %v2068
        %2246 = vst.msk [vmem:[%s2244 + $0x8] sm:$0xff] %vm1011, %v2069
        %s2247 = scalar_lea.vmem %s404, 48
        %2248 = vst.msk [vmem:[%s2247] sm:$0xff] %vm1011, %v2222
        %2249 = vst.msk [vmem:[%s2247 + $0x8] sm:$0xff] %vm1011, %v2223
        %s2250 = scalar_lea.vmem %s411, 48
        %2251 = vst.msk [vmem:[%s2250] sm:$0xff] %vm1011, %v2236
        %2252 = vst.msk [vmem:[%s2250 + $0x8] sm:$0xff] %vm1011, %v2243
        %v2253 = vand.u32 2147483647, %v2222
        %v2254 = vand.u32 2147483647, %v2223
        %v2255 = vand.u32 2147483647, %v2068
        %v2256 = vand.u32 2147483647, %v2069
        %v2257 = vrcp.pop %v2255
        %v2258 = vmul.f32 %v2253, %v2257
        %v2259 = vrcp.pop %v2256
        %v2260 = vmul.f32 %v2254, %v2259
        %vm2261 = vcmp.gt.f32.partialorder %v2258, 2.4142137
        %vm2262 = vcmp.gt.f32.partialorder %v2260, 2.4142137
        %vm2263 = vcmp.gt.f32.partialorder %v2258, 0.41421357
        %vm2264 = vcmp.gt.f32.partialorder %v2260, 0.41421357
        %v2265 = vrcp.pop %v2258
        %v2266 = vmul.f32 -1.0, %v2265
        %v2267 = vrcp.pop %v2260
        %v2268 = vmul.f32 -1.0, %v2267
        %v2269 = vsub.f32 %v2258, 1.0
        %v2270 = vsub.f32 %v2260, 1.0
        %v2271 = vadd.f32 %v2258, 1.0
        %v2272 = vadd.f32 %v2260, 1.0
        %v2273 = vrcp.pop %v2271
        %v2274 = vmul.f32 %v2269, %v2273
        %v2275 = vrcp.pop %v2272
        %v2276 = vmul.f32 %v2270, %v2275
        %v2277 = vsel %vm2263, %v2274, %v2258
        %v2278 = vsel %vm2264, %v2276, %v2260
        %v2279 = vsel %vm2261, %v2266, %v2277
        %v2280 = vsel %vm2262, %v2268, %v2278
        %v2281 = vsel %vm2263, 0.7853982, 0.0
        %v2282 = vsel %vm2264, 0.7853982, 0.0
        %v2283 = vsel %vm2261, 1.5707964, %v2281
        %v2284 = vsel %vm2262, 1.5707964, %v2282
        %v2285 = vmul.f32 %v2279, %v2279
        %v2286 = vmul.f32 %v2280, %v2280
        %v2287 = vmul.f32 %v2285, 0.080537446
        %v2288 = vmul.f32 %v2286, 0.080537446
        %v2289 = vsub.f32 %v2287, 0.13877685
        %v2290 = vsub.f32 %v2288, 0.13877685
        %v2291 = vmul.f32 %v2289, %v2285
        %v2292 = vmul.f32 %v2290, %v2286
        %v2293 = vadd.f32 %v2291, 0.19977711
        %v2294 = vadd.f32 %v2292, 0.19977711
        %v2295 = vmul.f32 %v2293, %v2285
        %v2296 = vmul.f32 %v2294, %v2286
        %v2297 = vsub.f32 %v2295, 0.3333295
        %v2298 = vsub.f32 %v2296, 0.3333295
        %v2299 = vmul.f32 %v2297, %v2285
        %v2300 = vmul.f32 %v2298, %v2286
        %v2301 = vmul.f32 %v2299, %v2279
        %v2302 = vmul.f32 %v2300, %v2280
        %v2303 = vadd.f32 %v2301, %v2279
        %v2304 = vadd.f32 %v2302, %v2280
        %v2305 = vadd.f32 %v2283, %v2303
        %v2306 = vadd.f32 %v2284, %v2304
        %vm2307 = vcmp.ge.f32.partialorder %v2222, 0.0
        %vm2308 = vcmp.ge.f32.partialorder %v2223, 0.0
        %v2309 = vsel %vm2307, 1.0, -1.0
        %v2310 = vsel %vm2308, 1.0, -1.0
        %vm2311 = vcmp.ge.f32.partialorder %v2068, 0.0
        %vm2312 = vcmp.ge.f32.partialorder %v2069, 0.0
        %v2313 = vmul.f32 %v2309, %v2305
        %v2314 = vmul.f32 %v2310, %v2306
        %v2315 = vsub.f32 3.1415927, %v2305
        %v2316 = vsub.f32 3.1415927, %v2306
        %v2317 = vmul.f32 %v2309, %v2315
        %v2318 = vmul.f32 %v2310, %v2316
        %v2319 = vsel %vm2311, %v2313, %v2317
        %v2320 = vsel %vm2312, %v2314, %v2318
        %vm2321 = vcmp.eq.f32.partialorder %v2236, 0.0
        %vm2322 = vcmp.eq.f32.partialorder %v2243, 0.0
        %v2323 = vsel %vm2321, 0.0, %v2319
        %v2324 = vsel %vm2322, 0.0, %v2320
        %s2325 = scalar_lea.vmem %s418, 48
        %2326 = vst.msk [vmem:[%s2325] sm:$0xff] %vm1011, %v2323
        %2327 = vst.msk [vmem:[%s2325 + $0x8] sm:$0xff] %vm1011, %v2324
        %s2328 = smul.u32 4, %s25
        %p2329 = scmp.lt.s32.totalorder %s2328, 7
        %s2330 = scalar_select %p2329, %s2328, 7
        %s2331 = smul.addr %s2330, 2
        %s2332 = smul.addr %s2331, 8
        %s2333 = scalar_lea.vmem %s5, %s2332
        %s2334 = smul.u32 4, %s25
        %p2335 = scmp.lt.s32.totalorder %s2334, 7
        %s2336 = scalar_select %p2335, %s2334, 7
        %s2337 = smul.addr %s2336, 2
        %s2338 = smul.addr %s2337, 8
        %s2339 = scalar_lea.vmem %s6, %s2338
        %s2340 = smul.u32 4, %s25
        %p2341 = scmp.lt.s32.totalorder %s2340, 7
        %s2342 = scalar_select %p2341, %s2340, 7
        %s2343 = smul.addr %s2342, 2
        %s2344 = smul.addr %s2343, 8
        %s2345 = scalar_lea.vmem %s7, %s2344
        %s2346 = smul.u32 4, %s25
        %p2347 = scmp.lt.s32.totalorder %s2346, 7
        %s2348 = scalar_select %p2347, %s2346, 7
        %s2349 = smul.addr %s2348, 2
        %s2350 = smul.addr %s2349, 8
        %s2351 = scalar_lea.vmem %s8, %s2350
        // Predicated region
        $region57: #{dft_transform.1} parent=39 // pred_check
          %p2352 = pneg %p153
        $region58: #{dft_transform.1} parent=39 // pred_check_branch
          %2354 = sbr.rel (%p2352) target = $region60
        $region59: #{dft_transform.1} parent=39 // pred_region
          %s2355 = smul.u32 4, %s25
        $region60: #{dft_transform.1} parent=39 // pred_fallthru
          _
        // Predicated region
        $region61: #{dft_transform.1} parent=39 // pred_check
          %p2356 = pneg %p179
        $region62: #{dft_transform.1} parent=39 // pred_check_branch
          %2358 = sbr.rel (%p2356) target = $region64
        $region63: #{dft_transform.1} parent=39 // pred_region
          %s2359 = smul.u32 4, %s25
        $region64: #{dft_transform.1} parent=39 // pred_fallthru
          _
        // Predicated region
        $region65: #{dft_transform.1} parent=39 // pred_check
          %p2360 = pneg %p205
        $region66: #{dft_transform.1} parent=39 // pred_check_branch
          %2362 = sbr.rel (%p2360) target = $region68
        $region67: #{dft_transform.1} parent=39 // pred_region
          %s2363 = smul.u32 4, %s25
        $region68: #{dft_transform.1} parent=39 // pred_fallthru
          _
        // Predicated region
        $region69: #{dft_transform.1} parent=39 // pred_check
          %p2364 = pneg %p231
        $region70: #{dft_transform.1} parent=39 // pred_check_branch
          %2366 = sbr.rel (%p2364) target = $region72
        $region71: #{dft_transform.1} parent=39 // pred_region
          %s2367 = smul.u32 4, %s25
        $region72: #{dft_transform.1} parent=39 // pred_fallthru
          _
      $region40: #{dft_transform.1} parent=5 // pred_fallthru
        _
      %p2368 = scmp.le.s32.totalorder 2, %s20
      // Predicated region
      $region73: #{dft_transform.1} parent=5 // pred_check
        %p2369 = pneg %p2368
      $region74: #{dft_transform.1} parent=5 // pred_check_branch
        %2371 = sbr.rel (%p2369) target = $region76
      $region75: #{dft_transform.1} parent=5 // pred_region
        %s2372 = ssub.s32 %s20, 2
        // Predicated region
        $region77: #{dft_transform.1} parent=75 // pred_check
          %p2373 = pneg %p159
        $region78: #{dft_transform.1} parent=75 // pred_check_branch
          %2375 = sbr.rel (%p2373) target = $region80
        $region79: #{dft_transform.1} parent=75 // pred_region
          %s2376 = smul.u32 4, %s26
          %p2377 = scmp.lt.s32.totalorder %s2376, 7
          %s2378 = scalar_select %p2377, %s2376, 7
          %s2379 = smul.addr %s2378, 2
          %s2380 = smul.addr %s2379, 8
          %s2381 = scalar_lea.vmem %s5, %s2380
        $region80: #{dft_transform.1} parent=75 // pred_fallthru
          _
        // Predicated region
        $region81: #{dft_transform.1} parent=75 // pred_check
          %p2382 = pneg %p185
        $region82: #{dft_transform.1} parent=75 // pred_check_branch
          %2384 = sbr.rel (%p2382) target = $region84
        $region83: #{dft_transform.1} parent=75 // pred_region
          %s2385 = smul.u32 4, %s26
          %p2386 = scmp.lt.s32.totalorder %s2385, 7
          %s2387 = scalar_select %p2386, %s2385, 7
          %s2388 = smul.addr %s2387, 2
          %s2389 = smul.addr %s2388, 8
          %s2390 = scalar_lea.vmem %s6, %s2389
        $region84: #{dft_transform.1} parent=75 // pred_fallthru
          _
        // Predicated region
        $region85: #{dft_transform.1} parent=75 // pred_check
          %p2391 = pneg %p211
        $region86: #{dft_transform.1} parent=75 // pred_check_branch
          %2393 = sbr.rel (%p2391) target = $region88
        $region87: #{dft_transform.1} parent=75 // pred_region
          %s2394 = smul.u32 4, %s26
          %p2395 = scmp.lt.s32.totalorder %s2394, 7
          %s2396 = scalar_select %p2395, %s2394, 7
          %s2397 = smul.addr %s2396, 2
          %s2398 = smul.addr %s2397, 8
          %s2399 = scalar_lea.vmem %s7, %s2398
        $region88: #{dft_transform.1} parent=75 // pred_fallthru
          _
        // Predicated region
        $region89: #{dft_transform.1} parent=75 // pred_check
          %p2400 = pneg %p237
        $region90: #{dft_transform.1} parent=75 // pred_check_branch
          %2402 = sbr.rel (%p2400) target = $region92
        $region91: #{dft_transform.1} parent=75 // pred_region
          %s2403 = smul.u32 4, %s26
          %p2404 = scmp.lt.s32.totalorder %s2403, 7
          %s2405 = scalar_select %p2404, %s2403, 7
          %s2406 = smul.addr %s2405, 2
          %s2407 = smul.addr %s2406, 8
          %s2408 = scalar_lea.vmem %s8, %s2407
        $region92: #{dft_transform.1} parent=75 // pred_fallthru
          _
      $region76: #{dft_transform.1} parent=5 // pred_fallthru
        _
    $region6: #{dft_transform.1} parent=1 // loop_footer
      %s24 = sadd.s32 1, %s20
    $region7: #{dft_transform.1} parent=1 // loop_footer_branch
      %19 = sbr.rel target = $region3
    $region8: #{dft_transform.1} parent=1 // loop_exit
      _
    %2409 = vsyncpa [#allocation3], 1
    %s2410 = scalar_lea.sflag [#allocation3], 1
    %2411 = vsyncpa %s2410, 1
    %2412 = vsyncpa [#allocation5], 1
    %2413 = vsyncpa [#allocation8], 1

</llo_original>
